<compile_context>
chip_gen: v7x
topology: tpu7x:2x2x1
jax: 0.10.0
libtpu: 0.0.40
codegen_flags: <defaults>
</compile_context>

<pallas_src>
import jax
import jax.numpy as jnp
import numpy as np
from jax import lax
from jax.experimental import pallas as pl
from jax.experimental.pallas import tpu as pltpu  # noqa: F401  (kept for TPU-specific tuning)


# ---------------------------- Pallas kernels --------------------------------

def _conv_pool_kernel(w_ref, b_ref, p0_ref, p1_ref, p2_ref, p3_ref, o_ref):
    """out[Cout, M] = max_s (W @ P_s) + b  ==  maxpool2x2(conv5x5(x) + b)."""
    w = w_ref[...]
    m0 = jnp.dot(w, p0_ref[...], preferred_element_type=jnp.float32)
    m1 = jnp.dot(w, p1_ref[...], preferred_element_type=jnp.float32)
    m2 = jnp.dot(w, p2_ref[...], preferred_element_type=jnp.float32)
    m3 = jnp.dot(w, p3_ref[...], preferred_element_type=jnp.float32)
    o_ref[...] = jnp.maximum(jnp.maximum(m0, m1),
                             jnp.maximum(m2, m3)) + b_ref[...]


def _fc2_kernel(x_ref, w1_ref, b1_ref, w2_ref, b2_ref, o_ref):
    """Both Linear layers fused: (x @ W1 + b1) @ W2 + b2."""
    h = jnp.dot(x_ref[...], w1_ref[...],
                preferred_element_type=jnp.float32) + b1_ref[...]
    o_ref[...] = jnp.dot(h, w2_ref[...],
                         preferred_element_type=jnp.float32) + b2_ref[...]


# ------------------------- Conv + pool stage wrapper -------------------------

def conv5x5_pool_stage(x, wm, b):
    """x: [Cin, B, H, W]; wm: [Cout, Kp] (feature order (kh, kw, cin), zero-padded);
    b: [Cout, 1]  ->  [Cout, B, H//2, W//2]."""
    Cin, B, H, W = x.shape
    Ho, Wo = H // 2, W // 2
    M = B * Ho * Wo
    Cout, Kp = wm.shape
    K = 25 * Cin

    # Transpose-free im2col in the channel-first layout (taps stack on a new
    # leading axis, so no minor-dim transposes are generated).
    xp = jnp.pad(x, ((0, 0), (0, 0), (2, 2), (2, 2)))
    taps = [xp[:, :, dy:dy + H, dx:dx + W]
            for dy in range(5) for dx in range(5)]           # 25 x [Cin,B,H,W]
    p = jnp.stack(taps, axis=0).reshape(K, B, H, W)          # row = tap*Cin + cin
    if Kp != K:                                              # conv1: pad 75 -> 128
        p = jnp.pad(p, ((0, Kp - K), (0, 0), (0, 0), (0, 0)))
    # One patch matrix per 2x2-pool offset; the pool becomes max of 4 matmuls.
    parts = [p[:, :, sy::2, sx::2].reshape(Kp, M)
             for sy in (0, 1) for sx in (0, 1)]

    out = pl.pallas_call(
        _conv_pool_kernel,
        out_shape=jax.ShapeDtypeStruct((Cout, M), jnp.float32),
    )(wm, b, *parts)
    return out.reshape(Cout, B, Ho, Wo)


def fc_head(feat, w1, b1, w2, b2):
    """feat: [B, 1024] -> logits [B, 10], both Linear layers in one kernel."""
    B = feat.shape[0]
    N = w2.shape[1]
    return pl.pallas_call(
        _fc2_kernel,
        out_shape=jax.ShapeDtypeStruct((B, N), jnp.float32),
    )(feat, w1, b1, w2, b2)


# ------------------------------ Parameters -----------------------------------

def init_params(key):
    def uniform(k, shape, fan_in):
        s = 1.0 / np.sqrt(fan_in)
        return jax.random.uniform(k, shape, jnp.float32, -s, s)

    ks = jax.random.split(key, 10)
    return {
        "c1_w": uniform(ks[0], (32, 3, 5, 5), 3 * 25),
        "c1_b": uniform(ks[1], (32,), 3 * 25),
        "c2_w": uniform(ks[2], (32, 32, 5, 5), 32 * 25),
        "c2_b": uniform(ks[3], (32,), 32 * 25),
        "c3_w": uniform(ks[4], (64, 32, 5, 5), 32 * 25),
        "c3_b": uniform(ks[5], (64,), 32 * 25),
        "l1_w": uniform(ks[6], (64, 64 * 4 * 4), 64 * 4 * 4),  # [out, in]
        "l1_b": uniform(ks[7], (64,), 64 * 4 * 4),
        "l2_w": uniform(ks[8], (10, 64), 64),
        "l2_b": uniform(ks[9], (10,), 64),
    }


def prepare_params(params):
    """One-time (init) reshapes/transposes so the forward path has no weight glue."""
    prep = {}
    for name in ("c1", "c2", "c3"):
        w = params[name + "_w"]                              # [Cout, Cin, 5, 5]
        cout, cin = w.shape[0], w.shape[1]
        k = 25 * cin
        kp = 128 if k < 128 else k                           # align conv1 K: 75 -> 128
        wm = jnp.transpose(w, (0, 2, 3, 1)).reshape(cout, k)  # cols = (kh, kw, cin)
        if kp != k:
            wm = jnp.pad(wm, ((0, 0), (0, kp - k)))
        prep[name + "_w"] = wm
        prep[name + "_b"] = params[name + "_b"].reshape(cout, 1)
    prep["l1_w"] = params["l1_w"].T                          # [1024, 64]
    prep["l1_b"] = params["l1_b"].reshape(1, -1)
    prep["l2_w"] = params["l2_w"].T                          # [64, 10]
    prep["l2_b"] = params["l2_b"].reshape(1, -1)
    return prep


# ------------------------------ Model forward --------------------------------

@jax.jit
def forward(prep, x):
    """x: [B, 3, 32, 32] (NCHW) -> logits [B, 10]."""
    x = jnp.transpose(x, (1, 0, 2, 3))                           # channel-first, once
    x = conv5x5_pool_stage(x, prep["c1_w"], prep["c1_b"])        # [32, B, 16, 16]
    x = conv5x5_pool_stage(x, prep["c2_w"], prep["c2_b"])        # [32, B,  8,  8]
    x = conv5x5_pool_stage(x, prep["c3_w"], prep["c3_b"])        # [64, B,  4,  4]
    B = x.shape[1]
    feat = jnp.transpose(x, (1, 0, 2, 3)).reshape(B, -1)         # [B, 1024] (c,h,w)
    return fc_head(feat, prep["l1_w"], prep["l1_b"],
                   prep["l2_w"], prep["l2_b"])                   # [B, 10]


def reference(params, x):
    def conv(x, w, b):
        y = lax.conv_general_dilated(
            x, w, window_strides=(1, 1), padding=((2, 2), (2, 2)),
            dimension_numbers=("NCHW", "OIHW", "NCHW"))
        return y + b[None, :, None, None]

    def pool(x):
        return lax.reduce_window(x, -jnp.inf, lax.max,
                                 (1, 1, 2, 2), (1, 1, 2, 2), "VALID")

    x = pool(conv(x, params["c1_w"], params["c1_b"]))
    x = pool(conv(x, params["c2_w"], params["c2_b"]))
    x = pool(conv(x, params["c3_w"], params["c3_b"]))
    x = x.reshape(x.shape[0], -1)
    x = x @ params["l1_w"].T + params["l1_b"]
    x = x @ params["l2_w"].T + params["l2_b"]
    return x


if __name__ == "__main__":
    key = jax.random.PRNGKey(0)
    pkey, xkey = jax.random.split(key)
    params = init_params(pkey)
    prep = prepare_params(params)
    # Forward implies 3x32x32 inputs (CIFAR-like): 32 -> 16 -> 8 -> 4, 64*4*4=1024.
    x = jax.random.normal(xkey, (2, 3, 32, 32), jnp.float32)

    out = jax.block_until_ready(forward(prep, x))
    ref = jax.block_until_ready(reference(params, x))

    assert out.shape == (2, 10), out.shape
    np.testing.assert_allclose(np.asarray(out), np.asarray(ref),
                               rtol=1e-4, atol=1e-4)
    print("KERNEL_OK")
</pallas_src>

<mosaic_0001>
module attributes {stable_mosaic.version = 11 : i64} {
  func.func @_conv_pool_kernel(%arg0: memref<32x128xf32, #tpu.memory_space<vmem>>, %arg1: memref<32x1xf32, #tpu.memory_space<vmem>>, %arg2: memref<128x512xf32, #tpu.memory_space<vmem>>, %arg3: memref<128x512xf32, #tpu.memory_space<vmem>>, %arg4: memref<128x512xf32, #tpu.memory_space<vmem>>, %arg5: memref<128x512xf32, #tpu.memory_space<vmem>>, %arg6: memref<32x512xf32, #tpu.memory_space<vmem>>) attributes {dimension_semantics = [], scalar_prefetch = 0 : i64, scratch_operands = 0 : i64, tpu.core_type = #tpu.core_type<tc>} {
    %c0 = arith.constant 0 : index
    %c0_0 = arith.constant 0 : index
    %0 = vector.load %arg0[%c0, %c0_0] : memref<32x128xf32, #tpu.memory_space<vmem>>, vector<32x128xf32>
    %c0_1 = arith.constant 0 : index
    %c0_2 = arith.constant 0 : index
    %1 = vector.load %arg2[%c0_1, %c0_2] : memref<128x512xf32, #tpu.memory_space<vmem>>, vector<128x512xf32>
    %cst = arith.constant dense<0.000000e+00> : vector<32x512xf32>
    %2 = tpu.matmul %0, %1, %cst {dimension_numbers = #tpu.dot_dimension_numbers<[1], [0], [0], [1], [0, 0, 1, 1], [], []>} : vector<32x128xf32>, vector<128x512xf32>, vector<32x512xf32> -> vector<32x512xf32>
    %c0_3 = arith.constant 0 : index
    %c0_4 = arith.constant 0 : index
    %3 = vector.load %arg3[%c0_3, %c0_4] : memref<128x512xf32, #tpu.memory_space<vmem>>, vector<128x512xf32>
    %cst_5 = arith.constant dense<0.000000e+00> : vector<32x512xf32>
    %4 = tpu.matmul %0, %3, %cst_5 {dimension_numbers = #tpu.dot_dimension_numbers<[1], [0], [0], [1], [0, 0, 1, 1], [], []>} : vector<32x128xf32>, vector<128x512xf32>, vector<32x512xf32> -> vector<32x512xf32>
    %c0_6 = arith.constant 0 : index
    %c0_7 = arith.constant 0 : index
    %5 = vector.load %arg4[%c0_6, %c0_7] : memref<128x512xf32, #tpu.memory_space<vmem>>, vector<128x512xf32>
    %cst_8 = arith.constant dense<0.000000e+00> : vector<32x512xf32>
    %6 = tpu.matmul %0, %5, %cst_8 {dimension_numbers = #tpu.dot_dimension_numbers<[1], [0], [0], [1], [0, 0, 1, 1], [], []>} : vector<32x128xf32>, vector<128x512xf32>, vector<32x512xf32> -> vector<32x512xf32>
    %c0_9 = arith.constant 0 : index
    %c0_10 = arith.constant 0 : index
    %7 = vector.load %arg5[%c0_9, %c0_10] : memref<128x512xf32, #tpu.memory_space<vmem>>, vector<128x512xf32>
    %cst_11 = arith.constant dense<0.000000e+00> : vector<32x512xf32>
    %8 = tpu.matmul %0, %7, %cst_11 {dimension_numbers = #tpu.dot_dimension_numbers<[1], [0], [0], [1], [0, 0, 1, 1], [], []>} : vector<32x128xf32>, vector<128x512xf32>, vector<32x512xf32> -> vector<32x512xf32>
    %9 = arith.maximumf %2, %4 : vector<32x512xf32>
    %10 = arith.maximumf %6, %8 : vector<32x512xf32>
    %11 = arith.maximumf %9, %10 : vector<32x512xf32>
    %c0_12 = arith.constant 0 : index
    %c0_13 = arith.constant 0 : index
    %12 = vector.load %arg1[%c0_12, %c0_13] : memref<32x1xf32, #tpu.memory_space<vmem>>, vector<32x1xf32>
    %13 = vector.broadcast %12 : vector<32x1xf32> to vector<32x512xf32>
    %14 = arith.addf %11, %13 : vector<32x512xf32>
    %c0_14 = arith.constant 0 : index
    %c0_15 = arith.constant 0 : index
    %15 = vector.load %arg6[%c0_14, %c0_15] : memref<32x512xf32, #tpu.memory_space<vmem>>, vector<32x512xf32>
    tpu.vector_store %arg6[%c0_14, %c0_15], %14 {strides = array<i32>} : memref<32x512xf32, #tpu.memory_space<vmem>>, vector<32x512xf32>,
    return
  }
}

module attributes {stable_mosaic.version = 11 : i64} {
  func.func @_conv_pool_kernel(%arg0: memref<32x800xf32, #tpu.memory_space<vmem>>, %arg1: memref<32x1xf32, #tpu.memory_space<vmem>>, %arg2: memref<800x128xf32, #tpu.memory_space<vmem>>, %arg3: memref<800x128xf32, #tpu.memory_space<vmem>>, %arg4: memref<800x128xf32, #tpu.memory_space<vmem>>, %arg5: memref<800x128xf32, #tpu.memory_space<vmem>>, %arg6: memref<32x128xf32, #tpu.memory_space<vmem>>) attributes {dimension_semantics = [], scalar_prefetch = 0 : i64, scratch_operands = 0 : i64, tpu.core_type = #tpu.core_type<tc>} {
    %c0 = arith.constant 0 : index
    %c0_0 = arith.constant 0 : index
    %0 = vector.load %arg0[%c0, %c0_0] : memref<32x800xf32, #tpu.memory_space<vmem>>, vector<32x800xf32>
    %c0_1 = arith.constant 0 : index
    %c0_2 = arith.constant 0 : index
    %1 = vector.load %arg2[%c0_1, %c0_2] : memref<800x128xf32, #tpu.memory_space<vmem>>, vector<800x128xf32>
    %cst = arith.constant dense<0.000000e+00> : vector<32x128xf32>
    %2 = tpu.matmul %0, %1, %cst {dimension_numbers = #tpu.dot_dimension_numbers<[1], [0], [0], [1], [0, 0, 1, 1], [], []>} : vector<32x800xf32>, vector<800x128xf32>, vector<32x128xf32> -> vector<32x128xf32>
    %c0_3 = arith.constant 0 : index
    %c0_4 = arith.constant 0 : index
    %3 = vector.load %arg3[%c0_3, %c0_4] : memref<800x128xf32, #tpu.memory_space<vmem>>, vector<800x128xf32>
    %cst_5 = arith.constant dense<0.000000e+00> : vector<32x128xf32>
    %4 = tpu.matmul %0, %3, %cst_5 {dimension_numbers = #tpu.dot_dimension_numbers<[1], [0], [0], [1], [0, 0, 1, 1], [], []>} : vector<32x800xf32>, vector<800x128xf32>, vector<32x128xf32> -> vector<32x128xf32>
    %c0_6 = arith.constant 0 : index
    %c0_7 = arith.constant 0 : index
    %5 = vector.load %arg4[%c0_6, %c0_7] : memref<800x128xf32, #tpu.memory_space<vmem>>, vector<800x128xf32>
    %cst_8 = arith.constant dense<0.000000e+00> : vector<32x128xf32>
    %6 = tpu.matmul %0, %5, %cst_8 {dimension_numbers = #tpu.dot_dimension_numbers<[1], [0], [0], [1], [0, 0, 1, 1], [], []>} : vector<32x800xf32>, vector<800x128xf32>, vector<32x128xf32> -> vector<32x128xf32>
    %c0_9 = arith.constant 0 : index
    %c0_10 = arith.constant 0 : index
    %7 = vector.load %arg5[%c0_9, %c0_10] : memref<800x128xf32, #tpu.memory_space<vmem>>, vector<800x128xf32>
    %cst_11 = arith.constant dense<0.000000e+00> : vector<32x128xf32>
    %8 = tpu.matmul %0, %7, %cst_11 {dimension_numbers = #tpu.dot_dimension_numbers<[1], [0], [0], [1], [0, 0, 1, 1], [], []>} : vector<32x800xf32>, vector<800x128xf32>, vector<32x128xf32> -> vector<32x128xf32>
    %9 = arith.maximumf %2, %4 : vector<32x128xf32>
    %10 = arith.maximumf %6, %8 : vector<32x128xf32>
    %11 = arith.maximumf %9, %10 : vector<32x128xf32>
    %c0_12 = arith.constant 0 : index
    %c0_13 = arith.constant 0 : index
    %12 = vector.load %arg1[%c0_12, %c0_13] : memref<32x1xf32, #tpu.memory_space<vmem>>, vector<32x1xf32>
    %13 = vector.broadcast %12 : vector<32x1xf32> to vector<32x128xf32>
    %14 = arith.addf %11, %13 : vector<32x128xf32>
    %c0_14 = arith.constant 0 : index
    %c0_15 = arith.constant 0 : index
    %15 = vector.load %arg6[%c0_14, %c0_15] : memref<32x128xf32, #tpu.memory_space<vmem>>, vector<32x128xf32>
    tpu.vector_store %arg6[%c0_14, %c0_15], %14 {strides = array<i32>} : memref<32x128xf32, #tpu.memory_space<vmem>>, vector<32x128xf32>,
    return
  }
}

module attributes {stable_mosaic.version = 11 : i64} {
  func.func @_conv_pool_kernel(%arg0: memref<64x800xf32, #tpu.memory_space<vmem>>, %arg1: memref<64x1xf32, #tpu.memory_space<vmem>>, %arg2: memref<800x32xf32, #tpu.memory_space<vmem>>, %arg3: memref<800x32xf32, #tpu.memory_space<vmem>>, %arg4: memref<800x32xf32, #tpu.memory_space<vmem>>, %arg5: memref<800x32xf32, #tpu.memory_space<vmem>>, %arg6: memref<64x32xf32, #tpu.memory_space<vmem>>) attributes {dimension_semantics = [], scalar_prefetch = 0 : i64, scratch_operands = 0 : i64, tpu.core_type = #tpu.core_type<tc>} {
    %c0 = arith.constant 0 : index
    %c0_0 = arith.constant 0 : index
    %0 = vector.load %arg0[%c0, %c0_0] : memref<64x800xf32, #tpu.memory_space<vmem>>, vector<64x800xf32>
    %c0_1 = arith.constant 0 : index
    %c0_2 = arith.constant 0 : index
    %1 = vector.load %arg2[%c0_1, %c0_2] : memref<800x32xf32, #tpu.memory_space<vmem>>, vector<800x32xf32>
    %cst = arith.constant dense<0.000000e+00> : vector<64x32xf32>
    %2 = tpu.matmul %0, %1, %cst {dimension_numbers = #tpu.dot_dimension_numbers<[1], [0], [0], [1], [0, 0, 1, 1], [], []>} : vector<64x800xf32>, vector<800x32xf32>, vector<64x32xf32> -> vector<64x32xf32>
    %c0_3 = arith.constant 0 : index
    %c0_4 = arith.constant 0 : index
    %3 = vector.load %arg3[%c0_3, %c0_4] : memref<800x32xf32, #tpu.memory_space<vmem>>, vector<800x32xf32>
    %cst_5 = arith.constant dense<0.000000e+00> : vector<64x32xf32>
    %4 = tpu.matmul %0, %3, %cst_5 {dimension_numbers = #tpu.dot_dimension_numbers<[1], [0], [0], [1], [0, 0, 1, 1], [], []>} : vector<64x800xf32>, vector<800x32xf32>, vector<64x32xf32> -> vector<64x32xf32>
    %c0_6 = arith.constant 0 : index
    %c0_7 = arith.constant 0 : index
    %5 = vector.load %arg4[%c0_6, %c0_7] : memref<800x32xf32, #tpu.memory_space<vmem>>, vector<800x32xf32>
    %cst_8 = arith.constant dense<0.000000e+00> : vector<64x32xf32>
    %6 = tpu.matmul %0, %5, %cst_8 {dimension_numbers = #tpu.dot_dimension_numbers<[1], [0], [0], [1], [0, 0, 1, 1], [], []>} : vector<64x800xf32>, vector<800x32xf32>, vector<64x32xf32> -> vector<64x32xf32>
    %c0_9 = arith.constant 0 : index
    %c0_10 = arith.constant 0 : index
    %7 = vector.load %arg5[%c0_9, %c0_10] : memref<800x32xf32, #tpu.memory_space<vmem>>, vector<800x32xf32>
    %cst_11 = arith.constant dense<0.000000e+00> : vector<64x32xf32>
    %8 = tpu.matmul %0, %7, %cst_11 {dimension_numbers = #tpu.dot_dimension_numbers<[1], [0], [0], [1], [0, 0, 1, 1], [], []>} : vector<64x800xf32>, vector<800x32xf32>, vector<64x32xf32> -> vector<64x32xf32>
    %9 = arith.maximumf %2, %4 : vector<64x32xf32>
    %10 = arith.maximumf %6, %8 : vector<64x32xf32>
    %11 = arith.maximumf %9, %10 : vector<64x32xf32>
    %c0_12 = arith.constant 0 : index
    %c0_13 = arith.constant 0 : index
    %12 = vector.load %arg1[%c0_12, %c0_13] : memref<64x1xf32, #tpu.memory_space<vmem>>, vector<64x1xf32>
    %13 = vector.broadcast %12 : vector<64x1xf32> to vector<64x32xf32>
    %14 = arith.addf %11, %13 : vector<64x32xf32>
    %c0_14 = arith.constant 0 : index
    %c0_15 = arith.constant 0 : index
    %15 = vector.load %arg6[%c0_14, %c0_15] : memref<64x32xf32, #tpu.memory_space<vmem>>, vector<64x32xf32>
    tpu.vector_store %arg6[%c0_14, %c0_15], %14 {strides = array<i32>} : memref<64x32xf32, #tpu.memory_space<vmem>>, vector<64x32xf32>,
    return
  }
}

module attributes {stable_mosaic.version = 11 : i64} {
  func.func @_fc2_kernel(%arg0: memref<2x1024xf32, #tpu.memory_space<vmem>>, %arg1: memref<1024x64xf32, #tpu.memory_space<vmem>>, %arg2: memref<1x64xf32, #tpu.memory_space<vmem>>, %arg3: memref<64x10xf32, #tpu.memory_space<vmem>>, %arg4: memref<1x10xf32, #tpu.memory_space<vmem>>, %arg5: memref<2x10xf32, #tpu.memory_space<vmem>>) attributes {dimension_semantics = [], scalar_prefetch = 0 : i64, scratch_operands = 0 : i64, tpu.core_type = #tpu.core_type<tc>} {
    %c0 = arith.constant 0 : index
    %c0_0 = arith.constant 0 : index
    %0 = vector.load %arg0[%c0, %c0_0] : memref<2x1024xf32, #tpu.memory_space<vmem>>, vector<2x1024xf32>
    %c0_1 = arith.constant 0 : index
    %c0_2 = arith.constant 0 : index
    %1 = vector.load %arg1[%c0_1, %c0_2] : memref<1024x64xf32, #tpu.memory_space<vmem>>, vector<1024x64xf32>
    %cst = arith.constant dense<0.000000e+00> : vector<2x64xf32>
    %2 = tpu.matmul %0, %1, %cst {dimension_numbers = #tpu.dot_dimension_numbers<[1], [0], [0], [1], [0, 0, 1, 1], [], []>} : vector<2x1024xf32>, vector<1024x64xf32>, vector<2x64xf32> -> vector<2x64xf32>
    %c0_3 = arith.constant 0 : index
    %c0_4 = arith.constant 0 : index
    %3 = vector.load %arg2[%c0_3, %c0_4] : memref<1x64xf32, #tpu.memory_space<vmem>>, vector<1x64xf32>
    %4 = vector.broadcast %3 : vector<1x64xf32> to vector<2x64xf32>
    %5 = arith.addf %2, %4 : vector<2x64xf32>
    %c0_5 = arith.constant 0 : index
    %c0_6 = arith.constant 0 : index
    %6 = vector.load %arg3[%c0_5, %c0_6] : memref<64x10xf32, #tpu.memory_space<vmem>>, vector<64x10xf32>
    %cst_7 = arith.constant dense<0.000000e+00> : vector<2x10xf32>
    %7 = tpu.matmul %5, %6, %cst_7 {dimension_numbers = #tpu.dot_dimension_numbers<[1], [0], [0], [1], [0, 0, 1, 1], [], []>} : vector<2x64xf32>, vector<64x10xf32>, vector<2x10xf32> -> vector<2x10xf32>
    %c0_8 = arith.constant 0 : index
    %c0_9 = arith.constant 0 : index
    %8 = vector.load %arg4[%c0_8, %c0_9] : memref<1x10xf32, #tpu.memory_space<vmem>>, vector<1x10xf32>
    %9 = vector.broadcast %8 : vector<1x10xf32> to vector<2x10xf32>
    %10 = arith.addf %7, %9 : vector<2x10xf32>
    %c0_10 = arith.constant 0 : index
    %c0_11 = arith.constant 0 : index
    %11 = vector.load %arg5[%c0_10, %c0_11] : memref<2x10xf32, #tpu.memory_space<vmem>>, vector<2x10xf32>
    tpu.vector_store %arg5[%c0_10, %c0_11], %10 {strides = array<i32>} : memref<2x10xf32, #tpu.memory_space<vmem>>, vector<2x10xf32>,
    return
  }
}

</mosaic_0001>

<llo_original>
// kernel: forward.4
$region0: #{forward.4}
  #allocation0 [shape = 'u32[]', space=smem, size = 0x4, offset = 0x4, fixed_abs, tag = 'smem constant byte address 0x4 - core index']
  #allocation1 [shape = 'u32[144,128]{1,0:T(1,128)}', space=vmem, size = 0x12000, scoped, tag = 'internal scratch']
  %s0 = inlined_call_operand.vmem [shape: f32[32,128], index: 0, kind: input, shape index: {}]
  %s1 = inlined_call_operand.vmem [shape: f32[32,1], index: 1, kind: input, shape index: {}]
  %s2 = inlined_call_operand.vmem [shape: f32[128,512], index: 2, kind: input, shape index: {}]
  %s3 = inlined_call_operand.vmem [shape: f32[128,512], index: 3, kind: input, shape index: {}]
  %s4 = inlined_call_operand.vmem [shape: f32[128,512], index: 4, kind: input, shape index: {}]
  %s5 = inlined_call_operand.vmem [shape: f32[128,512], index: 5, kind: input, shape index: {}]
  %s6 = inlined_call_operand.vmem [shape: f32[32,512], index: 6, kind: output, shape index: {}]
  %s7 = sld [smem:[#allocation0]]
  $region34: #{forward.4} parent=0
    _
  %s9 = ssub.s32 1, %s7
  %s10 = scalar_select 0, %s9, %s7
  // Predicated region
  $region2: #{forward.4} parent=0 // pred_check
    _
  $region3: #{forward.4} parent=0 // pred_check_branch
    %12 = sbr.rel (0) target = $region5
  $region4: #{forward.4} parent=0 // pred_region
    _
  $region5: #{forward.4} parent=0 // pred_fallthru
    _
  // Predicated region
  $region6: #{forward.4} parent=0 // pred_check
    _
  $region7: #{forward.4} parent=0 // pred_check_branch
    %14 = sbr.rel (0) target = $region9
  $region8: #{forward.4} parent=0 // pred_region
    _
  $region9: #{forward.4} parent=0 // pred_fallthru
    _
  // Predicated region
  $region10: #{forward.4} parent=0 // pred_check
    _
  $region11: #{forward.4} parent=0 // pred_check_branch
    %16 = sbr.rel (0) target = $region13
  $region12: #{forward.4} parent=0 // pred_region
    _
  $region13: #{forward.4} parent=0 // pred_fallthru
    _
  // Predicated region
  $region14: #{forward.4} parent=0 // pred_check
    _
  $region15: #{forward.4} parent=0 // pred_check_branch
    %18 = sbr.rel (0) target = $region17
  $region16: #{forward.4} parent=0 // pred_region
    _
  $region17: #{forward.4} parent=0 // pred_fallthru
    _
  // Predicated region
  $region18: #{forward.4} parent=0 // pred_check
    _
  $region19: #{forward.4} parent=0 // pred_check_branch
    %20 = sbr.rel (0) target = $region21
  $region20: #{forward.4} parent=0 // pred_region
    _
  $region21: #{forward.4} parent=0 // pred_fallthru
    _
  // Predicated region
  $region22: #{forward.4} parent=0 // pred_check
    _
  $region23: #{forward.4} parent=0 // pred_check_branch
    %22 = sbr.rel (0) target = $region25
  $region24: #{forward.4} parent=0 // pred_region
    _
  $region25: #{forward.4} parent=0 // pred_fallthru
    _
  %v23 = vld [vmem:[%s0] sm:$0xff]
  %v24 = vld [vmem:[%s0 + $0x8] sm:$0xff]
  %v25 = vld [vmem:[%s0 + $0x10] sm:$0xff]
  %v26 = vld [vmem:[%s0 + $0x18] sm:$0xff]
  %v27 = vld [vmem:[%s2] sm:$0xff]
  %v28 = vld [vmem:[%s2 + $0x8] sm:$0xff]
  %v29 = vld [vmem:[%s2 + $0x10] sm:$0xff]
  %v30 = vld [vmem:[%s2 + $0x18] sm:$0xff]
  %v31 = vld [vmem:[%s2 + $0x20] sm:$0xff]
  %v32 = vld [vmem:[%s2 + $0x28] sm:$0xff]
  %v33 = vld [vmem:[%s2 + $0x30] sm:$0xff]
  %v34 = vld [vmem:[%s2 + $0x38] sm:$0xff]
  %v35 = vld [vmem:[%s2 + $0x40] sm:$0xff]
  %v36 = vld [vmem:[%s2 + $0x48] sm:$0xff]
  %v37 = vld [vmem:[%s2 + $0x50] sm:$0xff]
  %v38 = vld [vmem:[%s2 + $0x58] sm:$0xff]
  %v39 = vld [vmem:[%s2 + $0x60] sm:$0xff]
  %v40 = vld [vmem:[%s2 + $0x68] sm:$0xff]
  %v41 = vld [vmem:[%s2 + $0x70] sm:$0xff]
  %v42 = vld [vmem:[%s2 + $0x78] sm:$0xff]
  %v43 = vld [vmem:[%s2 + $0x80] sm:$0xff]
  %v44 = vld [vmem:[%s2 + $0x88] sm:$0xff]
  %v45 = vld [vmem:[%s2 + $0x90] sm:$0xff]
  %v46 = vld [vmem:[%s2 + $0x98] sm:$0xff]
  %v47 = vld [vmem:[%s2 + $0xa0] sm:$0xff]
  %v48 = vld [vmem:[%s2 + $0xa8] sm:$0xff]
  %v49 = vld [vmem:[%s2 + $0xb0] sm:$0xff]
  %v50 = vld [vmem:[%s2 + $0xb8] sm:$0xff]
  %v51 = vld [vmem:[%s2 + $0xc0] sm:$0xff]
  %v52 = vld [vmem:[%s2 + $0xc8] sm:$0xff]
  %v53 = vld [vmem:[%s2 + $0xd0] sm:$0xff]
  %v54 = vld [vmem:[%s2 + $0xd8] sm:$0xff]
  %v55 = vld [vmem:[%s2 + $0xe0] sm:$0xff]
  %v56 = vld [vmem:[%s2 + $0xe8] sm:$0xff]
  %v57 = vld [vmem:[%s2 + $0xf0] sm:$0xff]
  %v58 = vld [vmem:[%s2 + $0xf8] sm:$0xff]
  %v59 = vld [vmem:[%s2 + $0x100] sm:$0xff]
  %v60 = vld [vmem:[%s2 + $0x108] sm:$0xff]
  %v61 = vld [vmem:[%s2 + $0x110] sm:$0xff]
  %v62 = vld [vmem:[%s2 + $0x118] sm:$0xff]
  %v63 = vld [vmem:[%s2 + $0x120] sm:$0xff]
  %v64 = vld [vmem:[%s2 + $0x128] sm:$0xff]
  %v65 = vld [vmem:[%s2 + $0x130] sm:$0xff]
  %v66 = vld [vmem:[%s2 + $0x138] sm:$0xff]
  %v67 = vld [vmem:[%s2 + $0x140] sm:$0xff]
  %v68 = vld [vmem:[%s2 + $0x148] sm:$0xff]
  %v69 = vld [vmem:[%s2 + $0x150] sm:$0xff]
  %v70 = vld [vmem:[%s2 + $0x158] sm:$0xff]
  %v71 = vld [vmem:[%s2 + $0x160] sm:$0xff]
  %v72 = vld [vmem:[%s2 + $0x168] sm:$0xff]
  %v73 = vld [vmem:[%s2 + $0x170] sm:$0xff]
  %v74 = vld [vmem:[%s2 + $0x178] sm:$0xff]
  %v75 = vld [vmem:[%s2 + $0x180] sm:$0xff]
  %v76 = vld [vmem:[%s2 + $0x188] sm:$0xff]
  %v77 = vld [vmem:[%s2 + $0x190] sm:$0xff]
  %v78 = vld [vmem:[%s2 + $0x198] sm:$0xff]
  %v79 = vld [vmem:[%s2 + $0x1a0] sm:$0xff]
  %v80 = vld [vmem:[%s2 + $0x1a8] sm:$0xff]
  %v81 = vld [vmem:[%s2 + $0x1b0] sm:$0xff]
  %v82 = vld [vmem:[%s2 + $0x1b8] sm:$0xff]
  %v83 = vld [vmem:[%s2 + $0x1c0] sm:$0xff]
  %v84 = vld [vmem:[%s2 + $0x1c8] sm:$0xff]
  %v85 = vld [vmem:[%s2 + $0x1d0] sm:$0xff]
  %v86 = vld [vmem:[%s2 + $0x1d8] sm:$0xff]
  %v87 = vld [vmem:[%s2 + $0x1e0] sm:$0xff]
  %v88 = vld [vmem:[%s2 + $0x1e8] sm:$0xff]
  %v89 = vld [vmem:[%s2 + $0x1f0] sm:$0xff]
  %v90 = vld [vmem:[%s2 + $0x1f8] sm:$0xff]
  %91 = vmatprep.subr.mxu0 %v28
  %92 = vmatpush1.msra.mxu0 %v27
  %93 = vmatprep.subr.mxu0 %v32
  %94 = vmatpush1.msra.mxu0 %v31
  %95 = vmatprep.subr.mxu0 %v36
  %96 = vmatpush1.msra.mxu0 %v35
  %97 = vmatprep.subr.mxu0 %v40
  %98 = vmatpush1.msra.mxu0 %v39
  %99 = vmatprep.subr.mxu0 %v44
  %100 = vmatpush1.msra.mxu0 %v43
  %101 = vmatprep.subr.mxu0 %v48
  %102 = vmatpush1.msra.mxu0 %v47
  %103 = vmatprep.subr.mxu0 %v52
  %104 = vmatpush1.msra.mxu0 %v51
  %105 = vmatprep.subr.mxu0 %v56
  %106 = vmatpush1.msra.mxu0 %v55
  %107 = vmatprep.subr.mxu0 %v60
  %108 = vmatpush1.msra.mxu0 %v59
  %109 = vmatprep.subr.mxu0 %v64
  %110 = vmatpush1.msra.mxu0 %v63
  %111 = vmatprep.subr.mxu0 %v68
  %112 = vmatpush1.msra.mxu0 %v67
  %113 = vmatprep.subr.mxu0 %v72
  %114 = vmatpush1.msra.mxu0 %v71
  %115 = vmatprep.subr.mxu0 %v76
  %116 = vmatpush1.msra.mxu0 %v75
  %117 = vmatprep.subr.mxu0 %v80
  %118 = vmatpush1.msra.mxu0 %v79
  %119 = vmatprep.subr.mxu0 %v84
  %120 = vmatpush1.msra.mxu0 %v83
  %121 = vmatprep.subr.mxu0 %v88
  %122 = vmatpush1.msra.mxu0 %v87
  %123 = vmatprep.subr.mxu0 0.0
  %124 = vmatpush1.msra.mxu0 0.0
  %125 = vmatprep.subr.mxu0 0.0
  %126 = vmatpush1.msra.mxu0 0.0
  %127 = vmatprep.subr.mxu0 0.0
  %128 = vmatpush1.msra.mxu0 0.0
  %129 = vmatprep.subr.mxu0 0.0
  %130 = vmatpush1.msra.mxu0 0.0
  %131 = vmatprep.subr.mxu0 0.0
  %132 = vmatpush1.msra.mxu0 0.0
  %133 = vmatprep.subr.mxu0 0.0
  %134 = vmatpush1.msra.mxu0 0.0
  %135 = vmatprep.subr.mxu0 0.0
  %136 = vmatpush1.msra.mxu0 0.0
  %137 = vmatprep.subr.mxu0 0.0
  %138 = vmatpush1.msra.mxu0 0.0
  %139 = vmatprep.subr.mxu0 0.0
  %140 = vmatpush1.msra.mxu0 0.0
  %141 = vmatprep.subr.mxu0 0.0
  %142 = vmatpush1.msra.mxu0 0.0
  %143 = vmatprep.subr.mxu0 0.0
  %144 = vmatpush1.msra.mxu0 0.0
  %145 = vmatprep.subr.mxu0 0.0
  %146 = vmatpush1.msra.mxu0 0.0
  %147 = vmatprep.subr.mxu0 0.0
  %148 = vmatpush1.msra.mxu0 0.0
  %149 = vmatprep.subr.mxu0 0.0
  %150 = vmatpush1.msra.mxu0 0.0
  %151 = vmatprep.subr.mxu0 0.0
  %152 = vmatpush1.msra.mxu0 0.0
  %153 = vmatprep.subr.mxu0 0.0
  %154 = vmatpush1.msra.mxu0 0.0
  %155 = vmatprep.mubr.f32.mxu0 0.0
  %156 = vmatmul.mubr.f32.gmra.mrb[0].mxu0 %v23
  %v157 = vpop.f32.mrb[0].mxu0
  %v158 = vadd.f32 0.0, %v157
  %v159 = vpop.f32.mrb[0].mxu0
  %v160 = vadd.f32 0.0, %v159
  %161 = vmatprep.mubr.f32.mxu0 0.0
  %162 = vmatmul.mubr.f32.gmra.mrb[0].mxu0 %v24
  %v163 = vpop.f32.mrb[0].mxu0
  %v164 = vadd.f32 0.0, %v163
  %v165 = vpop.f32.mrb[0].mxu0
  %v166 = vadd.f32 0.0, %v165
  %167 = vmatprep.mubr.f32.mxu0 0.0
  %168 = vmatmul.mubr.f32.gmra.mrb[0].mxu0 %v25
  %v169 = vpop.f32.mrb[0].mxu0
  %v170 = vadd.f32 0.0, %v169
  %v171 = vpop.f32.mrb[0].mxu0
  %v172 = vadd.f32 0.0, %v171
  %173 = vmatprep.mubr.f32.mxu0 0.0
  %174 = vmatmul.mubr.f32.gmra.mrb[0].mxu0 %v26
  %v175 = vpop.f32.mrb[0].mxu0
  %v176 = vadd.f32 0.0, %v175
  %v177 = vpop.f32.mrb[0].mxu0
  %v178 = vadd.f32 0.0, %v177
  %179 = vdwg.mxu0
  %180 = vmatprep.subr.mxu0 %v30
  %181 = vmatpush1.msra.mxu0 %v29
  %182 = vmatprep.subr.mxu0 %v34
  %183 = vmatpush1.msra.mxu0 %v33
  %184 = vmatprep.subr.mxu0 %v38
  %185 = vmatpush1.msra.mxu0 %v37
  %186 = vmatprep.subr.mxu0 %v42
  %187 = vmatpush1.msra.mxu0 %v41
  %188 = vmatprep.subr.mxu0 %v46
  %189 = vmatpush1.msra.mxu0 %v45
  %190 = vmatprep.subr.mxu0 %v50
  %191 = vmatpush1.msra.mxu0 %v49
  %192 = vmatprep.subr.mxu0 %v54
  %193 = vmatpush1.msra.mxu0 %v53
  %194 = vmatprep.subr.mxu0 %v58
  %195 = vmatpush1.msra.mxu0 %v57
  %196 = vmatprep.subr.mxu0 %v62
  %197 = vmatpush1.msra.mxu0 %v61
  %198 = vmatprep.subr.mxu0 %v66
  %199 = vmatpush1.msra.mxu0 %v65
  %200 = vmatprep.subr.mxu0 %v70
  %201 = vmatpush1.msra.mxu0 %v69
  %202 = vmatprep.subr.mxu0 %v74
  %203 = vmatpush1.msra.mxu0 %v73
  %204 = vmatprep.subr.mxu0 %v78
  %205 = vmatpush1.msra.mxu0 %v77
  %206 = vmatprep.subr.mxu0 %v82
  %207 = vmatpush1.msra.mxu0 %v81
  %208 = vmatprep.subr.mxu0 %v86
  %209 = vmatpush1.msra.mxu0 %v85
  %210 = vmatprep.subr.mxu0 %v90
  %211 = vmatpush1.msra.mxu0 %v89
  %212 = vmatprep.subr.mxu0 0.0
  %213 = vmatpush1.msra.mxu0 0.0
  %214 = vmatprep.subr.mxu0 0.0
  %215 = vmatpush1.msra.mxu0 0.0
  %216 = vmatprep.subr.mxu0 0.0
  %217 = vmatpush1.msra.mxu0 0.0
  %218 = vmatprep.subr.mxu0 0.0
  %219 = vmatpush1.msra.mxu0 0.0
  %220 = vmatprep.subr.mxu0 0.0
  %221 = vmatpush1.msra.mxu0 0.0
  %222 = vmatprep.subr.mxu0 0.0
  %223 = vmatpush1.msra.mxu0 0.0
  %224 = vmatprep.subr.mxu0 0.0
  %225 = vmatpush1.msra.mxu0 0.0
  %226 = vmatprep.subr.mxu0 0.0
  %227 = vmatpush1.msra.mxu0 0.0
  %228 = vmatprep.subr.mxu0 0.0
  %229 = vmatpush1.msra.mxu0 0.0
  %230 = vmatprep.subr.mxu0 0.0
  %231 = vmatpush1.msra.mxu0 0.0
  %232 = vmatprep.subr.mxu0 0.0
  %233 = vmatpush1.msra.mxu0 0.0
  %234 = vmatprep.subr.mxu0 0.0
  %235 = vmatpush1.msra.mxu0 0.0
  %236 = vmatprep.subr.mxu0 0.0
  %237 = vmatpush1.msra.mxu0 0.0
  %238 = vmatprep.subr.mxu0 0.0
  %239 = vmatpush1.msra.mxu0 0.0
  %240 = vmatprep.subr.mxu0 0.0
  %241 = vmatpush1.msra.mxu0 0.0
  %242 = vmatprep.subr.mxu0 0.0
  %243 = vmatpush1.msra.mxu0 0.0
  %244 = vmatprep.mubr.f32.mxu0 0.0
  %245 = vmatmul.mubr.f32.gmra.mrb[0].mxu0 %v23
  %v246 = vpop.f32.mrb[0].mxu0
  %v247 = vadd.f32 0.0, %v246
  %v248 = vpop.f32.mrb[0].mxu0
  %v249 = vadd.f32 0.0, %v248
  %250 = vmatprep.mubr.f32.mxu0 0.0
  %251 = vmatmul.mubr.f32.gmra.mrb[0].mxu0 %v24
  %v252 = vpop.f32.mrb[0].mxu0
  %v253 = vadd.f32 0.0, %v252
  %v254 = vpop.f32.mrb[0].mxu0
  %v255 = vadd.f32 0.0, %v254
  %256 = vmatprep.mubr.f32.mxu0 0.0
  %257 = vmatmul.mubr.f32.gmra.mrb[0].mxu0 %v25
  %v258 = vpop.f32.mrb[0].mxu0
  %v259 = vadd.f32 0.0, %v258
  %v260 = vpop.f32.mrb[0].mxu0
  %v261 = vadd.f32 0.0, %v260
  %262 = vmatprep.mubr.f32.mxu0 0.0
  %263 = vmatmul.mubr.f32.gmra.mrb[0].mxu0 %v26
  %v264 = vpop.f32.mrb[0].mxu0
  %v265 = vadd.f32 0.0, %v264
  %v266 = vpop.f32.mrb[0].mxu0
  %v267 = vadd.f32 0.0, %v266
  %268 = vdwg.mxu0
  %v269 = vld [vmem:[%s3] sm:$0xff]
  %v270 = vld [vmem:[%s3 + $0x8] sm:$0xff]
  %v271 = vld [vmem:[%s3 + $0x10] sm:$0xff]
  %v272 = vld [vmem:[%s3 + $0x18] sm:$0xff]
  %v273 = vld [vmem:[%s3 + $0x20] sm:$0xff]
  %v274 = vld [vmem:[%s3 + $0x28] sm:$0xff]
  %v275 = vld [vmem:[%s3 + $0x30] sm:$0xff]
  %v276 = vld [vmem:[%s3 + $0x38] sm:$0xff]
  %v277 = vld [vmem:[%s3 + $0x40] sm:$0xff]
  %v278 = vld [vmem:[%s3 + $0x48] sm:$0xff]
  %v279 = vld [vmem:[%s3 + $0x50] sm:$0xff]
  %v280 = vld [vmem:[%s3 + $0x58] sm:$0xff]
  %v281 = vld [vmem:[%s3 + $0x60] sm:$0xff]
  %v282 = vld [vmem:[%s3 + $0x68] sm:$0xff]
  %v283 = vld [vmem:[%s3 + $0x70] sm:$0xff]
  %v284 = vld [vmem:[%s3 + $0x78] sm:$0xff]
  %v285 = vld [vmem:[%s3 + $0x80] sm:$0xff]
  %v286 = vld [vmem:[%s3 + $0x88] sm:$0xff]
  %v287 = vld [vmem:[%s3 + $0x90] sm:$0xff]
  %v288 = vld [vmem:[%s3 + $0x98] sm:$0xff]
  %v289 = vld [vmem:[%s3 + $0xa0] sm:$0xff]
  %v290 = vld [vmem:[%s3 + $0xa8] sm:$0xff]
  %v291 = vld [vmem:[%s3 + $0xb0] sm:$0xff]
  %v292 = vld [vmem:[%s3 + $0xb8] sm:$0xff]
  %v293 = vld [vmem:[%s3 + $0xc0] sm:$0xff]
  %v294 = vld [vmem:[%s3 + $0xc8] sm:$0xff]
  %v295 = vld [vmem:[%s3 + $0xd0] sm:$0xff]
  %v296 = vld [vmem:[%s3 + $0xd8] sm:$0xff]
  %v297 = vld [vmem:[%s3 + $0xe0] sm:$0xff]
  %v298 = vld [vmem:[%s3 + $0xe8] sm:$0xff]
  %v299 = vld [vmem:[%s3 + $0xf0] sm:$0xff]
  %v300 = vld [vmem:[%s3 + $0xf8] sm:$0xff]
  %v301 = vld [vmem:[%s3 + $0x100] sm:$0xff]
  %v302 = vld [vmem:[%s3 + $0x108] sm:$0xff]
  %v303 = vld [vmem:[%s3 + $0x110] sm:$0xff]
  %v304 = vld [vmem:[%s3 + $0x118] sm:$0xff]
  %v305 = vld [vmem:[%s3 + $0x120] sm:$0xff]
  %v306 = vld [vmem:[%s3 + $0x128] sm:$0xff]
  %v307 = vld [vmem:[%s3 + $0x130] sm:$0xff]
  %v308 = vld [vmem:[%s3 + $0x138] sm:$0xff]
  %v309 = vld [vmem:[%s3 + $0x140] sm:$0xff]
  %v310 = vld [vmem:[%s3 + $0x148] sm:$0xff]
  %v311 = vld [vmem:[%s3 + $0x150] sm:$0xff]
  %v312 = vld [vmem:[%s3 + $0x158] sm:$0xff]
  %v313 = vld [vmem:[%s3 + $0x160] sm:$0xff]
  %v314 = vld [vmem:[%s3 + $0x168] sm:$0xff]
  %v315 = vld [vmem:[%s3 + $0x170] sm:$0xff]
  %v316 = vld [vmem:[%s3 + $0x178] sm:$0xff]
  %v317 = vld [vmem:[%s3 + $0x180] sm:$0xff]
  %v318 = vld [vmem:[%s3 + $0x188] sm:$0xff]
  %v319 = vld [vmem:[%s3 + $0x190] sm:$0xff]
  %v320 = vld [vmem:[%s3 + $0x198] sm:$0xff]
  %v321 = vld [vmem:[%s3 + $0x1a0] sm:$0xff]
  %v322 = vld [vmem:[%s3 + $0x1a8] sm:$0xff]
  %v323 = vld [vmem:[%s3 + $0x1b0] sm:$0xff]
  %v324 = vld [vmem:[%s3 + $0x1b8] sm:$0xff]
  %v325 = vld [vmem:[%s3 + $0x1c0] sm:$0xff]
  %v326 = vld [vmem:[%s3 + $0x1c8] sm:$0xff]
  %v327 = vld [vmem:[%s3 + $0x1d0] sm:$0xff]
  %v328 = vld [vmem:[%s3 + $0x1d8] sm:$0xff]
  %v329 = vld [vmem:[%s3 + $0x1e0] sm:$0xff]
  %v330 = vld [vmem:[%s3 + $0x1e8] sm:$0xff]
  %v331 = vld [vmem:[%s3 + $0x1f0] sm:$0xff]
  %v332 = vld [vmem:[%s3 + $0x1f8] sm:$0xff]
  %333 = vmatprep.subr.mxu0 %v270
  %334 = vmatpush1.msra.mxu0 %v269
  %335 = vmatprep.subr.mxu0 %v274
  %336 = vmatpush1.msra.mxu0 %v273
  %337 = vmatprep.subr.mxu0 %v278
  %338 = vmatpush1.msra.mxu0 %v277
  %339 = vmatprep.subr.mxu0 %v282
  %340 = vmatpush1.msra.mxu0 %v281
  %341 = vmatprep.subr.mxu0 %v286
  %342 = vmatpush1.msra.mxu0 %v285
  %343 = vmatprep.subr.mxu0 %v290
  %344 = vmatpush1.msra.mxu0 %v289
  %345 = vmatprep.subr.mxu0 %v294
  %346 = vmatpush1.msra.mxu0 %v293
  %347 = vmatprep.subr.mxu0 %v298
  %348 = vmatpush1.msra.mxu0 %v297
  %349 = vmatprep.subr.mxu0 %v302
  %350 = vmatpush1.msra.mxu0 %v301
  %351 = vmatprep.subr.mxu0 %v306
  %352 = vmatpush1.msra.mxu0 %v305
  %353 = vmatprep.subr.mxu0 %v310
  %354 = vmatpush1.msra.mxu0 %v309
  %355 = vmatprep.subr.mxu0 %v314
  %356 = vmatpush1.msra.mxu0 %v313
  %357 = vmatprep.subr.mxu0 %v318
  %358 = vmatpush1.msra.mxu0 %v317
  %359 = vmatprep.subr.mxu0 %v322
  %360 = vmatpush1.msra.mxu0 %v321
  %361 = vmatprep.subr.mxu0 %v326
  %362 = vmatpush1.msra.mxu0 %v325
  %363 = vmatprep.subr.mxu0 %v330
  %364 = vmatpush1.msra.mxu0 %v329
  %365 = vmatprep.subr.mxu0 0.0
  %366 = vmatpush1.msra.mxu0 0.0
  %367 = vmatprep.subr.mxu0 0.0
  %368 = vmatpush1.msra.mxu0 0.0
  %369 = vmatprep.subr.mxu0 0.0
  %370 = vmatpush1.msra.mxu0 0.0
  %371 = vmatprep.subr.mxu0 0.0
  %372 = vmatpush1.msra.mxu0 0.0
  %373 = vmatprep.subr.mxu0 0.0
  %374 = vmatpush1.msra.mxu0 0.0
  %375 = vmatprep.subr.mxu0 0.0
  %376 = vmatpush1.msra.mxu0 0.0
  %377 = vmatprep.subr.mxu0 0.0
  %378 = vmatpush1.msra.mxu0 0.0
  %379 = vmatprep.subr.mxu0 0.0
  %380 = vmatpush1.msra.mxu0 0.0
  %381 = vmatprep.subr.mxu0 0.0
  %382 = vmatpush1.msra.mxu0 0.0
  %383 = vmatprep.subr.mxu0 0.0
  %384 = vmatpush1.msra.mxu0 0.0
  %385 = vmatprep.subr.mxu0 0.0
  %386 = vmatpush1.msra.mxu0 0.0
  %387 = vmatprep.subr.mxu0 0.0
  %388 = vmatpush1.msra.mxu0 0.0
  %389 = vmatprep.subr.mxu0 0.0
  %390 = vmatpush1.msra.mxu0 0.0
  %391 = vmatprep.subr.mxu0 0.0
  %392 = vmatpush1.msra.mxu0 0.0
  %393 = vmatprep.subr.mxu0 0.0
  %394 = vmatpush1.msra.mxu0 0.0
  %395 = vmatprep.subr.mxu0 0.0
  %396 = vmatpush1.msra.mxu0 0.0
  %397 = vmatprep.mubr.f32.mxu0 0.0
  %398 = vmatmul.mubr.f32.gmra.mrb[0].mxu0 %v23
  %v399 = vpop.f32.mrb[0].mxu0
  %v400 = vadd.f32 0.0, %v399
  %v401 = vpop.f32.mrb[0].mxu0
  %v402 = vadd.f32 0.0, %v401
  %403 = vmatprep.mubr.f32.mxu0 0.0
  %404 = vmatmul.mubr.f32.gmra.mrb[0].mxu0 %v24
  %v405 = vpop.f32.mrb[0].mxu0
  %v406 = vadd.f32 0.0, %v405
  %v407 = vpop.f32.mrb[0].mxu0
  %v408 = vadd.f32 0.0, %v407
  %409 = vmatprep.mubr.f32.mxu0 0.0
  %410 = vmatmul.mubr.f32.gmra.mrb[0].mxu0 %v25
  %v411 = vpop.f32.mrb[0].mxu0
  %v412 = vadd.f32 0.0, %v411
  %v413 = vpop.f32.mrb[0].mxu0
  %v414 = vadd.f32 0.0, %v413
  %415 = vmatprep.mubr.f32.mxu0 0.0
  %416 = vmatmul.mubr.f32.gmra.mrb[0].mxu0 %v26
  %v417 = vpop.f32.mrb[0].mxu0
  %v418 = vadd.f32 0.0, %v417
  %v419 = vpop.f32.mrb[0].mxu0
  %v420 = vadd.f32 0.0, %v419
  %421 = vdwg.mxu0
  %422 = vmatprep.subr.mxu0 %v272
  %423 = vmatpush1.msra.mxu0 %v271
  %424 = vmatprep.subr.mxu0 %v276
  %425 = vmatpush1.msra.mxu0 %v275
  %426 = vmatprep.subr.mxu0 %v280
  %427 = vmatpush1.msra.mxu0 %v279
  %428 = vmatprep.subr.mxu0 %v284
  %429 = vmatpush1.msra.mxu0 %v283
  %430 = vmatprep.subr.mxu0 %v288
  %431 = vmatpush1.msra.mxu0 %v287
  %432 = vmatprep.subr.mxu0 %v292
  %433 = vmatpush1.msra.mxu0 %v291
  %434 = vmatprep.subr.mxu0 %v296
  %435 = vmatpush1.msra.mxu0 %v295
  %436 = vmatprep.subr.mxu0 %v300
  %437 = vmatpush1.msra.mxu0 %v299
  %438 = vmatprep.subr.mxu0 %v304
  %439 = vmatpush1.msra.mxu0 %v303
  %440 = vmatprep.subr.mxu0 %v308
  %441 = vmatpush1.msra.mxu0 %v307
  %442 = vmatprep.subr.mxu0 %v312
  %443 = vmatpush1.msra.mxu0 %v311
  %444 = vmatprep.subr.mxu0 %v316
  %445 = vmatpush1.msra.mxu0 %v315
  %446 = vmatprep.subr.mxu0 %v320
  %447 = vmatpush1.msra.mxu0 %v319
  %448 = vmatprep.subr.mxu0 %v324
  %449 = vmatpush1.msra.mxu0 %v323
  %450 = vmatprep.subr.mxu0 %v328
  %451 = vmatpush1.msra.mxu0 %v327
  %452 = vmatprep.subr.mxu0 %v332
  %453 = vmatpush1.msra.mxu0 %v331
  %454 = vmatprep.subr.mxu0 0.0
  %455 = vmatpush1.msra.mxu0 0.0
  %456 = vmatprep.subr.mxu0 0.0
  %457 = vmatpush1.msra.mxu0 0.0
  %458 = vmatprep.subr.mxu0 0.0
  %459 = vmatpush1.msra.mxu0 0.0
  %460 = vmatprep.subr.mxu0 0.0
  %461 = vmatpush1.msra.mxu0 0.0
  %462 = vmatprep.subr.mxu0 0.0
  %463 = vmatpush1.msra.mxu0 0.0
  %464 = vmatprep.subr.mxu0 0.0
  %465 = vmatpush1.msra.mxu0 0.0
  %466 = vmatprep.subr.mxu0 0.0
  %467 = vmatpush1.msra.mxu0 0.0
  %468 = vmatprep.subr.mxu0 0.0
  %469 = vmatpush1.msra.mxu0 0.0
  %470 = vmatprep.subr.mxu0 0.0
  %471 = vmatpush1.msra.mxu0 0.0
  %472 = vmatprep.subr.mxu0 0.0
  %473 = vmatpush1.msra.mxu0 0.0
  %474 = vmatprep.subr.mxu0 0.0
  %475 = vmatpush1.msra.mxu0 0.0
  %476 = vmatprep.subr.mxu0 0.0
  %477 = vmatpush1.msra.mxu0 0.0
  %478 = vmatprep.subr.mxu0 0.0
  %479 = vmatpush1.msra.mxu0 0.0
  %480 = vmatprep.subr.mxu0 0.0
  %481 = vmatpush1.msra.mxu0 0.0
  %482 = vmatprep.subr.mxu0 0.0
  %483 = vmatpush1.msra.mxu0 0.0
  %484 = vmatprep.subr.mxu0 0.0
  %485 = vmatpush1.msra.mxu0 0.0
  %486 = vmatprep.mubr.f32.mxu0 0.0
  %487 = vmatmul.mubr.f32.gmra.mrb[0].mxu0 %v23
  %v488 = vpop.f32.mrb[0].mxu0
  %v489 = vadd.f32 0.0, %v488
  %v490 = vpop.f32.mrb[0].mxu0
  %v491 = vadd.f32 0.0, %v490
  %492 = vmatprep.mubr.f32.mxu0 0.0
  %493 = vmatmul.mubr.f32.gmra.mrb[0].mxu0 %v24
  %v494 = vpop.f32.mrb[0].mxu0
  %v495 = vadd.f32 0.0, %v494
  %v496 = vpop.f32.mrb[0].mxu0
  %v497 = vadd.f32 0.0, %v496
  %498 = vmatprep.mubr.f32.mxu0 0.0
  %499 = vmatmul.mubr.f32.gmra.mrb[0].mxu0 %v25
  %v500 = vpop.f32.mrb[0].mxu0
  %v501 = vadd.f32 0.0, %v500
  %v502 = vpop.f32.mrb[0].mxu0
  %v503 = vadd.f32 0.0, %v502
  %504 = vmatprep.mubr.f32.mxu0 0.0
  %505 = vmatmul.mubr.f32.gmra.mrb[0].mxu0 %v26
  %v506 = vpop.f32.mrb[0].mxu0
  %v507 = vadd.f32 0.0, %v506
  %v508 = vpop.f32.mrb[0].mxu0
  %v509 = vadd.f32 0.0, %v508
  %510 = vdwg.mxu0
  %v511 = vld [vmem:[%s4] sm:$0xff]
  %v512 = vld [vmem:[%s4 + $0x8] sm:$0xff]
  %v513 = vld [vmem:[%s4 + $0x10] sm:$0xff]
  %v514 = vld [vmem:[%s4 + $0x18] sm:$0xff]
  %v515 = vld [vmem:[%s4 + $0x20] sm:$0xff]
  %v516 = vld [vmem:[%s4 + $0x28] sm:$0xff]
  %v517 = vld [vmem:[%s4 + $0x30] sm:$0xff]
  %v518 = vld [vmem:[%s4 + $0x38] sm:$0xff]
  %v519 = vld [vmem:[%s4 + $0x40] sm:$0xff]
  %v520 = vld [vmem:[%s4 + $0x48] sm:$0xff]
  %v521 = vld [vmem:[%s4 + $0x50] sm:$0xff]
  %v522 = vld [vmem:[%s4 + $0x58] sm:$0xff]
  %v523 = vld [vmem:[%s4 + $0x60] sm:$0xff]
  %v524 = vld [vmem:[%s4 + $0x68] sm:$0xff]
  %v525 = vld [vmem:[%s4 + $0x70] sm:$0xff]
  %v526 = vld [vmem:[%s4 + $0x78] sm:$0xff]
  %v527 = vld [vmem:[%s4 + $0x80] sm:$0xff]
  %v528 = vld [vmem:[%s4 + $0x88] sm:$0xff]
  %v529 = vld [vmem:[%s4 + $0x90] sm:$0xff]
  %v530 = vld [vmem:[%s4 + $0x98] sm:$0xff]
  %v531 = vld [vmem:[%s4 + $0xa0] sm:$0xff]
  %v532 = vld [vmem:[%s4 + $0xa8] sm:$0xff]
  %v533 = vld [vmem:[%s4 + $0xb0] sm:$0xff]
  %v534 = vld [vmem:[%s4 + $0xb8] sm:$0xff]
  %v535 = vld [vmem:[%s4 + $0xc0] sm:$0xff]
  %v536 = vld [vmem:[%s4 + $0xc8] sm:$0xff]
  %v537 = vld [vmem:[%s4 + $0xd0] sm:$0xff]
  %v538 = vld [vmem:[%s4 + $0xd8] sm:$0xff]
  %v539 = vld [vmem:[%s4 + $0xe0] sm:$0xff]
  %v540 = vld [vmem:[%s4 + $0xe8] sm:$0xff]
  %v541 = vld [vmem:[%s4 + $0xf0] sm:$0xff]
  %v542 = vld [vmem:[%s4 + $0xf8] sm:$0xff]
  %v543 = vld [vmem:[%s4 + $0x100] sm:$0xff]
  %v544 = vld [vmem:[%s4 + $0x108] sm:$0xff]
  %v545 = vld [vmem:[%s4 + $0x110] sm:$0xff]
  %v546 = vld [vmem:[%s4 + $0x118] sm:$0xff]
  %v547 = vld [vmem:[%s4 + $0x120] sm:$0xff]
  %v548 = vld [vmem:[%s4 + $0x128] sm:$0xff]
  %v549 = vld [vmem:[%s4 + $0x130] sm:$0xff]
  %v550 = vld [vmem:[%s4 + $0x138] sm:$0xff]
  %v551 = vld [vmem:[%s4 + $0x140] sm:$0xff]
  %v552 = vld [vmem:[%s4 + $0x148] sm:$0xff]
  %v553 = vld [vmem:[%s4 + $0x150] sm:$0xff]
  %v554 = vld [vmem:[%s4 + $0x158] sm:$0xff]
  %v555 = vld [vmem:[%s4 + $0x160] sm:$0xff]
  %v556 = vld [vmem:[%s4 + $0x168] sm:$0xff]
  %v557 = vld [vmem:[%s4 + $0x170] sm:$0xff]
  %v558 = vld [vmem:[%s4 + $0x178] sm:$0xff]
  %v559 = vld [vmem:[%s4 + $0x180] sm:$0xff]
  %v560 = vld [vmem:[%s4 + $0x188] sm:$0xff]
  %v561 = vld [vmem:[%s4 + $0x190] sm:$0xff]
  %v562 = vld [vmem:[%s4 + $0x198] sm:$0xff]
  %v563 = vld [vmem:[%s4 + $0x1a0] sm:$0xff]
  %v564 = vld [vmem:[%s4 + $0x1a8] sm:$0xff]
  %v565 = vld [vmem:[%s4 + $0x1b0] sm:$0xff]
  %v566 = vld [vmem:[%s4 + $0x1b8] sm:$0xff]
  %v567 = vld [vmem:[%s4 + $0x1c0] sm:$0xff]
  %v568 = vld [vmem:[%s4 + $0x1c8] sm:$0xff]
  %v569 = vld [vmem:[%s4 + $0x1d0] sm:$0xff]
  %v570 = vld [vmem:[%s4 + $0x1d8] sm:$0xff]
  %v571 = vld [vmem:[%s4 + $0x1e0] sm:$0xff]
  %v572 = vld [vmem:[%s4 + $0x1e8] sm:$0xff]
  %v573 = vld [vmem:[%s4 + $0x1f0] sm:$0xff]
  %v574 = vld [vmem:[%s4 + $0x1f8] sm:$0xff]
  %575 = vmatprep.subr.mxu0 %v512
  %576 = vmatpush1.msra.mxu0 %v511
  %577 = vmatprep.subr.mxu0 %v516
  %578 = vmatpush1.msra.mxu0 %v515
  %579 = vmatprep.subr.mxu0 %v520
  %580 = vmatpush1.msra.mxu0 %v519
  %581 = vmatprep.subr.mxu0 %v524
  %582 = vmatpush1.msra.mxu0 %v523
  %583 = vmatprep.subr.mxu0 %v528
  %584 = vmatpush1.msra.mxu0 %v527
  %585 = vmatprep.subr.mxu0 %v532
  %586 = vmatpush1.msra.mxu0 %v531
  %587 = vmatprep.subr.mxu0 %v536
  %588 = vmatpush1.msra.mxu0 %v535
  %589 = vmatprep.subr.mxu0 %v540
  %590 = vmatpush1.msra.mxu0 %v539
  %591 = vmatprep.subr.mxu0 %v544
  %592 = vmatpush1.msra.mxu0 %v543
  %593 = vmatprep.subr.mxu0 %v548
  %594 = vmatpush1.msra.mxu0 %v547
  %595 = vmatprep.subr.mxu0 %v552
  %596 = vmatpush1.msra.mxu0 %v551
  %597 = vmatprep.subr.mxu0 %v556
  %598 = vmatpush1.msra.mxu0 %v555
  %599 = vmatprep.subr.mxu0 %v560
  %600 = vmatpush1.msra.mxu0 %v559
  %601 = vmatprep.subr.mxu0 %v564
  %602 = vmatpush1.msra.mxu0 %v563
  %603 = vmatprep.subr.mxu0 %v568
  %604 = vmatpush1.msra.mxu0 %v567
  %605 = vmatprep.subr.mxu0 %v572
  %606 = vmatpush1.msra.mxu0 %v571
  %607 = vmatprep.subr.mxu0 0.0
  %608 = vmatpush1.msra.mxu0 0.0
  %609 = vmatprep.subr.mxu0 0.0
  %610 = vmatpush1.msra.mxu0 0.0
  %611 = vmatprep.subr.mxu0 0.0
  %612 = vmatpush1.msra.mxu0 0.0
  %613 = vmatprep.subr.mxu0 0.0
  %614 = vmatpush1.msra.mxu0 0.0
  %615 = vmatprep.subr.mxu0 0.0
  %616 = vmatpush1.msra.mxu0 0.0
  %617 = vmatprep.subr.mxu0 0.0
  %618 = vmatpush1.msra.mxu0 0.0
  %619 = vmatprep.subr.mxu0 0.0
  %620 = vmatpush1.msra.mxu0 0.0
  %621 = vmatprep.subr.mxu0 0.0
  %622 = vmatpush1.msra.mxu0 0.0
  %623 = vmatprep.subr.mxu0 0.0
  %624 = vmatpush1.msra.mxu0 0.0
  %625 = vmatprep.subr.mxu0 0.0
  %626 = vmatpush1.msra.mxu0 0.0
  %627 = vmatprep.subr.mxu0 0.0
  %628 = vmatpush1.msra.mxu0 0.0
  %629 = vmatprep.subr.mxu0 0.0
  %630 = vmatpush1.msra.mxu0 0.0
  %631 = vmatprep.subr.mxu0 0.0
  %632 = vmatpush1.msra.mxu0 0.0
  %633 = vmatprep.subr.mxu0 0.0
  %634 = vmatpush1.msra.mxu0 0.0
  %635 = vmatprep.subr.mxu0 0.0
  %636 = vmatpush1.msra.mxu0 0.0
  %637 = vmatprep.subr.mxu0 0.0
  %638 = vmatpush1.msra.mxu0 0.0
  %639 = vmatprep.mubr.f32.mxu0 0.0
  %640 = vmatmul.mubr.f32.gmra.mrb[0].mxu0 %v23
  %v641 = vpop.f32.mrb[0].mxu0
  %v642 = vadd.f32 0.0, %v641
  %v643 = vpop.f32.mrb[0].mxu0
  %v644 = vadd.f32 0.0, %v643
  %645 = vmatprep.mubr.f32.mxu0 0.0
  %646 = vmatmul.mubr.f32.gmra.mrb[0].mxu0 %v24
  %v647 = vpop.f32.mrb[0].mxu0
  %v648 = vadd.f32 0.0, %v647
  %v649 = vpop.f32.mrb[0].mxu0
  %v650 = vadd.f32 0.0, %v649
  %651 = vmatprep.mubr.f32.mxu0 0.0
  %652 = vmatmul.mubr.f32.gmra.mrb[0].mxu0 %v25
  %v653 = vpop.f32.mrb[0].mxu0
  %v654 = vadd.f32 0.0, %v653
  %v655 = vpop.f32.mrb[0].mxu0
  %v656 = vadd.f32 0.0, %v655
  %657 = vmatprep.mubr.f32.mxu0 0.0
  %658 = vmatmul.mubr.f32.gmra.mrb[0].mxu0 %v26
  %v659 = vpop.f32.mrb[0].mxu0
  %v660 = vadd.f32 0.0, %v659
  %v661 = vpop.f32.mrb[0].mxu0
  %v662 = vadd.f32 0.0, %v661
  %663 = vdwg.mxu0
  %664 = vmatprep.subr.mxu0 %v514
  %665 = vmatpush1.msra.mxu0 %v513
  %666 = vmatprep.subr.mxu0 %v518
  %667 = vmatpush1.msra.mxu0 %v517
  %668 = vmatprep.subr.mxu0 %v522
  %669 = vmatpush1.msra.mxu0 %v521
  %670 = vmatprep.subr.mxu0 %v526
  %671 = vmatpush1.msra.mxu0 %v525
  %672 = vmatprep.subr.mxu0 %v530
  %673 = vmatpush1.msra.mxu0 %v529
  %674 = vmatprep.subr.mxu0 %v534
  %675 = vmatpush1.msra.mxu0 %v533
  %676 = vmatprep.subr.mxu0 %v538
  %677 = vmatpush1.msra.mxu0 %v537
  %678 = vmatprep.subr.mxu0 %v542
  %679 = vmatpush1.msra.mxu0 %v541
  %680 = vmatprep.subr.mxu0 %v546
  %681 = vmatpush1.msra.mxu0 %v545
  %682 = vmatprep.subr.mxu0 %v550
  %683 = vmatpush1.msra.mxu0 %v549
  %684 = vmatprep.subr.mxu0 %v554
  %685 = vmatpush1.msra.mxu0 %v553
  %686 = vmatprep.subr.mxu0 %v558
  %687 = vmatpush1.msra.mxu0 %v557
  %688 = vmatprep.subr.mxu0 %v562
  %689 = vmatpush1.msra.mxu0 %v561
  %690 = vmatprep.subr.mxu0 %v566
  %691 = vmatpush1.msra.mxu0 %v565
  %692 = vmatprep.subr.mxu0 %v570
  %693 = vmatpush1.msra.mxu0 %v569
  %694 = vmatprep.subr.mxu0 %v574
  %695 = vmatpush1.msra.mxu0 %v573
  %696 = vmatprep.subr.mxu0 0.0
  %697 = vmatpush1.msra.mxu0 0.0
  %698 = vmatprep.subr.mxu0 0.0
  %699 = vmatpush1.msra.mxu0 0.0
  %700 = vmatprep.subr.mxu0 0.0
  %701 = vmatpush1.msra.mxu0 0.0
  %702 = vmatprep.subr.mxu0 0.0
  %703 = vmatpush1.msra.mxu0 0.0
  %704 = vmatprep.subr.mxu0 0.0
  %705 = vmatpush1.msra.mxu0 0.0
  %706 = vmatprep.subr.mxu0 0.0
  %707 = vmatpush1.msra.mxu0 0.0
  %708 = vmatprep.subr.mxu0 0.0
  %709 = vmatpush1.msra.mxu0 0.0
  %710 = vmatprep.subr.mxu0 0.0
  %711 = vmatpush1.msra.mxu0 0.0
  %712 = vmatprep.subr.mxu0 0.0
  %713 = vmatpush1.msra.mxu0 0.0
  %714 = vmatprep.subr.mxu0 0.0
  %715 = vmatpush1.msra.mxu0 0.0
  %716 = vmatprep.subr.mxu0 0.0
  %717 = vmatpush1.msra.mxu0 0.0
  %718 = vmatprep.subr.mxu0 0.0
  %719 = vmatpush1.msra.mxu0 0.0
  %720 = vmatprep.subr.mxu0 0.0
  %721 = vmatpush1.msra.mxu0 0.0
  %722 = vmatprep.subr.mxu0 0.0
  %723 = vmatpush1.msra.mxu0 0.0
  %724 = vmatprep.subr.mxu0 0.0
  %725 = vmatpush1.msra.mxu0 0.0
  %726 = vmatprep.subr.mxu0 0.0
  %727 = vmatpush1.msra.mxu0 0.0
  %728 = vmatprep.mubr.f32.mxu0 0.0
  %729 = vmatmul.mubr.f32.gmra.mrb[0].mxu0 %v23
  %v730 = vpop.f32.mrb[0].mxu0
  %v731 = vadd.f32 0.0, %v730
  %v732 = vpop.f32.mrb[0].mxu0
  %v733 = vadd.f32 0.0, %v732
  %734 = vmatprep.mubr.f32.mxu0 0.0
  %735 = vmatmul.mubr.f32.gmra.mrb[0].mxu0 %v24
  %v736 = vpop.f32.mrb[0].mxu0
  %v737 = vadd.f32 0.0, %v736
  %v738 = vpop.f32.mrb[0].mxu0
  %v739 = vadd.f32 0.0, %v738
  %740 = vmatprep.mubr.f32.mxu0 0.0
  %741 = vmatmul.mubr.f32.gmra.mrb[0].mxu0 %v25
  %v742 = vpop.f32.mrb[0].mxu0
  %v743 = vadd.f32 0.0, %v742
  %v744 = vpop.f32.mrb[0].mxu0
  %v745 = vadd.f32 0.0, %v744
  %746 = vmatprep.mubr.f32.mxu0 0.0
  %747 = vmatmul.mubr.f32.gmra.mrb[0].mxu0 %v26
  %v748 = vpop.f32.mrb[0].mxu0
  %v749 = vadd.f32 0.0, %v748
  %v750 = vpop.f32.mrb[0].mxu0
  %v751 = vadd.f32 0.0, %v750
  %752 = vdwg.mxu0
  %v753 = vld [vmem:[%s5] sm:$0xff]
  %v754 = vld [vmem:[%s5 + $0x8] sm:$0xff]
  %v755 = vld [vmem:[%s5 + $0x10] sm:$0xff]
  %v756 = vld [vmem:[%s5 + $0x18] sm:$0xff]
  %v757 = vld [vmem:[%s5 + $0x20] sm:$0xff]
  %v758 = vld [vmem:[%s5 + $0x28] sm:$0xff]
  %v759 = vld [vmem:[%s5 + $0x30] sm:$0xff]
  %v760 = vld [vmem:[%s5 + $0x38] sm:$0xff]
  %v761 = vld [vmem:[%s5 + $0x40] sm:$0xff]
  %v762 = vld [vmem:[%s5 + $0x48] sm:$0xff]
  %v763 = vld [vmem:[%s5 + $0x50] sm:$0xff]
  %v764 = vld [vmem:[%s5 + $0x58] sm:$0xff]
  %v765 = vld [vmem:[%s5 + $0x60] sm:$0xff]
  %v766 = vld [vmem:[%s5 + $0x68] sm:$0xff]
  %v767 = vld [vmem:[%s5 + $0x70] sm:$0xff]
  %v768 = vld [vmem:[%s5 + $0x78] sm:$0xff]
  %v769 = vld [vmem:[%s5 + $0x80] sm:$0xff]
  %v770 = vld [vmem:[%s5 + $0x88] sm:$0xff]
  %v771 = vld [vmem:[%s5 + $0x90] sm:$0xff]
  %v772 = vld [vmem:[%s5 + $0x98] sm:$0xff]
  %v773 = vld [vmem:[%s5 + $0xa0] sm:$0xff]
  %v774 = vld [vmem:[%s5 + $0xa8] sm:$0xff]
  %v775 = vld [vmem:[%s5 + $0xb0] sm:$0xff]
  %v776 = vld [vmem:[%s5 + $0xb8] sm:$0xff]
  %v777 = vld [vmem:[%s5 + $0xc0] sm:$0xff]
  %v778 = vld [vmem:[%s5 + $0xc8] sm:$0xff]
  %v779 = vld [vmem:[%s5 + $0xd0] sm:$0xff]
  %v780 = vld [vmem:[%s5 + $0xd8] sm:$0xff]
  %v781 = vld [vmem:[%s5 + $0xe0] sm:$0xff]
  %v782 = vld [vmem:[%s5 + $0xe8] sm:$0xff]
  %v783 = vld [vmem:[%s5 + $0xf0] sm:$0xff]
  %v784 = vld [vmem:[%s5 + $0xf8] sm:$0xff]
  %v785 = vld [vmem:[%s5 + $0x100] sm:$0xff]
  %v786 = vld [vmem:[%s5 + $0x108] sm:$0xff]
  %v787 = vld [vmem:[%s5 + $0x110] sm:$0xff]
  %v788 = vld [vmem:[%s5 + $0x118] sm:$0xff]
  %v789 = vld [vmem:[%s5 + $0x120] sm:$0xff]
  %v790 = vld [vmem:[%s5 + $0x128] sm:$0xff]
  %v791 = vld [vmem:[%s5 + $0x130] sm:$0xff]
  %v792 = vld [vmem:[%s5 + $0x138] sm:$0xff]
  %v793 = vld [vmem:[%s5 + $0x140] sm:$0xff]
  %v794 = vld [vmem:[%s5 + $0x148] sm:$0xff]
  %v795 = vld [vmem:[%s5 + $0x150] sm:$0xff]
  %v796 = vld [vmem:[%s5 + $0x158] sm:$0xff]
  %v797 = vld [vmem:[%s5 + $0x160] sm:$0xff]
  %v798 = vld [vmem:[%s5 + $0x168] sm:$0xff]
  %v799 = vld [vmem:[%s5 + $0x170] sm:$0xff]
  %v800 = vld [vmem:[%s5 + $0x178] sm:$0xff]
  %v801 = vld [vmem:[%s5 + $0x180] sm:$0xff]
  %v802 = vld [vmem:[%s5 + $0x188] sm:$0xff]
  %v803 = vld [vmem:[%s5 + $0x190] sm:$0xff]
  %v804 = vld [vmem:[%s5 + $0x198] sm:$0xff]
  %v805 = vld [vmem:[%s5 + $0x1a0] sm:$0xff]
  %v806 = vld [vmem:[%s5 + $0x1a8] sm:$0xff]
  %v807 = vld [vmem:[%s5 + $0x1b0] sm:$0xff]
  %v808 = vld [vmem:[%s5 + $0x1b8] sm:$0xff]
  %v809 = vld [vmem:[%s5 + $0x1c0] sm:$0xff]
  %v810 = vld [vmem:[%s5 + $0x1c8] sm:$0xff]
  %v811 = vld [vmem:[%s5 + $0x1d0] sm:$0xff]
  %v812 = vld [vmem:[%s5 + $0x1d8] sm:$0xff]
  %v813 = vld [vmem:[%s5 + $0x1e0] sm:$0xff]
  %v814 = vld [vmem:[%s5 + $0x1e8] sm:$0xff]
  %v815 = vld [vmem:[%s5 + $0x1f0] sm:$0xff]
  %v816 = vld [vmem:[%s5 + $0x1f8] sm:$0xff]
  %817 = vmatprep.subr.mxu0 %v754
  %818 = vmatpush1.msra.mxu0 %v753
  %819 = vmatprep.subr.mxu0 %v758
  %820 = vmatpush1.msra.mxu0 %v757
  %821 = vmatprep.subr.mxu0 %v762
  %822 = vmatpush1.msra.mxu0 %v761
  %823 = vmatprep.subr.mxu0 %v766
  %824 = vmatpush1.msra.mxu0 %v765
  %825 = vmatprep.subr.mxu0 %v770
  %826 = vmatpush1.msra.mxu0 %v769
  %827 = vmatprep.subr.mxu0 %v774
  %828 = vmatpush1.msra.mxu0 %v773
  %829 = vmatprep.subr.mxu0 %v778
  %830 = vmatpush1.msra.mxu0 %v777
  %831 = vmatprep.subr.mxu0 %v782
  %832 = vmatpush1.msra.mxu0 %v781
  %833 = vmatprep.subr.mxu0 %v786
  %834 = vmatpush1.msra.mxu0 %v785
  %835 = vmatprep.subr.mxu0 %v790
  %836 = vmatpush1.msra.mxu0 %v789
  %837 = vmatprep.subr.mxu0 %v794
  %838 = vmatpush1.msra.mxu0 %v793
  %839 = vmatprep.subr.mxu0 %v798
  %840 = vmatpush1.msra.mxu0 %v797
  %841 = vmatprep.subr.mxu0 %v802
  %842 = vmatpush1.msra.mxu0 %v801
  %843 = vmatprep.subr.mxu0 %v806
  %844 = vmatpush1.msra.mxu0 %v805
  %845 = vmatprep.subr.mxu0 %v810
  %846 = vmatpush1.msra.mxu0 %v809
  %847 = vmatprep.subr.mxu0 %v814
  %848 = vmatpush1.msra.mxu0 %v813
  %849 = vmatprep.subr.mxu0 0.0
  %850 = vmatpush1.msra.mxu0 0.0
  %851 = vmatprep.subr.mxu0 0.0
  %852 = vmatpush1.msra.mxu0 0.0
  %853 = vmatprep.subr.mxu0 0.0
  %854 = vmatpush1.msra.mxu0 0.0
  %855 = vmatprep.subr.mxu0 0.0
  %856 = vmatpush1.msra.mxu0 0.0
  %857 = vmatprep.subr.mxu0 0.0
  %858 = vmatpush1.msra.mxu0 0.0
  %859 = vmatprep.subr.mxu0 0.0
  %860 = vmatpush1.msra.mxu0 0.0
  %861 = vmatprep.subr.mxu0 0.0
  %862 = vmatpush1.msra.mxu0 0.0
  %863 = vmatprep.subr.mxu0 0.0
  %864 = vmatpush1.msra.mxu0 0.0
  %865 = vmatprep.subr.mxu0 0.0
  %866 = vmatpush1.msra.mxu0 0.0
  %867 = vmatprep.subr.mxu0 0.0
  %868 = vmatpush1.msra.mxu0 0.0
  %869 = vmatprep.subr.mxu0 0.0
  %870 = vmatpush1.msra.mxu0 0.0
  %871 = vmatprep.subr.mxu0 0.0
  %872 = vmatpush1.msra.mxu0 0.0
  %873 = vmatprep.subr.mxu0 0.0
  %874 = vmatpush1.msra.mxu0 0.0
  %875 = vmatprep.subr.mxu0 0.0
  %876 = vmatpush1.msra.mxu0 0.0
  %877 = vmatprep.subr.mxu0 0.0
  %878 = vmatpush1.msra.mxu0 0.0
  %879 = vmatprep.subr.mxu0 0.0
  %880 = vmatpush1.msra.mxu0 0.0
  %881 = vmatprep.mubr.f32.mxu0 0.0
  %882 = vmatmul.mubr.f32.gmra.mrb[0].mxu0 %v23
  %v883 = vpop.f32.mrb[0].mxu0
  %v884 = vadd.f32 0.0, %v883
  %v885 = vpop.f32.mrb[0].mxu0
  %v886 = vadd.f32 0.0, %v885
  %887 = vmatprep.mubr.f32.mxu0 0.0
  %888 = vmatmul.mubr.f32.gmra.mrb[0].mxu0 %v24
  %v889 = vpop.f32.mrb[0].mxu0
  %v890 = vadd.f32 0.0, %v889
  %v891 = vpop.f32.mrb[0].mxu0
  %v892 = vadd.f32 0.0, %v891
  %893 = vmatprep.mubr.f32.mxu0 0.0
  %894 = vmatmul.mubr.f32.gmra.mrb[0].mxu0 %v25
  %v895 = vpop.f32.mrb[0].mxu0
  %v896 = vadd.f32 0.0, %v895
  %v897 = vpop.f32.mrb[0].mxu0
  %v898 = vadd.f32 0.0, %v897
  %899 = vmatprep.mubr.f32.mxu0 0.0
  %900 = vmatmul.mubr.f32.gmra.mrb[0].mxu0 %v26
  %v901 = vpop.f32.mrb[0].mxu0
  %v902 = vadd.f32 0.0, %v901
  %v903 = vpop.f32.mrb[0].mxu0
  %v904 = vadd.f32 0.0, %v903
  %905 = vdwg.mxu0
  %906 = vmatprep.subr.mxu0 %v756
  %907 = vmatpush1.msra.mxu0 %v755
  %908 = vmatprep.subr.mxu0 %v760
  %909 = vmatpush1.msra.mxu0 %v759
  %910 = vmatprep.subr.mxu0 %v764
  %911 = vmatpush1.msra.mxu0 %v763
  %912 = vmatprep.subr.mxu0 %v768
  %913 = vmatpush1.msra.mxu0 %v767
  %914 = vmatprep.subr.mxu0 %v772
  %915 = vmatpush1.msra.mxu0 %v771
  %916 = vmatprep.subr.mxu0 %v776
  %917 = vmatpush1.msra.mxu0 %v775
  %918 = vmatprep.subr.mxu0 %v780
  %919 = vmatpush1.msra.mxu0 %v779
  %920 = vmatprep.subr.mxu0 %v784
  %921 = vmatpush1.msra.mxu0 %v783
  %922 = vmatprep.subr.mxu0 %v788
  %923 = vmatpush1.msra.mxu0 %v787
  %924 = vmatprep.subr.mxu0 %v792
  %925 = vmatpush1.msra.mxu0 %v791
  %926 = vmatprep.subr.mxu0 %v796
  %927 = vmatpush1.msra.mxu0 %v795
  %928 = vmatprep.subr.mxu0 %v800
  %929 = vmatpush1.msra.mxu0 %v799
  %930 = vmatprep.subr.mxu0 %v804
  %931 = vmatpush1.msra.mxu0 %v803
  %932 = vmatprep.subr.mxu0 %v808
  %933 = vmatpush1.msra.mxu0 %v807
  %934 = vmatprep.subr.mxu0 %v812
  %935 = vmatpush1.msra.mxu0 %v811
  %936 = vmatprep.subr.mxu0 %v816
  %937 = vmatpush1.msra.mxu0 %v815
  %938 = vmatprep.subr.mxu0 0.0
  %939 = vmatpush1.msra.mxu0 0.0
  %940 = vmatprep.subr.mxu0 0.0
  %941 = vmatpush1.msra.mxu0 0.0
  %942 = vmatprep.subr.mxu0 0.0
  %943 = vmatpush1.msra.mxu0 0.0
  %944 = vmatprep.subr.mxu0 0.0
  %945 = vmatpush1.msra.mxu0 0.0
  %946 = vmatprep.subr.mxu0 0.0
  %947 = vmatpush1.msra.mxu0 0.0
  %948 = vmatprep.subr.mxu0 0.0
  %949 = vmatpush1.msra.mxu0 0.0
  %950 = vmatprep.subr.mxu0 0.0
  %951 = vmatpush1.msra.mxu0 0.0
  %952 = vmatprep.subr.mxu0 0.0
  %953 = vmatpush1.msra.mxu0 0.0
  %954 = vmatprep.subr.mxu0 0.0
  %955 = vmatpush1.msra.mxu0 0.0
  %956 = vmatprep.subr.mxu0 0.0
  %957 = vmatpush1.msra.mxu0 0.0
  %958 = vmatprep.subr.mxu0 0.0
  %959 = vmatpush1.msra.mxu0 0.0
  %960 = vmatprep.subr.mxu0 0.0
  %961 = vmatpush1.msra.mxu0 0.0
  %962 = vmatprep.subr.mxu0 0.0
  %963 = vmatpush1.msra.mxu0 0.0
  %964 = vmatprep.subr.mxu0 0.0
  %965 = vmatpush1.msra.mxu0 0.0
  %966 = vmatprep.subr.mxu0 0.0
  %967 = vmatpush1.msra.mxu0 0.0
  %968 = vmatprep.subr.mxu0 0.0
  %969 = vmatpush1.msra.mxu0 0.0
  %970 = vmatprep.mubr.f32.mxu0 0.0
  %971 = vmatmul.mubr.f32.gmra.mrb[0].mxu0 %v23
  %v972 = vpop.f32.mrb[0].mxu0
  %v973 = vadd.f32 0.0, %v972
  %v974 = vpop.f32.mrb[0].mxu0
  %v975 = vadd.f32 0.0, %v974
  %976 = vmatprep.mubr.f32.mxu0 0.0
  %977 = vmatmul.mubr.f32.gmra.mrb[0].mxu0 %v24
  %v978 = vpop.f32.mrb[0].mxu0
  %v979 = vadd.f32 0.0, %v978
  %v980 = vpop.f32.mrb[0].mxu0
  %v981 = vadd.f32 0.0, %v980
  %982 = vmatprep.mubr.f32.mxu0 0.0
  %983 = vmatmul.mubr.f32.gmra.mrb[0].mxu0 %v25
  %v984 = vpop.f32.mrb[0].mxu0
  %v985 = vadd.f32 0.0, %v984
  %v986 = vpop.f32.mrb[0].mxu0
  %v987 = vadd.f32 0.0, %v986
  %988 = vmatprep.mubr.f32.mxu0 0.0
  %989 = vmatmul.mubr.f32.gmra.mrb[0].mxu0 %v26
  %v990 = vpop.f32.mrb[0].mxu0
  %v991 = vadd.f32 0.0, %v990
  %v992 = vpop.f32.mrb[0].mxu0
  %v993 = vadd.f32 0.0, %v992
  %994 = vdwg.mxu0
  %v995 = vmax.f32 %v158, %v400
  %v996 = vmax.f32 %v160, %v402
  %v997 = vmax.f32 %v247, %v489
  %v998 = vmax.f32 %v249, %v491
  %v999 = vmax.f32 %v164, %v406
  %v1000 = vmax.f32 %v166, %v408
  %v1001 = vmax.f32 %v253, %v495
  %v1002 = vmax.f32 %v255, %v497
  %v1003 = vmax.f32 %v170, %v412
  %v1004 = vmax.f32 %v172, %v414
  %v1005 = vmax.f32 %v259, %v501
  %v1006 = vmax.f32 %v261, %v503
  %v1007 = vmax.f32 %v176, %v418
  %v1008 = vmax.f32 %v178, %v420
  %v1009 = vmax.f32 %v265, %v507
  %v1010 = vmax.f32 %v267, %v509
  %v1011 = vmax.f32 %v642, %v884
  %v1012 = vmax.f32 %v644, %v886
  %v1013 = vmax.f32 %v731, %v973
  %v1014 = vmax.f32 %v733, %v975
  %v1015 = vmax.f32 %v648, %v890
  %v1016 = vmax.f32 %v650, %v892
  %v1017 = vmax.f32 %v737, %v979
  %v1018 = vmax.f32 %v739, %v981
  %v1019 = vmax.f32 %v654, %v896
  %v1020 = vmax.f32 %v656, %v898
  %v1021 = vmax.f32 %v743, %v985
  %v1022 = vmax.f32 %v745, %v987
  %v1023 = vmax.f32 %v660, %v902
  %v1024 = vmax.f32 %v662, %v904
  %v1025 = vmax.f32 %v749, %v991
  %v1026 = vmax.f32 %v751, %v993
  %v1027 = vmax.f32 %v995, %v1011
  %v1028 = vmax.f32 %v996, %v1012
  %v1029 = vmax.f32 %v997, %v1013
  %v1030 = vmax.f32 %v998, %v1014
  %v1031 = vmax.f32 %v999, %v1015
  %v1032 = vmax.f32 %v1000, %v1016
  %v1033 = vmax.f32 %v1001, %v1017
  %v1034 = vmax.f32 %v1002, %v1018
  %v1035 = vmax.f32 %v1003, %v1019
  %v1036 = vmax.f32 %v1004, %v1020
  %v1037 = vmax.f32 %v1005, %v1021
  %v1038 = vmax.f32 %v1006, %v1022
  %v1039 = vmax.f32 %v1007, %v1023
  %v1040 = vmax.f32 %v1008, %v1024
  %v1041 = vmax.f32 %v1009, %v1025
  %v1042 = vmax.f32 %v1010, %v1026
  %v1043 = vld [vmem:[%s1] sm:$0xff]
  %v1044 = vld [vmem:[%s1 + $0x8] sm:$0xff]
  %v1045 = vld [vmem:[%s1 + $0x10] sm:$0xff]
  %v1046 = vld [vmem:[%s1 + $0x18] sm:$0xff]
  %1048 = vset.pattern.permute.xlu0 0
  %1049 = vperm.xlu0 %1048, %v1043
  %v1050 = vpop.permute.xlu0 %1049
  %1053 = vset.pattern.permute.xlu0 0
  %1054 = vperm.xlu0 %1053, %v1044
  %v1055 = vpop.permute.xlu0 %1054
  %1058 = vset.pattern.permute.xlu0 0
  %1059 = vperm.xlu0 %1058, %v1045
  %v1060 = vpop.permute.xlu0 %1059
  %1063 = vset.pattern.permute.xlu0 0
  %1064 = vperm.xlu0 %1063, %v1046
  %v1065 = vpop.permute.xlu0 %1064
  %v1067 = vadd.f32 %v1027, %v1050
  %v1068 = vadd.f32 %v1028, %v1050
  %v1069 = vadd.f32 %v1029, %v1050
  %v1070 = vadd.f32 %v1030, %v1050
  %v1071 = vadd.f32 %v1031, %v1055
  %v1072 = vadd.f32 %v1032, %v1055
  %v1073 = vadd.f32 %v1033, %v1055
  %v1074 = vadd.f32 %v1034, %v1055
  %v1075 = vadd.f32 %v1035, %v1060
  %v1076 = vadd.f32 %v1036, %v1060
  %v1077 = vadd.f32 %v1037, %v1060
  %v1078 = vadd.f32 %v1038, %v1060
  %v1079 = vadd.f32 %v1039, %v1065
  %v1080 = vadd.f32 %v1040, %v1065
  %v1081 = vadd.f32 %v1041, %v1065
  %v1082 = vadd.f32 %v1042, %v1065
  %1083 = vst [vmem:[%s6] sm:$0xff] %v1067
  %1084 = vst [vmem:[%s6 + $0x8] sm:$0xff] %v1068
  %1085 = vst [vmem:[%s6 + $0x10] sm:$0xff] %v1069
  %1086 = vst [vmem:[%s6 + $0x18] sm:$0xff] %v1070
  %1087 = vst [vmem:[%s6 + $0x20] sm:$0xff] %v1071
  %1088 = vst [vmem:[%s6 + $0x28] sm:$0xff] %v1072
  %1089 = vst [vmem:[%s6 + $0x30] sm:$0xff] %v1073
  %1090 = vst [vmem:[%s6 + $0x38] sm:$0xff] %v1074
  %1091 = vst [vmem:[%s6 + $0x40] sm:$0xff] %v1075
  %1092 = vst [vmem:[%s6 + $0x48] sm:$0xff] %v1076
  %1093 = vst [vmem:[%s6 + $0x50] sm:$0xff] %v1077
  %1094 = vst [vmem:[%s6 + $0x58] sm:$0xff] %v1078
  %1095 = vst [vmem:[%s6 + $0x60] sm:$0xff] %v1079
  %1096 = vst [vmem:[%s6 + $0x68] sm:$0xff] %v1080
  %1097 = vst [vmem:[%s6 + $0x70] sm:$0xff] %v1081
  %1098 = vst [vmem:[%s6 + $0x78] sm:$0xff] %v1082
  // Predicated region
  $region26: #{forward.4} parent=0 // pred_check
    _
  $region27: #{forward.4} parent=0 // pred_check_branch
    %1100 = sbr.rel (0) target = $region29
  $region28: #{forward.4} parent=0 // pred_region
    _
  $region29: #{forward.4} parent=0 // pred_fallthru
    _
  // Predicated region
  $region30: #{forward.4} parent=0 // pred_check
    _
  $region31: #{forward.4} parent=0 // pred_check_branch
    %1102 = sbr.rel (0) target = $region33
  $region32: #{forward.4} parent=0 // pred_region
    _
  $region33: #{forward.4} parent=0 // pred_fallthru
    _

// kernel: forward.5
$region0: #{forward.5}
  #allocation0 [shape = 'u32[]', space=smem, size = 0x4, offset = 0x4, fixed_abs, tag = 'smem constant byte address 0x4 - core index']
  #allocation1 [shape = 'u32[144,128]{1,0:T(1,128)}', space=vmem, size = 0x12000, scoped, tag = 'internal scratch']
  %s0 = inlined_call_operand.vmem [shape: f32[32,800], index: 0, kind: input, shape index: {}]
  %s1 = inlined_call_operand.vmem [shape: f32[32,1], index: 1, kind: input, shape index: {}]
  %s2 = inlined_call_operand.vmem [shape: f32[800,128], index: 2, kind: input, shape index: {}]
  %s3 = inlined_call_operand.vmem [shape: f32[800,128], index: 3, kind: input, shape index: {}]
  %s4 = inlined_call_operand.vmem [shape: f32[800,128], index: 4, kind: input, shape index: {}]
  %s5 = inlined_call_operand.vmem [shape: f32[800,128], index: 5, kind: input, shape index: {}]
  %s6 = inlined_call_operand.vmem [shape: f32[32,128], index: 6, kind: output, shape index: {}]
  %s7 = sld [smem:[#allocation0]]
  $region34: #{forward.5} parent=0
    _
  %s9 = ssub.s32 1, %s7
  %s10 = scalar_select 0, %s9, %s7
  // Predicated region
  $region2: #{forward.5} parent=0 // pred_check
    _
  $region3: #{forward.5} parent=0 // pred_check_branch
    %12 = sbr.rel (0) target = $region5
  $region4: #{forward.5} parent=0 // pred_region
    _
  $region5: #{forward.5} parent=0 // pred_fallthru
    _
  // Predicated region
  $region6: #{forward.5} parent=0 // pred_check
    _
  $region7: #{forward.5} parent=0 // pred_check_branch
    %14 = sbr.rel (0) target = $region9
  $region8: #{forward.5} parent=0 // pred_region
    _
  $region9: #{forward.5} parent=0 // pred_fallthru
    _
  // Predicated region
  $region10: #{forward.5} parent=0 // pred_check
    _
  $region11: #{forward.5} parent=0 // pred_check_branch
    %16 = sbr.rel (0) target = $region13
  $region12: #{forward.5} parent=0 // pred_region
    _
  $region13: #{forward.5} parent=0 // pred_fallthru
    _
  // Predicated region
  $region14: #{forward.5} parent=0 // pred_check
    _
  $region15: #{forward.5} parent=0 // pred_check_branch
    %18 = sbr.rel (0) target = $region17
  $region16: #{forward.5} parent=0 // pred_region
    _
  $region17: #{forward.5} parent=0 // pred_fallthru
    _
  // Predicated region
  $region18: #{forward.5} parent=0 // pred_check
    _
  $region19: #{forward.5} parent=0 // pred_check_branch
    %20 = sbr.rel (0) target = $region21
  $region20: #{forward.5} parent=0 // pred_region
    _
  $region21: #{forward.5} parent=0 // pred_fallthru
    _
  // Predicated region
  $region22: #{forward.5} parent=0 // pred_check
    _
  $region23: #{forward.5} parent=0 // pred_check_branch
    %22 = sbr.rel (0) target = $region25
  $region24: #{forward.5} parent=0 // pred_region
    _
  $region25: #{forward.5} parent=0 // pred_fallthru
    _
  %v23 = vld [vmem:[%s0] sm:$0xff]
  %v24 = vld [vmem:[%s0 + $0x8] sm:$0xff]
  %v25 = vld [vmem:[%s0 + $0x10] sm:$0xff]
  %v26 = vld [vmem:[%s0 + $0x18] sm:$0xff]
  %v27 = vld [vmem:[%s0 + $0x20] sm:$0xff]
  %v28 = vld [vmem:[%s0 + $0x28] sm:$0xff]
  %v29 = vld [vmem:[%s0 + $0x30] sm:$0xff]
  %v30 = vld [vmem:[%s0 + $0x38] sm:$0xff]
  %v31 = vld [vmem:[%s0 + $0x40] sm:$0xff]
  %v32 = vld [vmem:[%s0 + $0x48] sm:$0xff]
  %v33 = vld [vmem:[%s0 + $0x50] sm:$0xff]
  %v34 = vld [vmem:[%s0 + $0x58] sm:$0xff]
  %v35 = vld [vmem:[%s0 + $0x60] sm:$0xff]
  %v36 = vld [vmem:[%s0 + $0x68] sm:$0xff]
  %v37 = vld [vmem:[%s0 + $0x70] sm:$0xff]
  %v38 = vld [vmem:[%s0 + $0x78] sm:$0xff]
  %v39 = vld [vmem:[%s0 + $0x80] sm:$0xff]
  %v40 = vld [vmem:[%s0 + $0x88] sm:$0xff]
  %v41 = vld [vmem:[%s0 + $0x90] sm:$0xff]
  %v42 = vld [vmem:[%s0 + $0x98] sm:$0xff]
  %v43 = vld [vmem:[%s0 + $0xa0] sm:$0xff]
  %v44 = vld [vmem:[%s0 + $0xa8] sm:$0xff]
  %v45 = vld [vmem:[%s0 + $0xb0] sm:$0xff]
  %v46 = vld [vmem:[%s0 + $0xb8] sm:$0xff]
  %v47 = vld [vmem:[%s0 + $0xc0] sm:$0xff]
  %v48 = vld [vmem:[%s0 + $0xc8] sm:$0xff]
  %v49 = vld [vmem:[%s0 + $0xd0] sm:$0xff]
  %v50 = vld [vmem:[%s0 + $0xd8] sm:$0xff]
  %v51 = vld [vmem:[%s2] sm:$0xff]
  %v52 = vld [vmem:[%s2 + $0x8] sm:$0xff]
  %v53 = vld [vmem:[%s2 + $0x10] sm:$0xff]
  %v54 = vld [vmem:[%s2 + $0x18] sm:$0xff]
  %v55 = vld [vmem:[%s2 + $0x20] sm:$0xff]
  %v56 = vld [vmem:[%s2 + $0x28] sm:$0xff]
  %v57 = vld [vmem:[%s2 + $0x30] sm:$0xff]
  %v58 = vld [vmem:[%s2 + $0x38] sm:$0xff]
  %v59 = vld [vmem:[%s2 + $0x40] sm:$0xff]
  %v60 = vld [vmem:[%s2 + $0x48] sm:$0xff]
  %v61 = vld [vmem:[%s2 + $0x50] sm:$0xff]
  %v62 = vld [vmem:[%s2 + $0x58] sm:$0xff]
  %v63 = vld [vmem:[%s2 + $0x60] sm:$0xff]
  %v64 = vld [vmem:[%s2 + $0x68] sm:$0xff]
  %v65 = vld [vmem:[%s2 + $0x70] sm:$0xff]
  %v66 = vld [vmem:[%s2 + $0x78] sm:$0xff]
  %v67 = vld [vmem:[%s2 + $0x80] sm:$0xff]
  %v68 = vld [vmem:[%s2 + $0x88] sm:$0xff]
  %v69 = vld [vmem:[%s2 + $0x90] sm:$0xff]
  %v70 = vld [vmem:[%s2 + $0x98] sm:$0xff]
  %v71 = vld [vmem:[%s2 + $0xa0] sm:$0xff]
  %v72 = vld [vmem:[%s2 + $0xa8] sm:$0xff]
  %v73 = vld [vmem:[%s2 + $0xb0] sm:$0xff]
  %v74 = vld [vmem:[%s2 + $0xb8] sm:$0xff]
  %v75 = vld [vmem:[%s2 + $0xc0] sm:$0xff]
  %v76 = vld [vmem:[%s2 + $0xc8] sm:$0xff]
  %v77 = vld [vmem:[%s2 + $0xd0] sm:$0xff]
  %v78 = vld [vmem:[%s2 + $0xd8] sm:$0xff]
  %v79 = vld [vmem:[%s2 + $0xe0] sm:$0xff]
  %v80 = vld [vmem:[%s2 + $0xe8] sm:$0xff]
  %v81 = vld [vmem:[%s2 + $0xf0] sm:$0xff]
  %v82 = vld [vmem:[%s2 + $0xf8] sm:$0xff]
  %v83 = vld [vmem:[%s2 + $0x100] sm:$0xff]
  %v84 = vld [vmem:[%s2 + $0x108] sm:$0xff]
  %v85 = vld [vmem:[%s2 + $0x110] sm:$0xff]
  %v86 = vld [vmem:[%s2 + $0x118] sm:$0xff]
  %v87 = vld [vmem:[%s2 + $0x120] sm:$0xff]
  %v88 = vld [vmem:[%s2 + $0x128] sm:$0xff]
  %v89 = vld [vmem:[%s2 + $0x130] sm:$0xff]
  %v90 = vld [vmem:[%s2 + $0x138] sm:$0xff]
  %v91 = vld [vmem:[%s2 + $0x140] sm:$0xff]
  %v92 = vld [vmem:[%s2 + $0x148] sm:$0xff]
  %v93 = vld [vmem:[%s2 + $0x150] sm:$0xff]
  %v94 = vld [vmem:[%s2 + $0x158] sm:$0xff]
  %v95 = vld [vmem:[%s2 + $0x160] sm:$0xff]
  %v96 = vld [vmem:[%s2 + $0x168] sm:$0xff]
  %v97 = vld [vmem:[%s2 + $0x170] sm:$0xff]
  %v98 = vld [vmem:[%s2 + $0x178] sm:$0xff]
  %v99 = vld [vmem:[%s2 + $0x180] sm:$0xff]
  %v100 = vld [vmem:[%s2 + $0x188] sm:$0xff]
  %v101 = vld [vmem:[%s2 + $0x190] sm:$0xff]
  %v102 = vld [vmem:[%s2 + $0x198] sm:$0xff]
  %v103 = vld [vmem:[%s2 + $0x1a0] sm:$0xff]
  %v104 = vld [vmem:[%s2 + $0x1a8] sm:$0xff]
  %v105 = vld [vmem:[%s2 + $0x1b0] sm:$0xff]
  %v106 = vld [vmem:[%s2 + $0x1b8] sm:$0xff]
  %v107 = vld [vmem:[%s2 + $0x1c0] sm:$0xff]
  %v108 = vld [vmem:[%s2 + $0x1c8] sm:$0xff]
  %v109 = vld [vmem:[%s2 + $0x1d0] sm:$0xff]
  %v110 = vld [vmem:[%s2 + $0x1d8] sm:$0xff]
  %v111 = vld [vmem:[%s2 + $0x1e0] sm:$0xff]
  %v112 = vld [vmem:[%s2 + $0x1e8] sm:$0xff]
  %v113 = vld [vmem:[%s2 + $0x1f0] sm:$0xff]
  %v114 = vld [vmem:[%s2 + $0x1f8] sm:$0xff]
  %v115 = vld [vmem:[%s2 + $0x200] sm:$0xff]
  %v116 = vld [vmem:[%s2 + $0x208] sm:$0xff]
  %v117 = vld [vmem:[%s2 + $0x210] sm:$0xff]
  %v118 = vld [vmem:[%s2 + $0x218] sm:$0xff]
  %v119 = vld [vmem:[%s2 + $0x220] sm:$0xff]
  %v120 = vld [vmem:[%s2 + $0x228] sm:$0xff]
  %v121 = vld [vmem:[%s2 + $0x230] sm:$0xff]
  %v122 = vld [vmem:[%s2 + $0x238] sm:$0xff]
  %v123 = vld [vmem:[%s2 + $0x240] sm:$0xff]
  %v124 = vld [vmem:[%s2 + $0x248] sm:$0xff]
  %v125 = vld [vmem:[%s2 + $0x250] sm:$0xff]
  %v126 = vld [vmem:[%s2 + $0x258] sm:$0xff]
  %v127 = vld [vmem:[%s2 + $0x260] sm:$0xff]
  %v128 = vld [vmem:[%s2 + $0x268] sm:$0xff]
  %v129 = vld [vmem:[%s2 + $0x270] sm:$0xff]
  %v130 = vld [vmem:[%s2 + $0x278] sm:$0xff]
  %v131 = vld [vmem:[%s2 + $0x280] sm:$0xff]
  %v132 = vld [vmem:[%s2 + $0x288] sm:$0xff]
  %v133 = vld [vmem:[%s2 + $0x290] sm:$0xff]
  %v134 = vld [vmem:[%s2 + $0x298] sm:$0xff]
  %v135 = vld [vmem:[%s2 + $0x2a0] sm:$0xff]
  %v136 = vld [vmem:[%s2 + $0x2a8] sm:$0xff]
  %v137 = vld [vmem:[%s2 + $0x2b0] sm:$0xff]
  %v138 = vld [vmem:[%s2 + $0x2b8] sm:$0xff]
  %v139 = vld [vmem:[%s2 + $0x2c0] sm:$0xff]
  %v140 = vld [vmem:[%s2 + $0x2c8] sm:$0xff]
  %v141 = vld [vmem:[%s2 + $0x2d0] sm:$0xff]
  %v142 = vld [vmem:[%s2 + $0x2d8] sm:$0xff]
  %v143 = vld [vmem:[%s2 + $0x2e0] sm:$0xff]
  %v144 = vld [vmem:[%s2 + $0x2e8] sm:$0xff]
  %v145 = vld [vmem:[%s2 + $0x2f0] sm:$0xff]
  %v146 = vld [vmem:[%s2 + $0x2f8] sm:$0xff]
  %v147 = vld [vmem:[%s2 + $0x300] sm:$0xff]
  %v148 = vld [vmem:[%s2 + $0x308] sm:$0xff]
  %v149 = vld [vmem:[%s2 + $0x310] sm:$0xff]
  %v150 = vld [vmem:[%s2 + $0x318] sm:$0xff]
  %vm151 = vcmask 261120
  %v153 = vsel %vm151, %v29, 0
  %v156 = vsel %vm151, %v36, 0
  %v159 = vsel %vm151, %v43, 0
  %v162 = vsel %vm151, %v50, 0
  %164 = vmatprep.subr.mxu0 0.0
  %165 = vmatpush1.msra.mxu0 %v51
  %166 = vmatprep.subr.mxu0 0.0
  %167 = vmatpush1.msra.mxu0 %v52
  %168 = vmatprep.subr.mxu0 0.0
  %169 = vmatpush1.msra.mxu0 %v53
  %170 = vmatprep.subr.mxu0 0.0
  %171 = vmatpush1.msra.mxu0 %v54
  %172 = vmatprep.subr.mxu0 0.0
  %173 = vmatpush1.msra.mxu0 %v55
  %174 = vmatprep.subr.mxu0 0.0
  %175 = vmatpush1.msra.mxu0 %v56
  %176 = vmatprep.subr.mxu0 0.0
  %177 = vmatpush1.msra.mxu0 %v57
  %178 = vmatprep.subr.mxu0 0.0
  %179 = vmatpush1.msra.mxu0 %v58
  %180 = vmatprep.subr.mxu0 0.0
  %181 = vmatpush1.msra.mxu0 %v59
  %182 = vmatprep.subr.mxu0 0.0
  %183 = vmatpush1.msra.mxu0 %v60
  %184 = vmatprep.subr.mxu0 0.0
  %185 = vmatpush1.msra.mxu0 %v61
  %186 = vmatprep.subr.mxu0 0.0
  %187 = vmatpush1.msra.mxu0 %v62
  %188 = vmatprep.subr.mxu0 0.0
  %189 = vmatpush1.msra.mxu0 %v63
  %190 = vmatprep.subr.mxu0 0.0
  %191 = vmatpush1.msra.mxu0 %v64
  %192 = vmatprep.subr.mxu0 0.0
  %193 = vmatpush1.msra.mxu0 %v65
  %194 = vmatprep.subr.mxu0 0.0
  %195 = vmatpush1.msra.mxu0 %v66
  %196 = vmatprep.subr.mxu0 0.0
  %197 = vmatpush1.msra.mxu0 %v67
  %198 = vmatprep.subr.mxu0 0.0
  %199 = vmatpush1.msra.mxu0 %v68
  %200 = vmatprep.subr.mxu0 0.0
  %201 = vmatpush1.msra.mxu0 %v69
  %202 = vmatprep.subr.mxu0 0.0
  %203 = vmatpush1.msra.mxu0 %v70
  %204 = vmatprep.subr.mxu0 0.0
  %205 = vmatpush1.msra.mxu0 %v71
  %206 = vmatprep.subr.mxu0 0.0
  %207 = vmatpush1.msra.mxu0 %v72
  %208 = vmatprep.subr.mxu0 0.0
  %209 = vmatpush1.msra.mxu0 %v73
  %210 = vmatprep.subr.mxu0 0.0
  %211 = vmatpush1.msra.mxu0 %v74
  %212 = vmatprep.subr.mxu0 0.0
  %213 = vmatpush1.msra.mxu0 %v75
  %214 = vmatprep.subr.mxu0 0.0
  %215 = vmatpush1.msra.mxu0 %v76
  %216 = vmatprep.subr.mxu0 0.0
  %217 = vmatpush1.msra.mxu0 %v77
  %218 = vmatprep.subr.mxu0 0.0
  %219 = vmatpush1.msra.mxu0 %v78
  %220 = vmatprep.subr.mxu0 0.0
  %221 = vmatpush1.msra.mxu0 %v79
  %222 = vmatprep.subr.mxu0 0.0
  %223 = vmatpush1.msra.mxu0 %v80
  %224 = vmatprep.subr.mxu0 0.0
  %225 = vmatpush1.msra.mxu0 %v81
  %226 = vmatprep.subr.mxu0 0.0
  %227 = vmatpush1.msra.mxu0 %v82
  %228 = vmatprep.mubr.f32.mxu0 %v24
  %229 = vmatmul.mubr.f32.gmra.mrb[0].mxu0 %v23
  %v230 = vpop.f32.mrb[0].mxu0
  %v231 = vadd.f32 0.0, %v230
  %v232 = vpop.f32.mrb[0].mxu0
  %233 = vmatprep.mubr.f32.mxu0 %v31
  %234 = vmatmul.mubr.f32.gmra.mrb[0].mxu0 %v30
  %v235 = vpop.f32.mrb[0].mxu0
  %v236 = vadd.f32 0.0, %v235
  %v237 = vpop.f32.mrb[0].mxu0
  %238 = vmatprep.mubr.f32.mxu0 %v38
  %239 = vmatmul.mubr.f32.gmra.mrb[0].mxu0 %v37
  %v240 = vpop.f32.mrb[0].mxu0
  %v241 = vadd.f32 0.0, %v240
  %v242 = vpop.f32.mrb[0].mxu0
  %243 = vmatprep.mubr.f32.mxu0 %v45
  %244 = vmatmul.mubr.f32.gmra.mrb[0].mxu0 %v44
  %v245 = vpop.f32.mrb[0].mxu0
  %v246 = vadd.f32 0.0, %v245
  %v247 = vpop.f32.mrb[0].mxu0
  %248 = vdwg.mxu0
  %249 = vmatprep.subr.mxu0 0.0
  %250 = vmatpush1.msra.mxu0 %v83
  %251 = vmatprep.subr.mxu0 0.0
  %252 = vmatpush1.msra.mxu0 %v84
  %253 = vmatprep.subr.mxu0 0.0
  %254 = vmatpush1.msra.mxu0 %v85
  %255 = vmatprep.subr.mxu0 0.0
  %256 = vmatpush1.msra.mxu0 %v86
  %257 = vmatprep.subr.mxu0 0.0
  %258 = vmatpush1.msra.mxu0 %v87
  %259 = vmatprep.subr.mxu0 0.0
  %260 = vmatpush1.msra.mxu0 %v88
  %261 = vmatprep.subr.mxu0 0.0
  %262 = vmatpush1.msra.mxu0 %v89
  %263 = vmatprep.subr.mxu0 0.0
  %264 = vmatpush1.msra.mxu0 %v90
  %265 = vmatprep.subr.mxu0 0.0
  %266 = vmatpush1.msra.mxu0 %v91
  %267 = vmatprep.subr.mxu0 0.0
  %268 = vmatpush1.msra.mxu0 %v92
  %269 = vmatprep.subr.mxu0 0.0
  %270 = vmatpush1.msra.mxu0 %v93
  %271 = vmatprep.subr.mxu0 0.0
  %272 = vmatpush1.msra.mxu0 %v94
  %273 = vmatprep.subr.mxu0 0.0
  %274 = vmatpush1.msra.mxu0 %v95
  %275 = vmatprep.subr.mxu0 0.0
  %276 = vmatpush1.msra.mxu0 %v96
  %277 = vmatprep.subr.mxu0 0.0
  %278 = vmatpush1.msra.mxu0 %v97
  %279 = vmatprep.subr.mxu0 0.0
  %280 = vmatpush1.msra.mxu0 %v98
  %281 = vmatprep.subr.mxu0 0.0
  %282 = vmatpush1.msra.mxu0 %v99
  %283 = vmatprep.subr.mxu0 0.0
  %284 = vmatpush1.msra.mxu0 %v100
  %285 = vmatprep.subr.mxu0 0.0
  %286 = vmatpush1.msra.mxu0 %v101
  %287 = vmatprep.subr.mxu0 0.0
  %288 = vmatpush1.msra.mxu0 %v102
  %289 = vmatprep.subr.mxu0 0.0
  %290 = vmatpush1.msra.mxu0 %v103
  %291 = vmatprep.subr.mxu0 0.0
  %292 = vmatpush1.msra.mxu0 %v104
  %293 = vmatprep.subr.mxu0 0.0
  %294 = vmatpush1.msra.mxu0 %v105
  %295 = vmatprep.subr.mxu0 0.0
  %296 = vmatpush1.msra.mxu0 %v106
  %297 = vmatprep.subr.mxu0 0.0
  %298 = vmatpush1.msra.mxu0 %v107
  %299 = vmatprep.subr.mxu0 0.0
  %300 = vmatpush1.msra.mxu0 %v108
  %301 = vmatprep.subr.mxu0 0.0
  %302 = vmatpush1.msra.mxu0 %v109
  %303 = vmatprep.subr.mxu0 0.0
  %304 = vmatpush1.msra.mxu0 %v110
  %305 = vmatprep.subr.mxu0 0.0
  %306 = vmatpush1.msra.mxu0 %v111
  %307 = vmatprep.subr.mxu0 0.0
  %308 = vmatpush1.msra.mxu0 %v112
  %309 = vmatprep.subr.mxu0 0.0
  %310 = vmatpush1.msra.mxu0 %v113
  %311 = vmatprep.subr.mxu0 0.0
  %312 = vmatpush1.msra.mxu0 %v114
  %313 = vmatprep.mubr.f32.mxu0 %v26
  %314 = vmatmul.mubr.f32.gmra.mrb[0].mxu0 %v25
  %v315 = vpop.f32.mrb[0].mxu0
  %v316 = vadd.f32 %v231, %v315
  %v317 = vpop.f32.mrb[0].mxu0
  %318 = vmatprep.mubr.f32.mxu0 %v33
  %319 = vmatmul.mubr.f32.gmra.mrb[0].mxu0 %v32
  %v320 = vpop.f32.mrb[0].mxu0
  %v321 = vadd.f32 %v236, %v320
  %v322 = vpop.f32.mrb[0].mxu0
  %323 = vmatprep.mubr.f32.mxu0 %v40
  %324 = vmatmul.mubr.f32.gmra.mrb[0].mxu0 %v39
  %v325 = vpop.f32.mrb[0].mxu0
  %v326 = vadd.f32 %v241, %v325
  %v327 = vpop.f32.mrb[0].mxu0
  %328 = vmatprep.mubr.f32.mxu0 %v47
  %329 = vmatmul.mubr.f32.gmra.mrb[0].mxu0 %v46
  %v330 = vpop.f32.mrb[0].mxu0
  %v331 = vadd.f32 %v246, %v330
  %v332 = vpop.f32.mrb[0].mxu0
  %333 = vdwg.mxu0
  %334 = vmatprep.subr.mxu0 0.0
  %335 = vmatpush1.msra.mxu0 %v115
  %336 = vmatprep.subr.mxu0 0.0
  %337 = vmatpush1.msra.mxu0 %v116
  %338 = vmatprep.subr.mxu0 0.0
  %339 = vmatpush1.msra.mxu0 %v117
  %340 = vmatprep.subr.mxu0 0.0
  %341 = vmatpush1.msra.mxu0 %v118
  %342 = vmatprep.subr.mxu0 0.0
  %343 = vmatpush1.msra.mxu0 %v119
  %344 = vmatprep.subr.mxu0 0.0
  %345 = vmatpush1.msra.mxu0 %v120
  %346 = vmatprep.subr.mxu0 0.0
  %347 = vmatpush1.msra.mxu0 %v121
  %348 = vmatprep.subr.mxu0 0.0
  %349 = vmatpush1.msra.mxu0 %v122
  %350 = vmatprep.subr.mxu0 0.0
  %351 = vmatpush1.msra.mxu0 %v123
  %352 = vmatprep.subr.mxu0 0.0
  %353 = vmatpush1.msra.mxu0 %v124
  %354 = vmatprep.subr.mxu0 0.0
  %355 = vmatpush1.msra.mxu0 %v125
  %356 = vmatprep.subr.mxu0 0.0
  %357 = vmatpush1.msra.mxu0 %v126
  %358 = vmatprep.subr.mxu0 0.0
  %359 = vmatpush1.msra.mxu0 %v127
  %360 = vmatprep.subr.mxu0 0.0
  %361 = vmatpush1.msra.mxu0 %v128
  %362 = vmatprep.subr.mxu0 0.0
  %363 = vmatpush1.msra.mxu0 %v129
  %364 = vmatprep.subr.mxu0 0.0
  %365 = vmatpush1.msra.mxu0 %v130
  %366 = vmatprep.subr.mxu0 0.0
  %367 = vmatpush1.msra.mxu0 %v131
  %368 = vmatprep.subr.mxu0 0.0
  %369 = vmatpush1.msra.mxu0 %v132
  %370 = vmatprep.subr.mxu0 0.0
  %371 = vmatpush1.msra.mxu0 %v133
  %372 = vmatprep.subr.mxu0 0.0
  %373 = vmatpush1.msra.mxu0 %v134
  %374 = vmatprep.subr.mxu0 0.0
  %375 = vmatpush1.msra.mxu0 %v135
  %376 = vmatprep.subr.mxu0 0.0
  %377 = vmatpush1.msra.mxu0 %v136
  %378 = vmatprep.subr.mxu0 0.0
  %379 = vmatpush1.msra.mxu0 %v137
  %380 = vmatprep.subr.mxu0 0.0
  %381 = vmatpush1.msra.mxu0 %v138
  %382 = vmatprep.subr.mxu0 0.0
  %383 = vmatpush1.msra.mxu0 %v139
  %384 = vmatprep.subr.mxu0 0.0
  %385 = vmatpush1.msra.mxu0 %v140
  %386 = vmatprep.subr.mxu0 0.0
  %387 = vmatpush1.msra.mxu0 %v141
  %388 = vmatprep.subr.mxu0 0.0
  %389 = vmatpush1.msra.mxu0 %v142
  %390 = vmatprep.subr.mxu0 0.0
  %391 = vmatpush1.msra.mxu0 %v143
  %392 = vmatprep.subr.mxu0 0.0
  %393 = vmatpush1.msra.mxu0 %v144
  %394 = vmatprep.subr.mxu0 0.0
  %395 = vmatpush1.msra.mxu0 %v145
  %396 = vmatprep.subr.mxu0 0.0
  %397 = vmatpush1.msra.mxu0 %v146
  %398 = vmatprep.mubr.f32.mxu0 %v28
  %399 = vmatmul.mubr.f32.gmra.mrb[0].mxu0 %v27
  %v400 = vpop.f32.mrb[0].mxu0
  %v401 = vadd.f32 %v316, %v400
  %v402 = vpop.f32.mrb[0].mxu0
  %403 = vmatprep.mubr.f32.mxu0 %v35
  %404 = vmatmul.mubr.f32.gmra.mrb[0].mxu0 %v34
  %v405 = vpop.f32.mrb[0].mxu0
  %v406 = vadd.f32 %v321, %v405
  %v407 = vpop.f32.mrb[0].mxu0
  %408 = vmatprep.mubr.f32.mxu0 %v42
  %409 = vmatmul.mubr.f32.gmra.mrb[0].mxu0 %v41
  %v410 = vpop.f32.mrb[0].mxu0
  %v411 = vadd.f32 %v326, %v410
  %v412 = vpop.f32.mrb[0].mxu0
  %413 = vmatprep.mubr.f32.mxu0 %v49
  %414 = vmatmul.mubr.f32.gmra.mrb[0].mxu0 %v48
  %v415 = vpop.f32.mrb[0].mxu0
  %v416 = vadd.f32 %v331, %v415
  %v417 = vpop.f32.mrb[0].mxu0
  %418 = vdwg.mxu0
  %419 = vmatprep.subr.mxu0 0.0
  %420 = vmatpush1.msra.mxu0 %v147
  %421 = vmatprep.subr.mxu0 0.0
  %422 = vmatpush1.msra.mxu0 %v148
  %423 = vmatprep.subr.mxu0 0.0
  %424 = vmatpush1.msra.mxu0 %v149
  %425 = vmatprep.subr.mxu0 0.0
  %426 = vmatpush1.msra.mxu0 %v150
  %427 = vmatprep.subr.mxu0 0.0
  %428 = vmatpush1.msra.mxu0 0.0
  %429 = vmatprep.subr.mxu0 0.0
  %430 = vmatpush1.msra.mxu0 0.0
  %431 = vmatprep.subr.mxu0 0.0
  %432 = vmatpush1.msra.mxu0 0.0
  %433 = vmatprep.subr.mxu0 0.0
  %434 = vmatpush1.msra.mxu0 0.0
  %435 = vmatprep.subr.mxu0 0.0
  %436 = vmatpush1.msra.mxu0 0.0
  %437 = vmatprep.subr.mxu0 0.0
  %438 = vmatpush1.msra.mxu0 0.0
  %439 = vmatprep.subr.mxu0 0.0
  %440 = vmatpush1.msra.mxu0 0.0
  %441 = vmatprep.subr.mxu0 0.0
  %442 = vmatpush1.msra.mxu0 0.0
  %443 = vmatprep.subr.mxu0 0.0
  %444 = vmatpush1.msra.mxu0 0.0
  %445 = vmatprep.subr.mxu0 0.0
  %446 = vmatpush1.msra.mxu0 0.0
  %447 = vmatprep.subr.mxu0 0.0
  %448 = vmatpush1.msra.mxu0 0.0
  %449 = vmatprep.subr.mxu0 0.0
  %450 = vmatpush1.msra.mxu0 0.0
  %451 = vmatprep.subr.mxu0 0.0
  %452 = vmatpush1.msra.mxu0 0.0
  %453 = vmatprep.subr.mxu0 0.0
  %454 = vmatpush1.msra.mxu0 0.0
  %455 = vmatprep.subr.mxu0 0.0
  %456 = vmatpush1.msra.mxu0 0.0
  %457 = vmatprep.subr.mxu0 0.0
  %458 = vmatpush1.msra.mxu0 0.0
  %459 = vmatprep.subr.mxu0 0.0
  %460 = vmatpush1.msra.mxu0 0.0
  %461 = vmatprep.subr.mxu0 0.0
  %462 = vmatpush1.msra.mxu0 0.0
  %463 = vmatprep.subr.mxu0 0.0
  %464 = vmatpush1.msra.mxu0 0.0
  %465 = vmatprep.subr.mxu0 0.0
  %466 = vmatpush1.msra.mxu0 0.0
  %467 = vmatprep.subr.mxu0 0.0
  %468 = vmatpush1.msra.mxu0 0.0
  %469 = vmatprep.subr.mxu0 0.0
  %470 = vmatpush1.msra.mxu0 0.0
  %471 = vmatprep.subr.mxu0 0.0
  %472 = vmatpush1.msra.mxu0 0.0
  %473 = vmatprep.subr.mxu0 0.0
  %474 = vmatpush1.msra.mxu0 0.0
  %475 = vmatprep.subr.mxu0 0.0
  %476 = vmatpush1.msra.mxu0 0.0
  %477 = vmatprep.subr.mxu0 0.0
  %478 = vmatpush1.msra.mxu0 0.0
  %479 = vmatprep.subr.mxu0 0.0
  %480 = vmatpush1.msra.mxu0 0.0
  %481 = vmatprep.subr.mxu0 0.0
  %482 = vmatpush1.msra.mxu0 0.0
  %483 = vmatprep.mubr.f32.mxu0 0.0
  %484 = vmatmul.mubr.f32.gmra.mrb[0].mxu0 %v153
  %v485 = vpop.f32.mrb[0].mxu0
  %v486 = vadd.f32 %v401, %v485
  %v487 = vpop.f32.mrb[0].mxu0
  %488 = vmatprep.mubr.f32.mxu0 0.0
  %489 = vmatmul.mubr.f32.gmra.mrb[0].mxu0 %v156
  %v490 = vpop.f32.mrb[0].mxu0
  %v491 = vadd.f32 %v406, %v490
  %v492 = vpop.f32.mrb[0].mxu0
  %493 = vmatprep.mubr.f32.mxu0 0.0
  %494 = vmatmul.mubr.f32.gmra.mrb[0].mxu0 %v159
  %v495 = vpop.f32.mrb[0].mxu0
  %v496 = vadd.f32 %v411, %v495
  %v497 = vpop.f32.mrb[0].mxu0
  %498 = vmatprep.mubr.f32.mxu0 0.0
  %499 = vmatmul.mubr.f32.gmra.mrb[0].mxu0 %v162
  %v500 = vpop.f32.mrb[0].mxu0
  %v501 = vadd.f32 %v416, %v500
  %v502 = vpop.f32.mrb[0].mxu0
  %503 = vdwg.mxu0
  %v504 = vld [vmem:[%s3] sm:$0xff]
  %v505 = vld [vmem:[%s3 + $0x8] sm:$0xff]
  %v506 = vld [vmem:[%s3 + $0x10] sm:$0xff]
  %v507 = vld [vmem:[%s3 + $0x18] sm:$0xff]
  %v508 = vld [vmem:[%s3 + $0x20] sm:$0xff]
  %v509 = vld [vmem:[%s3 + $0x28] sm:$0xff]
  %v510 = vld [vmem:[%s3 + $0x30] sm:$0xff]
  %v511 = vld [vmem:[%s3 + $0x38] sm:$0xff]
  %v512 = vld [vmem:[%s3 + $0x40] sm:$0xff]
  %v513 = vld [vmem:[%s3 + $0x48] sm:$0xff]
  %v514 = vld [vmem:[%s3 + $0x50] sm:$0xff]
  %v515 = vld [vmem:[%s3 + $0x58] sm:$0xff]
  %v516 = vld [vmem:[%s3 + $0x60] sm:$0xff]
  %v517 = vld [vmem:[%s3 + $0x68] sm:$0xff]
  %v518 = vld [vmem:[%s3 + $0x70] sm:$0xff]
  %v519 = vld [vmem:[%s3 + $0x78] sm:$0xff]
  %v520 = vld [vmem:[%s3 + $0x80] sm:$0xff]
  %v521 = vld [vmem:[%s3 + $0x88] sm:$0xff]
  %v522 = vld [vmem:[%s3 + $0x90] sm:$0xff]
  %v523 = vld [vmem:[%s3 + $0x98] sm:$0xff]
  %v524 = vld [vmem:[%s3 + $0xa0] sm:$0xff]
  %v525 = vld [vmem:[%s3 + $0xa8] sm:$0xff]
  %v526 = vld [vmem:[%s3 + $0xb0] sm:$0xff]
  %v527 = vld [vmem:[%s3 + $0xb8] sm:$0xff]
  %v528 = vld [vmem:[%s3 + $0xc0] sm:$0xff]
  %v529 = vld [vmem:[%s3 + $0xc8] sm:$0xff]
  %v530 = vld [vmem:[%s3 + $0xd0] sm:$0xff]
  %v531 = vld [vmem:[%s3 + $0xd8] sm:$0xff]
  %v532 = vld [vmem:[%s3 + $0xe0] sm:$0xff]
  %v533 = vld [vmem:[%s3 + $0xe8] sm:$0xff]
  %v534 = vld [vmem:[%s3 + $0xf0] sm:$0xff]
  %v535 = vld [vmem:[%s3 + $0xf8] sm:$0xff]
  %v536 = vld [vmem:[%s3 + $0x100] sm:$0xff]
  %v537 = vld [vmem:[%s3 + $0x108] sm:$0xff]
  %v538 = vld [vmem:[%s3 + $0x110] sm:$0xff]
  %v539 = vld [vmem:[%s3 + $0x118] sm:$0xff]
  %v540 = vld [vmem:[%s3 + $0x120] sm:$0xff]
  %v541 = vld [vmem:[%s3 + $0x128] sm:$0xff]
  %v542 = vld [vmem:[%s3 + $0x130] sm:$0xff]
  %v543 = vld [vmem:[%s3 + $0x138] sm:$0xff]
  %v544 = vld [vmem:[%s3 + $0x140] sm:$0xff]
  %v545 = vld [vmem:[%s3 + $0x148] sm:$0xff]
  %v546 = vld [vmem:[%s3 + $0x150] sm:$0xff]
  %v547 = vld [vmem:[%s3 + $0x158] sm:$0xff]
  %v548 = vld [vmem:[%s3 + $0x160] sm:$0xff]
  %v549 = vld [vmem:[%s3 + $0x168] sm:$0xff]
  %v550 = vld [vmem:[%s3 + $0x170] sm:$0xff]
  %v551 = vld [vmem:[%s3 + $0x178] sm:$0xff]
  %v552 = vld [vmem:[%s3 + $0x180] sm:$0xff]
  %v553 = vld [vmem:[%s3 + $0x188] sm:$0xff]
  %v554 = vld [vmem:[%s3 + $0x190] sm:$0xff]
  %v555 = vld [vmem:[%s3 + $0x198] sm:$0xff]
  %v556 = vld [vmem:[%s3 + $0x1a0] sm:$0xff]
  %v557 = vld [vmem:[%s3 + $0x1a8] sm:$0xff]
  %v558 = vld [vmem:[%s3 + $0x1b0] sm:$0xff]
  %v559 = vld [vmem:[%s3 + $0x1b8] sm:$0xff]
  %v560 = vld [vmem:[%s3 + $0x1c0] sm:$0xff]
  %v561 = vld [vmem:[%s3 + $0x1c8] sm:$0xff]
  %v562 = vld [vmem:[%s3 + $0x1d0] sm:$0xff]
  %v563 = vld [vmem:[%s3 + $0x1d8] sm:$0xff]
  %v564 = vld [vmem:[%s3 + $0x1e0] sm:$0xff]
  %v565 = vld [vmem:[%s3 + $0x1e8] sm:$0xff]
  %v566 = vld [vmem:[%s3 + $0x1f0] sm:$0xff]
  %v567 = vld [vmem:[%s3 + $0x1f8] sm:$0xff]
  %v568 = vld [vmem:[%s3 + $0x200] sm:$0xff]
  %v569 = vld [vmem:[%s3 + $0x208] sm:$0xff]
  %v570 = vld [vmem:[%s3 + $0x210] sm:$0xff]
  %v571 = vld [vmem:[%s3 + $0x218] sm:$0xff]
  %v572 = vld [vmem:[%s3 + $0x220] sm:$0xff]
  %v573 = vld [vmem:[%s3 + $0x228] sm:$0xff]
  %v574 = vld [vmem:[%s3 + $0x230] sm:$0xff]
  %v575 = vld [vmem:[%s3 + $0x238] sm:$0xff]
  %v576 = vld [vmem:[%s3 + $0x240] sm:$0xff]
  %v577 = vld [vmem:[%s3 + $0x248] sm:$0xff]
  %v578 = vld [vmem:[%s3 + $0x250] sm:$0xff]
  %v579 = vld [vmem:[%s3 + $0x258] sm:$0xff]
  %v580 = vld [vmem:[%s3 + $0x260] sm:$0xff]
  %v581 = vld [vmem:[%s3 + $0x268] sm:$0xff]
  %v582 = vld [vmem:[%s3 + $0x270] sm:$0xff]
  %v583 = vld [vmem:[%s3 + $0x278] sm:$0xff]
  %v584 = vld [vmem:[%s3 + $0x280] sm:$0xff]
  %v585 = vld [vmem:[%s3 + $0x288] sm:$0xff]
  %v586 = vld [vmem:[%s3 + $0x290] sm:$0xff]
  %v587 = vld [vmem:[%s3 + $0x298] sm:$0xff]
  %v588 = vld [vmem:[%s3 + $0x2a0] sm:$0xff]
  %v589 = vld [vmem:[%s3 + $0x2a8] sm:$0xff]
  %v590 = vld [vmem:[%s3 + $0x2b0] sm:$0xff]
  %v591 = vld [vmem:[%s3 + $0x2b8] sm:$0xff]
  %v592 = vld [vmem:[%s3 + $0x2c0] sm:$0xff]
  %v593 = vld [vmem:[%s3 + $0x2c8] sm:$0xff]
  %v594 = vld [vmem:[%s3 + $0x2d0] sm:$0xff]
  %v595 = vld [vmem:[%s3 + $0x2d8] sm:$0xff]
  %v596 = vld [vmem:[%s3 + $0x2e0] sm:$0xff]
  %v597 = vld [vmem:[%s3 + $0x2e8] sm:$0xff]
  %v598 = vld [vmem:[%s3 + $0x2f0] sm:$0xff]
  %v599 = vld [vmem:[%s3 + $0x2f8] sm:$0xff]
  %v600 = vld [vmem:[%s3 + $0x300] sm:$0xff]
  %v601 = vld [vmem:[%s3 + $0x308] sm:$0xff]
  %v602 = vld [vmem:[%s3 + $0x310] sm:$0xff]
  %v603 = vld [vmem:[%s3 + $0x318] sm:$0xff]
  %604 = vmatprep.subr.mxu0 0.0
  %605 = vmatpush1.msra.mxu0 %v504
  %606 = vmatprep.subr.mxu0 0.0
  %607 = vmatpush1.msra.mxu0 %v505
  %608 = vmatprep.subr.mxu0 0.0
  %609 = vmatpush1.msra.mxu0 %v506
  %610 = vmatprep.subr.mxu0 0.0
  %611 = vmatpush1.msra.mxu0 %v507
  %612 = vmatprep.subr.mxu0 0.0
  %613 = vmatpush1.msra.mxu0 %v508
  %614 = vmatprep.subr.mxu0 0.0
  %615 = vmatpush1.msra.mxu0 %v509
  %616 = vmatprep.subr.mxu0 0.0
  %617 = vmatpush1.msra.mxu0 %v510
  %618 = vmatprep.subr.mxu0 0.0
  %619 = vmatpush1.msra.mxu0 %v511
  %620 = vmatprep.subr.mxu0 0.0
  %621 = vmatpush1.msra.mxu0 %v512
  %622 = vmatprep.subr.mxu0 0.0
  %623 = vmatpush1.msra.mxu0 %v513
  %624 = vmatprep.subr.mxu0 0.0
  %625 = vmatpush1.msra.mxu0 %v514
  %626 = vmatprep.subr.mxu0 0.0
  %627 = vmatpush1.msra.mxu0 %v515
  %628 = vmatprep.subr.mxu0 0.0
  %629 = vmatpush1.msra.mxu0 %v516
  %630 = vmatprep.subr.mxu0 0.0
  %631 = vmatpush1.msra.mxu0 %v517
  %632 = vmatprep.subr.mxu0 0.0
  %633 = vmatpush1.msra.mxu0 %v518
  %634 = vmatprep.subr.mxu0 0.0
  %635 = vmatpush1.msra.mxu0 %v519
  %636 = vmatprep.subr.mxu0 0.0
  %637 = vmatpush1.msra.mxu0 %v520
  %638 = vmatprep.subr.mxu0 0.0
  %639 = vmatpush1.msra.mxu0 %v521
  %640 = vmatprep.subr.mxu0 0.0
  %641 = vmatpush1.msra.mxu0 %v522
  %642 = vmatprep.subr.mxu0 0.0
  %643 = vmatpush1.msra.mxu0 %v523
  %644 = vmatprep.subr.mxu0 0.0
  %645 = vmatpush1.msra.mxu0 %v524
  %646 = vmatprep.subr.mxu0 0.0
  %647 = vmatpush1.msra.mxu0 %v525
  %648 = vmatprep.subr.mxu0 0.0
  %649 = vmatpush1.msra.mxu0 %v526
  %650 = vmatprep.subr.mxu0 0.0
  %651 = vmatpush1.msra.mxu0 %v527
  %652 = vmatprep.subr.mxu0 0.0
  %653 = vmatpush1.msra.mxu0 %v528
  %654 = vmatprep.subr.mxu0 0.0
  %655 = vmatpush1.msra.mxu0 %v529
  %656 = vmatprep.subr.mxu0 0.0
  %657 = vmatpush1.msra.mxu0 %v530
  %658 = vmatprep.subr.mxu0 0.0
  %659 = vmatpush1.msra.mxu0 %v531
  %660 = vmatprep.subr.mxu0 0.0
  %661 = vmatpush1.msra.mxu0 %v532
  %662 = vmatprep.subr.mxu0 0.0
  %663 = vmatpush1.msra.mxu0 %v533
  %664 = vmatprep.subr.mxu0 0.0
  %665 = vmatpush1.msra.mxu0 %v534
  %666 = vmatprep.subr.mxu0 0.0
  %667 = vmatpush1.msra.mxu0 %v535
  %668 = vmatprep.mubr.f32.mxu0 %v24
  %669 = vmatmul.mubr.f32.gmra.mrb[0].mxu0 %v23
  %v670 = vpop.f32.mrb[0].mxu0
  %v671 = vadd.f32 0.0, %v670
  %v672 = vpop.f32.mrb[0].mxu0
  %673 = vmatprep.mubr.f32.mxu0 %v31
  %674 = vmatmul.mubr.f32.gmra.mrb[0].mxu0 %v30
  %v675 = vpop.f32.mrb[0].mxu0
  %v676 = vadd.f32 0.0, %v675
  %v677 = vpop.f32.mrb[0].mxu0
  %678 = vmatprep.mubr.f32.mxu0 %v38
  %679 = vmatmul.mubr.f32.gmra.mrb[0].mxu0 %v37
  %v680 = vpop.f32.mrb[0].mxu0
  %v681 = vadd.f32 0.0, %v680
  %v682 = vpop.f32.mrb[0].mxu0
  %683 = vmatprep.mubr.f32.mxu0 %v45
  %684 = vmatmul.mubr.f32.gmra.mrb[0].mxu0 %v44
  %v685 = vpop.f32.mrb[0].mxu0
  %v686 = vadd.f32 0.0, %v685
  %v687 = vpop.f32.mrb[0].mxu0
  %688 = vdwg.mxu0
  %689 = vmatprep.subr.mxu0 0.0
  %690 = vmatpush1.msra.mxu0 %v536
  %691 = vmatprep.subr.mxu0 0.0
  %692 = vmatpush1.msra.mxu0 %v537
  %693 = vmatprep.subr.mxu0 0.0
  %694 = vmatpush1.msra.mxu0 %v538
  %695 = vmatprep.subr.mxu0 0.0
  %696 = vmatpush1.msra.mxu0 %v539
  %697 = vmatprep.subr.mxu0 0.0
  %698 = vmatpush1.msra.mxu0 %v540
  %699 = vmatprep.subr.mxu0 0.0
  %700 = vmatpush1.msra.mxu0 %v541
  %701 = vmatprep.subr.mxu0 0.0
  %702 = vmatpush1.msra.mxu0 %v542
  %703 = vmatprep.subr.mxu0 0.0
  %704 = vmatpush1.msra.mxu0 %v543
  %705 = vmatprep.subr.mxu0 0.0
  %706 = vmatpush1.msra.mxu0 %v544
  %707 = vmatprep.subr.mxu0 0.0
  %708 = vmatpush1.msra.mxu0 %v545
  %709 = vmatprep.subr.mxu0 0.0
  %710 = vmatpush1.msra.mxu0 %v546
  %711 = vmatprep.subr.mxu0 0.0
  %712 = vmatpush1.msra.mxu0 %v547
  %713 = vmatprep.subr.mxu0 0.0
  %714 = vmatpush1.msra.mxu0 %v548
  %715 = vmatprep.subr.mxu0 0.0
  %716 = vmatpush1.msra.mxu0 %v549
  %717 = vmatprep.subr.mxu0 0.0
  %718 = vmatpush1.msra.mxu0 %v550
  %719 = vmatprep.subr.mxu0 0.0
  %720 = vmatpush1.msra.mxu0 %v551
  %721 = vmatprep.subr.mxu0 0.0
  %722 = vmatpush1.msra.mxu0 %v552
  %723 = vmatprep.subr.mxu0 0.0
  %724 = vmatpush1.msra.mxu0 %v553
  %725 = vmatprep.subr.mxu0 0.0
  %726 = vmatpush1.msra.mxu0 %v554
  %727 = vmatprep.subr.mxu0 0.0
  %728 = vmatpush1.msra.mxu0 %v555
  %729 = vmatprep.subr.mxu0 0.0
  %730 = vmatpush1.msra.mxu0 %v556
  %731 = vmatprep.subr.mxu0 0.0
  %732 = vmatpush1.msra.mxu0 %v557
  %733 = vmatprep.subr.mxu0 0.0
  %734 = vmatpush1.msra.mxu0 %v558
  %735 = vmatprep.subr.mxu0 0.0
  %736 = vmatpush1.msra.mxu0 %v559
  %737 = vmatprep.subr.mxu0 0.0
  %738 = vmatpush1.msra.mxu0 %v560
  %739 = vmatprep.subr.mxu0 0.0
  %740 = vmatpush1.msra.mxu0 %v561
  %741 = vmatprep.subr.mxu0 0.0
  %742 = vmatpush1.msra.mxu0 %v562
  %743 = vmatprep.subr.mxu0 0.0
  %744 = vmatpush1.msra.mxu0 %v563
  %745 = vmatprep.subr.mxu0 0.0
  %746 = vmatpush1.msra.mxu0 %v564
  %747 = vmatprep.subr.mxu0 0.0
  %748 = vmatpush1.msra.mxu0 %v565
  %749 = vmatprep.subr.mxu0 0.0
  %750 = vmatpush1.msra.mxu0 %v566
  %751 = vmatprep.subr.mxu0 0.0
  %752 = vmatpush1.msra.mxu0 %v567
  %753 = vmatprep.mubr.f32.mxu0 %v26
  %754 = vmatmul.mubr.f32.gmra.mrb[0].mxu0 %v25
  %v755 = vpop.f32.mrb[0].mxu0
  %v756 = vadd.f32 %v671, %v755
  %v757 = vpop.f32.mrb[0].mxu0
  %758 = vmatprep.mubr.f32.mxu0 %v33
  %759 = vmatmul.mubr.f32.gmra.mrb[0].mxu0 %v32
  %v760 = vpop.f32.mrb[0].mxu0
  %v761 = vadd.f32 %v676, %v760
  %v762 = vpop.f32.mrb[0].mxu0
  %763 = vmatprep.mubr.f32.mxu0 %v40
  %764 = vmatmul.mubr.f32.gmra.mrb[0].mxu0 %v39
  %v765 = vpop.f32.mrb[0].mxu0
  %v766 = vadd.f32 %v681, %v765
  %v767 = vpop.f32.mrb[0].mxu0
  %768 = vmatprep.mubr.f32.mxu0 %v47
  %769 = vmatmul.mubr.f32.gmra.mrb[0].mxu0 %v46
  %v770 = vpop.f32.mrb[0].mxu0
  %v771 = vadd.f32 %v686, %v770
  %v772 = vpop.f32.mrb[0].mxu0
  %773 = vdwg.mxu0
  %774 = vmatprep.subr.mxu0 0.0
  %775 = vmatpush1.msra.mxu0 %v568
  %776 = vmatprep.subr.mxu0 0.0
  %777 = vmatpush1.msra.mxu0 %v569
  %778 = vmatprep.subr.mxu0 0.0
  %779 = vmatpush1.msra.mxu0 %v570
  %780 = vmatprep.subr.mxu0 0.0
  %781 = vmatpush1.msra.mxu0 %v571
  %782 = vmatprep.subr.mxu0 0.0
  %783 = vmatpush1.msra.mxu0 %v572
  %784 = vmatprep.subr.mxu0 0.0
  %785 = vmatpush1.msra.mxu0 %v573
  %786 = vmatprep.subr.mxu0 0.0
  %787 = vmatpush1.msra.mxu0 %v574
  %788 = vmatprep.subr.mxu0 0.0
  %789 = vmatpush1.msra.mxu0 %v575
  %790 = vmatprep.subr.mxu0 0.0
  %791 = vmatpush1.msra.mxu0 %v576
  %792 = vmatprep.subr.mxu0 0.0
  %793 = vmatpush1.msra.mxu0 %v577
  %794 = vmatprep.subr.mxu0 0.0
  %795 = vmatpush1.msra.mxu0 %v578
  %796 = vmatprep.subr.mxu0 0.0
  %797 = vmatpush1.msra.mxu0 %v579
  %798 = vmatprep.subr.mxu0 0.0
  %799 = vmatpush1.msra.mxu0 %v580
  %800 = vmatprep.subr.mxu0 0.0
  %801 = vmatpush1.msra.mxu0 %v581
  %802 = vmatprep.subr.mxu0 0.0
  %803 = vmatpush1.msra.mxu0 %v582
  %804 = vmatprep.subr.mxu0 0.0
  %805 = vmatpush1.msra.mxu0 %v583
  %806 = vmatprep.subr.mxu0 0.0
  %807 = vmatpush1.msra.mxu0 %v584
  %808 = vmatprep.subr.mxu0 0.0
  %809 = vmatpush1.msra.mxu0 %v585
  %810 = vmatprep.subr.mxu0 0.0
  %811 = vmatpush1.msra.mxu0 %v586
  %812 = vmatprep.subr.mxu0 0.0
  %813 = vmatpush1.msra.mxu0 %v587
  %814 = vmatprep.subr.mxu0 0.0
  %815 = vmatpush1.msra.mxu0 %v588
  %816 = vmatprep.subr.mxu0 0.0
  %817 = vmatpush1.msra.mxu0 %v589
  %818 = vmatprep.subr.mxu0 0.0
  %819 = vmatpush1.msra.mxu0 %v590
  %820 = vmatprep.subr.mxu0 0.0
  %821 = vmatpush1.msra.mxu0 %v591
  %822 = vmatprep.subr.mxu0 0.0
  %823 = vmatpush1.msra.mxu0 %v592
  %824 = vmatprep.subr.mxu0 0.0
  %825 = vmatpush1.msra.mxu0 %v593
  %826 = vmatprep.subr.mxu0 0.0
  %827 = vmatpush1.msra.mxu0 %v594
  %828 = vmatprep.subr.mxu0 0.0
  %829 = vmatpush1.msra.mxu0 %v595
  %830 = vmatprep.subr.mxu0 0.0
  %831 = vmatpush1.msra.mxu0 %v596
  %832 = vmatprep.subr.mxu0 0.0
  %833 = vmatpush1.msra.mxu0 %v597
  %834 = vmatprep.subr.mxu0 0.0
  %835 = vmatpush1.msra.mxu0 %v598
  %836 = vmatprep.subr.mxu0 0.0
  %837 = vmatpush1.msra.mxu0 %v599
  %838 = vmatprep.mubr.f32.mxu0 %v28
  %839 = vmatmul.mubr.f32.gmra.mrb[0].mxu0 %v27
  %v840 = vpop.f32.mrb[0].mxu0
  %v841 = vadd.f32 %v756, %v840
  %v842 = vpop.f32.mrb[0].mxu0
  %843 = vmatprep.mubr.f32.mxu0 %v35
  %844 = vmatmul.mubr.f32.gmra.mrb[0].mxu0 %v34
  %v845 = vpop.f32.mrb[0].mxu0
  %v846 = vadd.f32 %v761, %v845
  %v847 = vpop.f32.mrb[0].mxu0
  %848 = vmatprep.mubr.f32.mxu0 %v42
  %849 = vmatmul.mubr.f32.gmra.mrb[0].mxu0 %v41
  %v850 = vpop.f32.mrb[0].mxu0
  %v851 = vadd.f32 %v766, %v850
  %v852 = vpop.f32.mrb[0].mxu0
  %853 = vmatprep.mubr.f32.mxu0 %v49
  %854 = vmatmul.mubr.f32.gmra.mrb[0].mxu0 %v48
  %v855 = vpop.f32.mrb[0].mxu0
  %v856 = vadd.f32 %v771, %v855
  %v857 = vpop.f32.mrb[0].mxu0
  %858 = vdwg.mxu0
  %859 = vmatprep.subr.mxu0 0.0
  %860 = vmatpush1.msra.mxu0 %v600
  %861 = vmatprep.subr.mxu0 0.0
  %862 = vmatpush1.msra.mxu0 %v601
  %863 = vmatprep.subr.mxu0 0.0
  %864 = vmatpush1.msra.mxu0 %v602
  %865 = vmatprep.subr.mxu0 0.0
  %866 = vmatpush1.msra.mxu0 %v603
  %867 = vmatprep.subr.mxu0 0.0
  %868 = vmatpush1.msra.mxu0 0.0
  %869 = vmatprep.subr.mxu0 0.0
  %870 = vmatpush1.msra.mxu0 0.0
  %871 = vmatprep.subr.mxu0 0.0
  %872 = vmatpush1.msra.mxu0 0.0
  %873 = vmatprep.subr.mxu0 0.0
  %874 = vmatpush1.msra.mxu0 0.0
  %875 = vmatprep.subr.mxu0 0.0
  %876 = vmatpush1.msra.mxu0 0.0
  %877 = vmatprep.subr.mxu0 0.0
  %878 = vmatpush1.msra.mxu0 0.0
  %879 = vmatprep.subr.mxu0 0.0
  %880 = vmatpush1.msra.mxu0 0.0
  %881 = vmatprep.subr.mxu0 0.0
  %882 = vmatpush1.msra.mxu0 0.0
  %883 = vmatprep.subr.mxu0 0.0
  %884 = vmatpush1.msra.mxu0 0.0
  %885 = vmatprep.subr.mxu0 0.0
  %886 = vmatpush1.msra.mxu0 0.0
  %887 = vmatprep.subr.mxu0 0.0
  %888 = vmatpush1.msra.mxu0 0.0
  %889 = vmatprep.subr.mxu0 0.0
  %890 = vmatpush1.msra.mxu0 0.0
  %891 = vmatprep.subr.mxu0 0.0
  %892 = vmatpush1.msra.mxu0 0.0
  %893 = vmatprep.subr.mxu0 0.0
  %894 = vmatpush1.msra.mxu0 0.0
  %895 = vmatprep.subr.mxu0 0.0
  %896 = vmatpush1.msra.mxu0 0.0
  %897 = vmatprep.subr.mxu0 0.0
  %898 = vmatpush1.msra.mxu0 0.0
  %899 = vmatprep.subr.mxu0 0.0
  %900 = vmatpush1.msra.mxu0 0.0
  %901 = vmatprep.subr.mxu0 0.0
  %902 = vmatpush1.msra.mxu0 0.0
  %903 = vmatprep.subr.mxu0 0.0
  %904 = vmatpush1.msra.mxu0 0.0
  %905 = vmatprep.subr.mxu0 0.0
  %906 = vmatpush1.msra.mxu0 0.0
  %907 = vmatprep.subr.mxu0 0.0
  %908 = vmatpush1.msra.mxu0 0.0
  %909 = vmatprep.subr.mxu0 0.0
  %910 = vmatpush1.msra.mxu0 0.0
  %911 = vmatprep.subr.mxu0 0.0
  %912 = vmatpush1.msra.mxu0 0.0
  %913 = vmatprep.subr.mxu0 0.0
  %914 = vmatpush1.msra.mxu0 0.0
  %915 = vmatprep.subr.mxu0 0.0
  %916 = vmatpush1.msra.mxu0 0.0
  %917 = vmatprep.subr.mxu0 0.0
  %918 = vmatpush1.msra.mxu0 0.0
  %919 = vmatprep.subr.mxu0 0.0
  %920 = vmatpush1.msra.mxu0 0.0
  %921 = vmatprep.subr.mxu0 0.0
  %922 = vmatpush1.msra.mxu0 0.0
  %923 = vmatprep.mubr.f32.mxu0 0.0
  %924 = vmatmul.mubr.f32.gmra.mrb[0].mxu0 %v153
  %v925 = vpop.f32.mrb[0].mxu0
  %v926 = vadd.f32 %v841, %v925
  %v927 = vpop.f32.mrb[0].mxu0
  %928 = vmatprep.mubr.f32.mxu0 0.0
  %929 = vmatmul.mubr.f32.gmra.mrb[0].mxu0 %v156
  %v930 = vpop.f32.mrb[0].mxu0
  %v931 = vadd.f32 %v846, %v930
  %v932 = vpop.f32.mrb[0].mxu0
  %933 = vmatprep.mubr.f32.mxu0 0.0
  %934 = vmatmul.mubr.f32.gmra.mrb[0].mxu0 %v159
  %v935 = vpop.f32.mrb[0].mxu0
  %v936 = vadd.f32 %v851, %v935
  %v937 = vpop.f32.mrb[0].mxu0
  %938 = vmatprep.mubr.f32.mxu0 0.0
  %939 = vmatmul.mubr.f32.gmra.mrb[0].mxu0 %v162
  %v940 = vpop.f32.mrb[0].mxu0
  %v941 = vadd.f32 %v856, %v940
  %v942 = vpop.f32.mrb[0].mxu0
  %943 = vdwg.mxu0
  %v944 = vld [vmem:[%s4] sm:$0xff]
  %v945 = vld [vmem:[%s4 + $0x8] sm:$0xff]
  %v946 = vld [vmem:[%s4 + $0x10] sm:$0xff]
  %v947 = vld [vmem:[%s4 + $0x18] sm:$0xff]
  %v948 = vld [vmem:[%s4 + $0x20] sm:$0xff]
  %v949 = vld [vmem:[%s4 + $0x28] sm:$0xff]
  %v950 = vld [vmem:[%s4 + $0x30] sm:$0xff]
  %v951 = vld [vmem:[%s4 + $0x38] sm:$0xff]
  %v952 = vld [vmem:[%s4 + $0x40] sm:$0xff]
  %v953 = vld [vmem:[%s4 + $0x48] sm:$0xff]
  %v954 = vld [vmem:[%s4 + $0x50] sm:$0xff]
  %v955 = vld [vmem:[%s4 + $0x58] sm:$0xff]
  %v956 = vld [vmem:[%s4 + $0x60] sm:$0xff]
  %v957 = vld [vmem:[%s4 + $0x68] sm:$0xff]
  %v958 = vld [vmem:[%s4 + $0x70] sm:$0xff]
  %v959 = vld [vmem:[%s4 + $0x78] sm:$0xff]
  %v960 = vld [vmem:[%s4 + $0x80] sm:$0xff]
  %v961 = vld [vmem:[%s4 + $0x88] sm:$0xff]
  %v962 = vld [vmem:[%s4 + $0x90] sm:$0xff]
  %v963 = vld [vmem:[%s4 + $0x98] sm:$0xff]
  %v964 = vld [vmem:[%s4 + $0xa0] sm:$0xff]
  %v965 = vld [vmem:[%s4 + $0xa8] sm:$0xff]
  %v966 = vld [vmem:[%s4 + $0xb0] sm:$0xff]
  %v967 = vld [vmem:[%s4 + $0xb8] sm:$0xff]
  %v968 = vld [vmem:[%s4 + $0xc0] sm:$0xff]
  %v969 = vld [vmem:[%s4 + $0xc8] sm:$0xff]
  %v970 = vld [vmem:[%s4 + $0xd0] sm:$0xff]
  %v971 = vld [vmem:[%s4 + $0xd8] sm:$0xff]
  %v972 = vld [vmem:[%s4 + $0xe0] sm:$0xff]
  %v973 = vld [vmem:[%s4 + $0xe8] sm:$0xff]
  %v974 = vld [vmem:[%s4 + $0xf0] sm:$0xff]
  %v975 = vld [vmem:[%s4 + $0xf8] sm:$0xff]
  %v976 = vld [vmem:[%s4 + $0x100] sm:$0xff]
  %v977 = vld [vmem:[%s4 + $0x108] sm:$0xff]
  %v978 = vld [vmem:[%s4 + $0x110] sm:$0xff]
  %v979 = vld [vmem:[%s4 + $0x118] sm:$0xff]
  %v980 = vld [vmem:[%s4 + $0x120] sm:$0xff]
  %v981 = vld [vmem:[%s4 + $0x128] sm:$0xff]
  %v982 = vld [vmem:[%s4 + $0x130] sm:$0xff]
  %v983 = vld [vmem:[%s4 + $0x138] sm:$0xff]
  %v984 = vld [vmem:[%s4 + $0x140] sm:$0xff]
  %v985 = vld [vmem:[%s4 + $0x148] sm:$0xff]
  %v986 = vld [vmem:[%s4 + $0x150] sm:$0xff]
  %v987 = vld [vmem:[%s4 + $0x158] sm:$0xff]
  %v988 = vld [vmem:[%s4 + $0x160] sm:$0xff]
  %v989 = vld [vmem:[%s4 + $0x168] sm:$0xff]
  %v990 = vld [vmem:[%s4 + $0x170] sm:$0xff]
  %v991 = vld [vmem:[%s4 + $0x178] sm:$0xff]
  %v992 = vld [vmem:[%s4 + $0x180] sm:$0xff]
  %v993 = vld [vmem:[%s4 + $0x188] sm:$0xff]
  %v994 = vld [vmem:[%s4 + $0x190] sm:$0xff]
  %v995 = vld [vmem:[%s4 + $0x198] sm:$0xff]
  %v996 = vld [vmem:[%s4 + $0x1a0] sm:$0xff]
  %v997 = vld [vmem:[%s4 + $0x1a8] sm:$0xff]
  %v998 = vld [vmem:[%s4 + $0x1b0] sm:$0xff]
  %v999 = vld [vmem:[%s4 + $0x1b8] sm:$0xff]
  %v1000 = vld [vmem:[%s4 + $0x1c0] sm:$0xff]
  %v1001 = vld [vmem:[%s4 + $0x1c8] sm:$0xff]
  %v1002 = vld [vmem:[%s4 + $0x1d0] sm:$0xff]
  %v1003 = vld [vmem:[%s4 + $0x1d8] sm:$0xff]
  %v1004 = vld [vmem:[%s4 + $0x1e0] sm:$0xff]
  %v1005 = vld [vmem:[%s4 + $0x1e8] sm:$0xff]
  %v1006 = vld [vmem:[%s4 + $0x1f0] sm:$0xff]
  %v1007 = vld [vmem:[%s4 + $0x1f8] sm:$0xff]
  %v1008 = vld [vmem:[%s4 + $0x200] sm:$0xff]
  %v1009 = vld [vmem:[%s4 + $0x208] sm:$0xff]
  %v1010 = vld [vmem:[%s4 + $0x210] sm:$0xff]
  %v1011 = vld [vmem:[%s4 + $0x218] sm:$0xff]
  %v1012 = vld [vmem:[%s4 + $0x220] sm:$0xff]
  %v1013 = vld [vmem:[%s4 + $0x228] sm:$0xff]
  %v1014 = vld [vmem:[%s4 + $0x230] sm:$0xff]
  %v1015 = vld [vmem:[%s4 + $0x238] sm:$0xff]
  %v1016 = vld [vmem:[%s4 + $0x240] sm:$0xff]
  %v1017 = vld [vmem:[%s4 + $0x248] sm:$0xff]
  %v1018 = vld [vmem:[%s4 + $0x250] sm:$0xff]
  %v1019 = vld [vmem:[%s4 + $0x258] sm:$0xff]
  %v1020 = vld [vmem:[%s4 + $0x260] sm:$0xff]
  %v1021 = vld [vmem:[%s4 + $0x268] sm:$0xff]
  %v1022 = vld [vmem:[%s4 + $0x270] sm:$0xff]
  %v1023 = vld [vmem:[%s4 + $0x278] sm:$0xff]
  %v1024 = vld [vmem:[%s4 + $0x280] sm:$0xff]
  %v1025 = vld [vmem:[%s4 + $0x288] sm:$0xff]
  %v1026 = vld [vmem:[%s4 + $0x290] sm:$0xff]
  %v1027 = vld [vmem:[%s4 + $0x298] sm:$0xff]
  %v1028 = vld [vmem:[%s4 + $0x2a0] sm:$0xff]
  %v1029 = vld [vmem:[%s4 + $0x2a8] sm:$0xff]
  %v1030 = vld [vmem:[%s4 + $0x2b0] sm:$0xff]
  %v1031 = vld [vmem:[%s4 + $0x2b8] sm:$0xff]
  %v1032 = vld [vmem:[%s4 + $0x2c0] sm:$0xff]
  %v1033 = vld [vmem:[%s4 + $0x2c8] sm:$0xff]
  %v1034 = vld [vmem:[%s4 + $0x2d0] sm:$0xff]
  %v1035 = vld [vmem:[%s4 + $0x2d8] sm:$0xff]
  %v1036 = vld [vmem:[%s4 + $0x2e0] sm:$0xff]
  %v1037 = vld [vmem:[%s4 + $0x2e8] sm:$0xff]
  %v1038 = vld [vmem:[%s4 + $0x2f0] sm:$0xff]
  %v1039 = vld [vmem:[%s4 + $0x2f8] sm:$0xff]
  %v1040 = vld [vmem:[%s4 + $0x300] sm:$0xff]
  %v1041 = vld [vmem:[%s4 + $0x308] sm:$0xff]
  %v1042 = vld [vmem:[%s4 + $0x310] sm:$0xff]
  %v1043 = vld [vmem:[%s4 + $0x318] sm:$0xff]
  %1044 = vmatprep.subr.mxu0 0.0
  %1045 = vmatpush1.msra.mxu0 %v944
  %1046 = vmatprep.subr.mxu0 0.0
  %1047 = vmatpush1.msra.mxu0 %v945
  %1048 = vmatprep.subr.mxu0 0.0
  %1049 = vmatpush1.msra.mxu0 %v946
  %1050 = vmatprep.subr.mxu0 0.0
  %1051 = vmatpush1.msra.mxu0 %v947
  %1052 = vmatprep.subr.mxu0 0.0
  %1053 = vmatpush1.msra.mxu0 %v948
  %1054 = vmatprep.subr.mxu0 0.0
  %1055 = vmatpush1.msra.mxu0 %v949
  %1056 = vmatprep.subr.mxu0 0.0
  %1057 = vmatpush1.msra.mxu0 %v950
  %1058 = vmatprep.subr.mxu0 0.0
  %1059 = vmatpush1.msra.mxu0 %v951
  %1060 = vmatprep.subr.mxu0 0.0
  %1061 = vmatpush1.msra.mxu0 %v952
  %1062 = vmatprep.subr.mxu0 0.0
  %1063 = vmatpush1.msra.mxu0 %v953
  %1064 = vmatprep.subr.mxu0 0.0
  %1065 = vmatpush1.msra.mxu0 %v954
  %1066 = vmatprep.subr.mxu0 0.0
  %1067 = vmatpush1.msra.mxu0 %v955
  %1068 = vmatprep.subr.mxu0 0.0
  %1069 = vmatpush1.msra.mxu0 %v956
  %1070 = vmatprep.subr.mxu0 0.0
  %1071 = vmatpush1.msra.mxu0 %v957
  %1072 = vmatprep.subr.mxu0 0.0
  %1073 = vmatpush1.msra.mxu0 %v958
  %1074 = vmatprep.subr.mxu0 0.0
  %1075 = vmatpush1.msra.mxu0 %v959
  %1076 = vmatprep.subr.mxu0 0.0
  %1077 = vmatpush1.msra.mxu0 %v960
  %1078 = vmatprep.subr.mxu0 0.0
  %1079 = vmatpush1.msra.mxu0 %v961
  %1080 = vmatprep.subr.mxu0 0.0
  %1081 = vmatpush1.msra.mxu0 %v962
  %1082 = vmatprep.subr.mxu0 0.0
  %1083 = vmatpush1.msra.mxu0 %v963
  %1084 = vmatprep.subr.mxu0 0.0
  %1085 = vmatpush1.msra.mxu0 %v964
  %1086 = vmatprep.subr.mxu0 0.0
  %1087 = vmatpush1.msra.mxu0 %v965
  %1088 = vmatprep.subr.mxu0 0.0
  %1089 = vmatpush1.msra.mxu0 %v966
  %1090 = vmatprep.subr.mxu0 0.0
  %1091 = vmatpush1.msra.mxu0 %v967
  %1092 = vmatprep.subr.mxu0 0.0
  %1093 = vmatpush1.msra.mxu0 %v968
  %1094 = vmatprep.subr.mxu0 0.0
  %1095 = vmatpush1.msra.mxu0 %v969
  %1096 = vmatprep.subr.mxu0 0.0
  %1097 = vmatpush1.msra.mxu0 %v970
  %1098 = vmatprep.subr.mxu0 0.0
  %1099 = vmatpush1.msra.mxu0 %v971
  %1100 = vmatprep.subr.mxu0 0.0
  %1101 = vmatpush1.msra.mxu0 %v972
  %1102 = vmatprep.subr.mxu0 0.0
  %1103 = vmatpush1.msra.mxu0 %v973
  %1104 = vmatprep.subr.mxu0 0.0
  %1105 = vmatpush1.msra.mxu0 %v974
  %1106 = vmatprep.subr.mxu0 0.0
  %1107 = vmatpush1.msra.mxu0 %v975
  %1108 = vmatprep.mubr.f32.mxu0 %v24
  %1109 = vmatmul.mubr.f32.gmra.mrb[0].mxu0 %v23
  %v1110 = vpop.f32.mrb[0].mxu0
  %v1111 = vadd.f32 0.0, %v1110
  %v1112 = vpop.f32.mrb[0].mxu0
  %1113 = vmatprep.mubr.f32.mxu0 %v31
  %1114 = vmatmul.mubr.f32.gmra.mrb[0].mxu0 %v30
  %v1115 = vpop.f32.mrb[0].mxu0
  %v1116 = vadd.f32 0.0, %v1115
  %v1117 = vpop.f32.mrb[0].mxu0
  %1118 = vmatprep.mubr.f32.mxu0 %v38
  %1119 = vmatmul.mubr.f32.gmra.mrb[0].mxu0 %v37
  %v1120 = vpop.f32.mrb[0].mxu0
  %v1121 = vadd.f32 0.0, %v1120
  %v1122 = vpop.f32.mrb[0].mxu0
  %1123 = vmatprep.mubr.f32.mxu0 %v45
  %1124 = vmatmul.mubr.f32.gmra.mrb[0].mxu0 %v44
  %v1125 = vpop.f32.mrb[0].mxu0
  %v1126 = vadd.f32 0.0, %v1125
  %v1127 = vpop.f32.mrb[0].mxu0
  %1128 = vdwg.mxu0
  %1129 = vmatprep.subr.mxu0 0.0
  %1130 = vmatpush1.msra.mxu0 %v976
  %1131 = vmatprep.subr.mxu0 0.0
  %1132 = vmatpush1.msra.mxu0 %v977
  %1133 = vmatprep.subr.mxu0 0.0
  %1134 = vmatpush1.msra.mxu0 %v978
  %1135 = vmatprep.subr.mxu0 0.0
  %1136 = vmatpush1.msra.mxu0 %v979
  %1137 = vmatprep.subr.mxu0 0.0
  %1138 = vmatpush1.msra.mxu0 %v980
  %1139 = vmatprep.subr.mxu0 0.0
  %1140 = vmatpush1.msra.mxu0 %v981
  %1141 = vmatprep.subr.mxu0 0.0
  %1142 = vmatpush1.msra.mxu0 %v982
  %1143 = vmatprep.subr.mxu0 0.0
  %1144 = vmatpush1.msra.mxu0 %v983
  %1145 = vmatprep.subr.mxu0 0.0
  %1146 = vmatpush1.msra.mxu0 %v984
  %1147 = vmatprep.subr.mxu0 0.0
  %1148 = vmatpush1.msra.mxu0 %v985
  %1149 = vmatprep.subr.mxu0 0.0
  %1150 = vmatpush1.msra.mxu0 %v986
  %1151 = vmatprep.subr.mxu0 0.0
  %1152 = vmatpush1.msra.mxu0 %v987
  %1153 = vmatprep.subr.mxu0 0.0
  %1154 = vmatpush1.msra.mxu0 %v988
  %1155 = vmatprep.subr.mxu0 0.0
  %1156 = vmatpush1.msra.mxu0 %v989
  %1157 = vmatprep.subr.mxu0 0.0
  %1158 = vmatpush1.msra.mxu0 %v990
  %1159 = vmatprep.subr.mxu0 0.0
  %1160 = vmatpush1.msra.mxu0 %v991
  %1161 = vmatprep.subr.mxu0 0.0
  %1162 = vmatpush1.msra.mxu0 %v992
  %1163 = vmatprep.subr.mxu0 0.0
  %1164 = vmatpush1.msra.mxu0 %v993
  %1165 = vmatprep.subr.mxu0 0.0
  %1166 = vmatpush1.msra.mxu0 %v994
  %1167 = vmatprep.subr.mxu0 0.0
  %1168 = vmatpush1.msra.mxu0 %v995
  %1169 = vmatprep.subr.mxu0 0.0
  %1170 = vmatpush1.msra.mxu0 %v996
  %1171 = vmatprep.subr.mxu0 0.0
  %1172 = vmatpush1.msra.mxu0 %v997
  %1173 = vmatprep.subr.mxu0 0.0
  %1174 = vmatpush1.msra.mxu0 %v998
  %1175 = vmatprep.subr.mxu0 0.0
  %1176 = vmatpush1.msra.mxu0 %v999
  %1177 = vmatprep.subr.mxu0 0.0
  %1178 = vmatpush1.msra.mxu0 %v1000
  %1179 = vmatprep.subr.mxu0 0.0
  %1180 = vmatpush1.msra.mxu0 %v1001
  %1181 = vmatprep.subr.mxu0 0.0
  %1182 = vmatpush1.msra.mxu0 %v1002
  %1183 = vmatprep.subr.mxu0 0.0
  %1184 = vmatpush1.msra.mxu0 %v1003
  %1185 = vmatprep.subr.mxu0 0.0
  %1186 = vmatpush1.msra.mxu0 %v1004
  %1187 = vmatprep.subr.mxu0 0.0
  %1188 = vmatpush1.msra.mxu0 %v1005
  %1189 = vmatprep.subr.mxu0 0.0
  %1190 = vmatpush1.msra.mxu0 %v1006
  %1191 = vmatprep.subr.mxu0 0.0
  %1192 = vmatpush1.msra.mxu0 %v1007
  %1193 = vmatprep.mubr.f32.mxu0 %v26
  %1194 = vmatmul.mubr.f32.gmra.mrb[0].mxu0 %v25
  %v1195 = vpop.f32.mrb[0].mxu0
  %v1196 = vadd.f32 %v1111, %v1195
  %v1197 = vpop.f32.mrb[0].mxu0
  %1198 = vmatprep.mubr.f32.mxu0 %v33
  %1199 = vmatmul.mubr.f32.gmra.mrb[0].mxu0 %v32
  %v1200 = vpop.f32.mrb[0].mxu0
  %v1201 = vadd.f32 %v1116, %v1200
  %v1202 = vpop.f32.mrb[0].mxu0
  %1203 = vmatprep.mubr.f32.mxu0 %v40
  %1204 = vmatmul.mubr.f32.gmra.mrb[0].mxu0 %v39
  %v1205 = vpop.f32.mrb[0].mxu0
  %v1206 = vadd.f32 %v1121, %v1205
  %v1207 = vpop.f32.mrb[0].mxu0
  %1208 = vmatprep.mubr.f32.mxu0 %v47
  %1209 = vmatmul.mubr.f32.gmra.mrb[0].mxu0 %v46
  %v1210 = vpop.f32.mrb[0].mxu0
  %v1211 = vadd.f32 %v1126, %v1210
  %v1212 = vpop.f32.mrb[0].mxu0
  %1213 = vdwg.mxu0
  %1214 = vmatprep.subr.mxu0 0.0
  %1215 = vmatpush1.msra.mxu0 %v1008
  %1216 = vmatprep.subr.mxu0 0.0
  %1217 = vmatpush1.msra.mxu0 %v1009
  %1218 = vmatprep.subr.mxu0 0.0
  %1219 = vmatpush1.msra.mxu0 %v1010
  %1220 = vmatprep.subr.mxu0 0.0
  %1221 = vmatpush1.msra.mxu0 %v1011
  %1222 = vmatprep.subr.mxu0 0.0
  %1223 = vmatpush1.msra.mxu0 %v1012
  %1224 = vmatprep.subr.mxu0 0.0
  %1225 = vmatpush1.msra.mxu0 %v1013
  %1226 = vmatprep.subr.mxu0 0.0
  %1227 = vmatpush1.msra.mxu0 %v1014
  %1228 = vmatprep.subr.mxu0 0.0
  %1229 = vmatpush1.msra.mxu0 %v1015
  %1230 = vmatprep.subr.mxu0 0.0
  %1231 = vmatpush1.msra.mxu0 %v1016
  %1232 = vmatprep.subr.mxu0 0.0
  %1233 = vmatpush1.msra.mxu0 %v1017
  %1234 = vmatprep.subr.mxu0 0.0
  %1235 = vmatpush1.msra.mxu0 %v1018
  %1236 = vmatprep.subr.mxu0 0.0
  %1237 = vmatpush1.msra.mxu0 %v1019
  %1238 = vmatprep.subr.mxu0 0.0
  %1239 = vmatpush1.msra.mxu0 %v1020
  %1240 = vmatprep.subr.mxu0 0.0
  %1241 = vmatpush1.msra.mxu0 %v1021
  %1242 = vmatprep.subr.mxu0 0.0
  %1243 = vmatpush1.msra.mxu0 %v1022
  %1244 = vmatprep.subr.mxu0 0.0
  %1245 = vmatpush1.msra.mxu0 %v1023
  %1246 = vmatprep.subr.mxu0 0.0
  %1247 = vmatpush1.msra.mxu0 %v1024
  %1248 = vmatprep.subr.mxu0 0.0
  %1249 = vmatpush1.msra.mxu0 %v1025
  %1250 = vmatprep.subr.mxu0 0.0
  %1251 = vmatpush1.msra.mxu0 %v1026
  %1252 = vmatprep.subr.mxu0 0.0
  %1253 = vmatpush1.msra.mxu0 %v1027
  %1254 = vmatprep.subr.mxu0 0.0
  %1255 = vmatpush1.msra.mxu0 %v1028
  %1256 = vmatprep.subr.mxu0 0.0
  %1257 = vmatpush1.msra.mxu0 %v1029
  %1258 = vmatprep.subr.mxu0 0.0
  %1259 = vmatpush1.msra.mxu0 %v1030
  %1260 = vmatprep.subr.mxu0 0.0
  %1261 = vmatpush1.msra.mxu0 %v1031
  %1262 = vmatprep.subr.mxu0 0.0
  %1263 = vmatpush1.msra.mxu0 %v1032
  %1264 = vmatprep.subr.mxu0 0.0
  %1265 = vmatpush1.msra.mxu0 %v1033
  %1266 = vmatprep.subr.mxu0 0.0
  %1267 = vmatpush1.msra.mxu0 %v1034
  %1268 = vmatprep.subr.mxu0 0.0
  %1269 = vmatpush1.msra.mxu0 %v1035
  %1270 = vmatprep.subr.mxu0 0.0
  %1271 = vmatpush1.msra.mxu0 %v1036
  %1272 = vmatprep.subr.mxu0 0.0
  %1273 = vmatpush1.msra.mxu0 %v1037
  %1274 = vmatprep.subr.mxu0 0.0
  %1275 = vmatpush1.msra.mxu0 %v1038
  %1276 = vmatprep.subr.mxu0 0.0
  %1277 = vmatpush1.msra.mxu0 %v1039
  %1278 = vmatprep.mubr.f32.mxu0 %v28
  %1279 = vmatmul.mubr.f32.gmra.mrb[0].mxu0 %v27
  %v1280 = vpop.f32.mrb[0].mxu0
  %v1281 = vadd.f32 %v1196, %v1280
  %v1282 = vpop.f32.mrb[0].mxu0
  %1283 = vmatprep.mubr.f32.mxu0 %v35
  %1284 = vmatmul.mubr.f32.gmra.mrb[0].mxu0 %v34
  %v1285 = vpop.f32.mrb[0].mxu0
  %v1286 = vadd.f32 %v1201, %v1285
  %v1287 = vpop.f32.mrb[0].mxu0
  %1288 = vmatprep.mubr.f32.mxu0 %v42
  %1289 = vmatmul.mubr.f32.gmra.mrb[0].mxu0 %v41
  %v1290 = vpop.f32.mrb[0].mxu0
  %v1291 = vadd.f32 %v1206, %v1290
  %v1292 = vpop.f32.mrb[0].mxu0
  %1293 = vmatprep.mubr.f32.mxu0 %v49
  %1294 = vmatmul.mubr.f32.gmra.mrb[0].mxu0 %v48
  %v1295 = vpop.f32.mrb[0].mxu0
  %v1296 = vadd.f32 %v1211, %v1295
  %v1297 = vpop.f32.mrb[0].mxu0
  %1298 = vdwg.mxu0
  %1299 = vmatprep.subr.mxu0 0.0
  %1300 = vmatpush1.msra.mxu0 %v1040
  %1301 = vmatprep.subr.mxu0 0.0
  %1302 = vmatpush1.msra.mxu0 %v1041
  %1303 = vmatprep.subr.mxu0 0.0
  %1304 = vmatpush1.msra.mxu0 %v1042
  %1305 = vmatprep.subr.mxu0 0.0
  %1306 = vmatpush1.msra.mxu0 %v1043
  %1307 = vmatprep.subr.mxu0 0.0
  %1308 = vmatpush1.msra.mxu0 0.0
  %1309 = vmatprep.subr.mxu0 0.0
  %1310 = vmatpush1.msra.mxu0 0.0
  %1311 = vmatprep.subr.mxu0 0.0
  %1312 = vmatpush1.msra.mxu0 0.0
  %1313 = vmatprep.subr.mxu0 0.0
  %1314 = vmatpush1.msra.mxu0 0.0
  %1315 = vmatprep.subr.mxu0 0.0
  %1316 = vmatpush1.msra.mxu0 0.0
  %1317 = vmatprep.subr.mxu0 0.0
  %1318 = vmatpush1.msra.mxu0 0.0
  %1319 = vmatprep.subr.mxu0 0.0
  %1320 = vmatpush1.msra.mxu0 0.0
  %1321 = vmatprep.subr.mxu0 0.0
  %1322 = vmatpush1.msra.mxu0 0.0
  %1323 = vmatprep.subr.mxu0 0.0
  %1324 = vmatpush1.msra.mxu0 0.0
  %1325 = vmatprep.subr.mxu0 0.0
  %1326 = vmatpush1.msra.mxu0 0.0
  %1327 = vmatprep.subr.mxu0 0.0
  %1328 = vmatpush1.msra.mxu0 0.0
  %1329 = vmatprep.subr.mxu0 0.0
  %1330 = vmatpush1.msra.mxu0 0.0
  %1331 = vmatprep.subr.mxu0 0.0
  %1332 = vmatpush1.msra.mxu0 0.0
  %1333 = vmatprep.subr.mxu0 0.0
  %1334 = vmatpush1.msra.mxu0 0.0
  %1335 = vmatprep.subr.mxu0 0.0
  %1336 = vmatpush1.msra.mxu0 0.0
  %1337 = vmatprep.subr.mxu0 0.0
  %1338 = vmatpush1.msra.mxu0 0.0
  %1339 = vmatprep.subr.mxu0 0.0
  %1340 = vmatpush1.msra.mxu0 0.0
  %1341 = vmatprep.subr.mxu0 0.0
  %1342 = vmatpush1.msra.mxu0 0.0
  %1343 = vmatprep.subr.mxu0 0.0
  %1344 = vmatpush1.msra.mxu0 0.0
  %1345 = vmatprep.subr.mxu0 0.0
  %1346 = vmatpush1.msra.mxu0 0.0
  %1347 = vmatprep.subr.mxu0 0.0
  %1348 = vmatpush1.msra.mxu0 0.0
  %1349 = vmatprep.subr.mxu0 0.0
  %1350 = vmatpush1.msra.mxu0 0.0
  %1351 = vmatprep.subr.mxu0 0.0
  %1352 = vmatpush1.msra.mxu0 0.0
  %1353 = vmatprep.subr.mxu0 0.0
  %1354 = vmatpush1.msra.mxu0 0.0
  %1355 = vmatprep.subr.mxu0 0.0
  %1356 = vmatpush1.msra.mxu0 0.0
  %1357 = vmatprep.subr.mxu0 0.0
  %1358 = vmatpush1.msra.mxu0 0.0
  %1359 = vmatprep.subr.mxu0 0.0
  %1360 = vmatpush1.msra.mxu0 0.0
  %1361 = vmatprep.subr.mxu0 0.0
  %1362 = vmatpush1.msra.mxu0 0.0
  %1363 = vmatprep.mubr.f32.mxu0 0.0
  %1364 = vmatmul.mubr.f32.gmra.mrb[0].mxu0 %v153
  %v1365 = vpop.f32.mrb[0].mxu0
  %v1366 = vadd.f32 %v1281, %v1365
  %v1367 = vpop.f32.mrb[0].mxu0
  %1368 = vmatprep.mubr.f32.mxu0 0.0
  %1369 = vmatmul.mubr.f32.gmra.mrb[0].mxu0 %v156
  %v1370 = vpop.f32.mrb[0].mxu0
  %v1371 = vadd.f32 %v1286, %v1370
  %v1372 = vpop.f32.mrb[0].mxu0
  %1373 = vmatprep.mubr.f32.mxu0 0.0
  %1374 = vmatmul.mubr.f32.gmra.mrb[0].mxu0 %v159
  %v1375 = vpop.f32.mrb[0].mxu0
  %v1376 = vadd.f32 %v1291, %v1375
  %v1377 = vpop.f32.mrb[0].mxu0
  %1378 = vmatprep.mubr.f32.mxu0 0.0
  %1379 = vmatmul.mubr.f32.gmra.mrb[0].mxu0 %v162
  %v1380 = vpop.f32.mrb[0].mxu0
  %v1381 = vadd.f32 %v1296, %v1380
  %v1382 = vpop.f32.mrb[0].mxu0
  %1383 = vdwg.mxu0
  %v1384 = vld [vmem:[%s5] sm:$0xff]
  %v1385 = vld [vmem:[%s5 + $0x8] sm:$0xff]
  %v1386 = vld [vmem:[%s5 + $0x10] sm:$0xff]
  %v1387 = vld [vmem:[%s5 + $0x18] sm:$0xff]
  %v1388 = vld [vmem:[%s5 + $0x20] sm:$0xff]
  %v1389 = vld [vmem:[%s5 + $0x28] sm:$0xff]
  %v1390 = vld [vmem:[%s5 + $0x30] sm:$0xff]
  %v1391 = vld [vmem:[%s5 + $0x38] sm:$0xff]
  %v1392 = vld [vmem:[%s5 + $0x40] sm:$0xff]
  %v1393 = vld [vmem:[%s5 + $0x48] sm:$0xff]
  %v1394 = vld [vmem:[%s5 + $0x50] sm:$0xff]
  %v1395 = vld [vmem:[%s5 + $0x58] sm:$0xff]
  %v1396 = vld [vmem:[%s5 + $0x60] sm:$0xff]
  %v1397 = vld [vmem:[%s5 + $0x68] sm:$0xff]
  %v1398 = vld [vmem:[%s5 + $0x70] sm:$0xff]
  %v1399 = vld [vmem:[%s5 + $0x78] sm:$0xff]
  %v1400 = vld [vmem:[%s5 + $0x80] sm:$0xff]
  %v1401 = vld [vmem:[%s5 + $0x88] sm:$0xff]
  %v1402 = vld [vmem:[%s5 + $0x90] sm:$0xff]
  %v1403 = vld [vmem:[%s5 + $0x98] sm:$0xff]
  %v1404 = vld [vmem:[%s5 + $0xa0] sm:$0xff]
  %v1405 = vld [vmem:[%s5 + $0xa8] sm:$0xff]
  %v1406 = vld [vmem:[%s5 + $0xb0] sm:$0xff]
  %v1407 = vld [vmem:[%s5 + $0xb8] sm:$0xff]
  %v1408 = vld [vmem:[%s5 + $0xc0] sm:$0xff]
  %v1409 = vld [vmem:[%s5 + $0xc8] sm:$0xff]
  %v1410 = vld [vmem:[%s5 + $0xd0] sm:$0xff]
  %v1411 = vld [vmem:[%s5 + $0xd8] sm:$0xff]
  %v1412 = vld [vmem:[%s5 + $0xe0] sm:$0xff]
  %v1413 = vld [vmem:[%s5 + $0xe8] sm:$0xff]
  %v1414 = vld [vmem:[%s5 + $0xf0] sm:$0xff]
  %v1415 = vld [vmem:[%s5 + $0xf8] sm:$0xff]
  %v1416 = vld [vmem:[%s5 + $0x100] sm:$0xff]
  %v1417 = vld [vmem:[%s5 + $0x108] sm:$0xff]
  %v1418 = vld [vmem:[%s5 + $0x110] sm:$0xff]
  %v1419 = vld [vmem:[%s5 + $0x118] sm:$0xff]
  %v1420 = vld [vmem:[%s5 + $0x120] sm:$0xff]
  %v1421 = vld [vmem:[%s5 + $0x128] sm:$0xff]
  %v1422 = vld [vmem:[%s5 + $0x130] sm:$0xff]
  %v1423 = vld [vmem:[%s5 + $0x138] sm:$0xff]
  %v1424 = vld [vmem:[%s5 + $0x140] sm:$0xff]
  %v1425 = vld [vmem:[%s5 + $0x148] sm:$0xff]
  %v1426 = vld [vmem:[%s5 + $0x150] sm:$0xff]
  %v1427 = vld [vmem:[%s5 + $0x158] sm:$0xff]
  %v1428 = vld [vmem:[%s5 + $0x160] sm:$0xff]
  %v1429 = vld [vmem:[%s5 + $0x168] sm:$0xff]
  %v1430 = vld [vmem:[%s5 + $0x170] sm:$0xff]
  %v1431 = vld [vmem:[%s5 + $0x178] sm:$0xff]
  %v1432 = vld [vmem:[%s5 + $0x180] sm:$0xff]
  %v1433 = vld [vmem:[%s5 + $0x188] sm:$0xff]
  %v1434 = vld [vmem:[%s5 + $0x190] sm:$0xff]
  %v1435 = vld [vmem:[%s5 + $0x198] sm:$0xff]
  %v1436 = vld [vmem:[%s5 + $0x1a0] sm:$0xff]
  %v1437 = vld [vmem:[%s5 + $0x1a8] sm:$0xff]
  %v1438 = vld [vmem:[%s5 + $0x1b0] sm:$0xff]
  %v1439 = vld [vmem:[%s5 + $0x1b8] sm:$0xff]
  %v1440 = vld [vmem:[%s5 + $0x1c0] sm:$0xff]
  %v1441 = vld [vmem:[%s5 + $0x1c8] sm:$0xff]
  %v1442 = vld [vmem:[%s5 + $0x1d0] sm:$0xff]
  %v1443 = vld [vmem:[%s5 + $0x1d8] sm:$0xff]
  %v1444 = vld [vmem:[%s5 + $0x1e0] sm:$0xff]
  %v1445 = vld [vmem:[%s5 + $0x1e8] sm:$0xff]
  %v1446 = vld [vmem:[%s5 + $0x1f0] sm:$0xff]
  %v1447 = vld [vmem:[%s5 + $0x1f8] sm:$0xff]
  %v1448 = vld [vmem:[%s5 + $0x200] sm:$0xff]
  %v1449 = vld [vmem:[%s5 + $0x208] sm:$0xff]
  %v1450 = vld [vmem:[%s5 + $0x210] sm:$0xff]
  %v1451 = vld [vmem:[%s5 + $0x218] sm:$0xff]
  %v1452 = vld [vmem:[%s5 + $0x220] sm:$0xff]
  %v1453 = vld [vmem:[%s5 + $0x228] sm:$0xff]
  %v1454 = vld [vmem:[%s5 + $0x230] sm:$0xff]
  %v1455 = vld [vmem:[%s5 + $0x238] sm:$0xff]
  %v1456 = vld [vmem:[%s5 + $0x240] sm:$0xff]
  %v1457 = vld [vmem:[%s5 + $0x248] sm:$0xff]
  %v1458 = vld [vmem:[%s5 + $0x250] sm:$0xff]
  %v1459 = vld [vmem:[%s5 + $0x258] sm:$0xff]
  %v1460 = vld [vmem:[%s5 + $0x260] sm:$0xff]
  %v1461 = vld [vmem:[%s5 + $0x268] sm:$0xff]
  %v1462 = vld [vmem:[%s5 + $0x270] sm:$0xff]
  %v1463 = vld [vmem:[%s5 + $0x278] sm:$0xff]
  %v1464 = vld [vmem:[%s5 + $0x280] sm:$0xff]
  %v1465 = vld [vmem:[%s5 + $0x288] sm:$0xff]
  %v1466 = vld [vmem:[%s5 + $0x290] sm:$0xff]
  %v1467 = vld [vmem:[%s5 + $0x298] sm:$0xff]
  %v1468 = vld [vmem:[%s5 + $0x2a0] sm:$0xff]
  %v1469 = vld [vmem:[%s5 + $0x2a8] sm:$0xff]
  %v1470 = vld [vmem:[%s5 + $0x2b0] sm:$0xff]
  %v1471 = vld [vmem:[%s5 + $0x2b8] sm:$0xff]
  %v1472 = vld [vmem:[%s5 + $0x2c0] sm:$0xff]
  %v1473 = vld [vmem:[%s5 + $0x2c8] sm:$0xff]
  %v1474 = vld [vmem:[%s5 + $0x2d0] sm:$0xff]
  %v1475 = vld [vmem:[%s5 + $0x2d8] sm:$0xff]
  %v1476 = vld [vmem:[%s5 + $0x2e0] sm:$0xff]
  %v1477 = vld [vmem:[%s5 + $0x2e8] sm:$0xff]
  %v1478 = vld [vmem:[%s5 + $0x2f0] sm:$0xff]
  %v1479 = vld [vmem:[%s5 + $0x2f8] sm:$0xff]
  %v1480 = vld [vmem:[%s5 + $0x300] sm:$0xff]
  %v1481 = vld [vmem:[%s5 + $0x308] sm:$0xff]
  %v1482 = vld [vmem:[%s5 + $0x310] sm:$0xff]
  %v1483 = vld [vmem:[%s5 + $0x318] sm:$0xff]
  %1484 = vmatprep.subr.mxu0 0.0
  %1485 = vmatpush1.msra.mxu0 %v1384
  %1486 = vmatprep.subr.mxu0 0.0
  %1487 = vmatpush1.msra.mxu0 %v1385
  %1488 = vmatprep.subr.mxu0 0.0
  %1489 = vmatpush1.msra.mxu0 %v1386
  %1490 = vmatprep.subr.mxu0 0.0
  %1491 = vmatpush1.msra.mxu0 %v1387
  %1492 = vmatprep.subr.mxu0 0.0
  %1493 = vmatpush1.msra.mxu0 %v1388
  %1494 = vmatprep.subr.mxu0 0.0
  %1495 = vmatpush1.msra.mxu0 %v1389
  %1496 = vmatprep.subr.mxu0 0.0
  %1497 = vmatpush1.msra.mxu0 %v1390
  %1498 = vmatprep.subr.mxu0 0.0
  %1499 = vmatpush1.msra.mxu0 %v1391
  %1500 = vmatprep.subr.mxu0 0.0
  %1501 = vmatpush1.msra.mxu0 %v1392
  %1502 = vmatprep.subr.mxu0 0.0
  %1503 = vmatpush1.msra.mxu0 %v1393
  %1504 = vmatprep.subr.mxu0 0.0
  %1505 = vmatpush1.msra.mxu0 %v1394
  %1506 = vmatprep.subr.mxu0 0.0
  %1507 = vmatpush1.msra.mxu0 %v1395
  %1508 = vmatprep.subr.mxu0 0.0
  %1509 = vmatpush1.msra.mxu0 %v1396
  %1510 = vmatprep.subr.mxu0 0.0
  %1511 = vmatpush1.msra.mxu0 %v1397
  %1512 = vmatprep.subr.mxu0 0.0
  %1513 = vmatpush1.msra.mxu0 %v1398
  %1514 = vmatprep.subr.mxu0 0.0
  %1515 = vmatpush1.msra.mxu0 %v1399
  %1516 = vmatprep.subr.mxu0 0.0
  %1517 = vmatpush1.msra.mxu0 %v1400
  %1518 = vmatprep.subr.mxu0 0.0
  %1519 = vmatpush1.msra.mxu0 %v1401
  %1520 = vmatprep.subr.mxu0 0.0
  %1521 = vmatpush1.msra.mxu0 %v1402
  %1522 = vmatprep.subr.mxu0 0.0
  %1523 = vmatpush1.msra.mxu0 %v1403
  %1524 = vmatprep.subr.mxu0 0.0
  %1525 = vmatpush1.msra.mxu0 %v1404
  %1526 = vmatprep.subr.mxu0 0.0
  %1527 = vmatpush1.msra.mxu0 %v1405
  %1528 = vmatprep.subr.mxu0 0.0
  %1529 = vmatpush1.msra.mxu0 %v1406
  %1530 = vmatprep.subr.mxu0 0.0
  %1531 = vmatpush1.msra.mxu0 %v1407
  %1532 = vmatprep.subr.mxu0 0.0
  %1533 = vmatpush1.msra.mxu0 %v1408
  %1534 = vmatprep.subr.mxu0 0.0
  %1535 = vmatpush1.msra.mxu0 %v1409
  %1536 = vmatprep.subr.mxu0 0.0
  %1537 = vmatpush1.msra.mxu0 %v1410
  %1538 = vmatprep.subr.mxu0 0.0
  %1539 = vmatpush1.msra.mxu0 %v1411
  %1540 = vmatprep.subr.mxu0 0.0
  %1541 = vmatpush1.msra.mxu0 %v1412
  %1542 = vmatprep.subr.mxu0 0.0
  %1543 = vmatpush1.msra.mxu0 %v1413
  %1544 = vmatprep.subr.mxu0 0.0
  %1545 = vmatpush1.msra.mxu0 %v1414
  %1546 = vmatprep.subr.mxu0 0.0
  %1547 = vmatpush1.msra.mxu0 %v1415
  %1548 = vmatprep.mubr.f32.mxu0 %v24
  %1549 = vmatmul.mubr.f32.gmra.mrb[0].mxu0 %v23
  %v1550 = vpop.f32.mrb[0].mxu0
  %v1551 = vadd.f32 0.0, %v1550
  %v1552 = vpop.f32.mrb[0].mxu0
  %1553 = vmatprep.mubr.f32.mxu0 %v31
  %1554 = vmatmul.mubr.f32.gmra.mrb[0].mxu0 %v30
  %v1555 = vpop.f32.mrb[0].mxu0
  %v1556 = vadd.f32 0.0, %v1555
  %v1557 = vpop.f32.mrb[0].mxu0
  %1558 = vmatprep.mubr.f32.mxu0 %v38
  %1559 = vmatmul.mubr.f32.gmra.mrb[0].mxu0 %v37
  %v1560 = vpop.f32.mrb[0].mxu0
  %v1561 = vadd.f32 0.0, %v1560
  %v1562 = vpop.f32.mrb[0].mxu0
  %1563 = vmatprep.mubr.f32.mxu0 %v45
  %1564 = vmatmul.mubr.f32.gmra.mrb[0].mxu0 %v44
  %v1565 = vpop.f32.mrb[0].mxu0
  %v1566 = vadd.f32 0.0, %v1565
  %v1567 = vpop.f32.mrb[0].mxu0
  %1568 = vdwg.mxu0
  %1569 = vmatprep.subr.mxu0 0.0
  %1570 = vmatpush1.msra.mxu0 %v1416
  %1571 = vmatprep.subr.mxu0 0.0
  %1572 = vmatpush1.msra.mxu0 %v1417
  %1573 = vmatprep.subr.mxu0 0.0
  %1574 = vmatpush1.msra.mxu0 %v1418
  %1575 = vmatprep.subr.mxu0 0.0
  %1576 = vmatpush1.msra.mxu0 %v1419
  %1577 = vmatprep.subr.mxu0 0.0
  %1578 = vmatpush1.msra.mxu0 %v1420
  %1579 = vmatprep.subr.mxu0 0.0
  %1580 = vmatpush1.msra.mxu0 %v1421
  %1581 = vmatprep.subr.mxu0 0.0
  %1582 = vmatpush1.msra.mxu0 %v1422
  %1583 = vmatprep.subr.mxu0 0.0
  %1584 = vmatpush1.msra.mxu0 %v1423
  %1585 = vmatprep.subr.mxu0 0.0
  %1586 = vmatpush1.msra.mxu0 %v1424
  %1587 = vmatprep.subr.mxu0 0.0
  %1588 = vmatpush1.msra.mxu0 %v1425
  %1589 = vmatprep.subr.mxu0 0.0
  %1590 = vmatpush1.msra.mxu0 %v1426
  %1591 = vmatprep.subr.mxu0 0.0
  %1592 = vmatpush1.msra.mxu0 %v1427
  %1593 = vmatprep.subr.mxu0 0.0
  %1594 = vmatpush1.msra.mxu0 %v1428
  %1595 = vmatprep.subr.mxu0 0.0
  %1596 = vmatpush1.msra.mxu0 %v1429
  %1597 = vmatprep.subr.mxu0 0.0
  %1598 = vmatpush1.msra.mxu0 %v1430
  %1599 = vmatprep.subr.mxu0 0.0
  %1600 = vmatpush1.msra.mxu0 %v1431
  %1601 = vmatprep.subr.mxu0 0.0
  %1602 = vmatpush1.msra.mxu0 %v1432
  %1603 = vmatprep.subr.mxu0 0.0
  %1604 = vmatpush1.msra.mxu0 %v1433
  %1605 = vmatprep.subr.mxu0 0.0
  %1606 = vmatpush1.msra.mxu0 %v1434
  %1607 = vmatprep.subr.mxu0 0.0
  %1608 = vmatpush1.msra.mxu0 %v1435
  %1609 = vmatprep.subr.mxu0 0.0
  %1610 = vmatpush1.msra.mxu0 %v1436
  %1611 = vmatprep.subr.mxu0 0.0
  %1612 = vmatpush1.msra.mxu0 %v1437
  %1613 = vmatprep.subr.mxu0 0.0
  %1614 = vmatpush1.msra.mxu0 %v1438
  %1615 = vmatprep.subr.mxu0 0.0
  %1616 = vmatpush1.msra.mxu0 %v1439
  %1617 = vmatprep.subr.mxu0 0.0
  %1618 = vmatpush1.msra.mxu0 %v1440
  %1619 = vmatprep.subr.mxu0 0.0
  %1620 = vmatpush1.msra.mxu0 %v1441
  %1621 = vmatprep.subr.mxu0 0.0
  %1622 = vmatpush1.msra.mxu0 %v1442
  %1623 = vmatprep.subr.mxu0 0.0
  %1624 = vmatpush1.msra.mxu0 %v1443
  %1625 = vmatprep.subr.mxu0 0.0
  %1626 = vmatpush1.msra.mxu0 %v1444
  %1627 = vmatprep.subr.mxu0 0.0
  %1628 = vmatpush1.msra.mxu0 %v1445
  %1629 = vmatprep.subr.mxu0 0.0
  %1630 = vmatpush1.msra.mxu0 %v1446
  %1631 = vmatprep.subr.mxu0 0.0
  %1632 = vmatpush1.msra.mxu0 %v1447
  %1633 = vmatprep.mubr.f32.mxu0 %v26
  %1634 = vmatmul.mubr.f32.gmra.mrb[0].mxu0 %v25
  %v1635 = vpop.f32.mrb[0].mxu0
  %v1636 = vadd.f32 %v1551, %v1635
  %v1637 = vpop.f32.mrb[0].mxu0
  %1638 = vmatprep.mubr.f32.mxu0 %v33
  %1639 = vmatmul.mubr.f32.gmra.mrb[0].mxu0 %v32
  %v1640 = vpop.f32.mrb[0].mxu0
  %v1641 = vadd.f32 %v1556, %v1640
  %v1642 = vpop.f32.mrb[0].mxu0
  %1643 = vmatprep.mubr.f32.mxu0 %v40
  %1644 = vmatmul.mubr.f32.gmra.mrb[0].mxu0 %v39
  %v1645 = vpop.f32.mrb[0].mxu0
  %v1646 = vadd.f32 %v1561, %v1645
  %v1647 = vpop.f32.mrb[0].mxu0
  %1648 = vmatprep.mubr.f32.mxu0 %v47
  %1649 = vmatmul.mubr.f32.gmra.mrb[0].mxu0 %v46
  %v1650 = vpop.f32.mrb[0].mxu0
  %v1651 = vadd.f32 %v1566, %v1650
  %v1652 = vpop.f32.mrb[0].mxu0
  %1653 = vdwg.mxu0
  %1654 = vmatprep.subr.mxu0 0.0
  %1655 = vmatpush1.msra.mxu0 %v1448
  %1656 = vmatprep.subr.mxu0 0.0
  %1657 = vmatpush1.msra.mxu0 %v1449
  %1658 = vmatprep.subr.mxu0 0.0
  %1659 = vmatpush1.msra.mxu0 %v1450
  %1660 = vmatprep.subr.mxu0 0.0
  %1661 = vmatpush1.msra.mxu0 %v1451
  %1662 = vmatprep.subr.mxu0 0.0
  %1663 = vmatpush1.msra.mxu0 %v1452
  %1664 = vmatprep.subr.mxu0 0.0
  %1665 = vmatpush1.msra.mxu0 %v1453
  %1666 = vmatprep.subr.mxu0 0.0
  %1667 = vmatpush1.msra.mxu0 %v1454
  %1668 = vmatprep.subr.mxu0 0.0
  %1669 = vmatpush1.msra.mxu0 %v1455
  %1670 = vmatprep.subr.mxu0 0.0
  %1671 = vmatpush1.msra.mxu0 %v1456
  %1672 = vmatprep.subr.mxu0 0.0
  %1673 = vmatpush1.msra.mxu0 %v1457
  %1674 = vmatprep.subr.mxu0 0.0
  %1675 = vmatpush1.msra.mxu0 %v1458
  %1676 = vmatprep.subr.mxu0 0.0
  %1677 = vmatpush1.msra.mxu0 %v1459
  %1678 = vmatprep.subr.mxu0 0.0
  %1679 = vmatpush1.msra.mxu0 %v1460
  %1680 = vmatprep.subr.mxu0 0.0
  %1681 = vmatpush1.msra.mxu0 %v1461
  %1682 = vmatprep.subr.mxu0 0.0
  %1683 = vmatpush1.msra.mxu0 %v1462
  %1684 = vmatprep.subr.mxu0 0.0
  %1685 = vmatpush1.msra.mxu0 %v1463
  %1686 = vmatprep.subr.mxu0 0.0
  %1687 = vmatpush1.msra.mxu0 %v1464
  %1688 = vmatprep.subr.mxu0 0.0
  %1689 = vmatpush1.msra.mxu0 %v1465
  %1690 = vmatprep.subr.mxu0 0.0
  %1691 = vmatpush1.msra.mxu0 %v1466
  %1692 = vmatprep.subr.mxu0 0.0
  %1693 = vmatpush1.msra.mxu0 %v1467
  %1694 = vmatprep.subr.mxu0 0.0
  %1695 = vmatpush1.msra.mxu0 %v1468
  %1696 = vmatprep.subr.mxu0 0.0
  %1697 = vmatpush1.msra.mxu0 %v1469
  %1698 = vmatprep.subr.mxu0 0.0
  %1699 = vmatpush1.msra.mxu0 %v1470
  %1700 = vmatprep.subr.mxu0 0.0
  %1701 = vmatpush1.msra.mxu0 %v1471
  %1702 = vmatprep.subr.mxu0 0.0
  %1703 = vmatpush1.msra.mxu0 %v1472
  %1704 = vmatprep.subr.mxu0 0.0
  %1705 = vmatpush1.msra.mxu0 %v1473
  %1706 = vmatprep.subr.mxu0 0.0
  %1707 = vmatpush1.msra.mxu0 %v1474
  %1708 = vmatprep.subr.mxu0 0.0
  %1709 = vmatpush1.msra.mxu0 %v1475
  %1710 = vmatprep.subr.mxu0 0.0
  %1711 = vmatpush1.msra.mxu0 %v1476
  %1712 = vmatprep.subr.mxu0 0.0
  %1713 = vmatpush1.msra.mxu0 %v1477
  %1714 = vmatprep.subr.mxu0 0.0
  %1715 = vmatpush1.msra.mxu0 %v1478
  %1716 = vmatprep.subr.mxu0 0.0
  %1717 = vmatpush1.msra.mxu0 %v1479
  %1718 = vmatprep.mubr.f32.mxu0 %v28
  %1719 = vmatmul.mubr.f32.gmra.mrb[0].mxu0 %v27
  %v1720 = vpop.f32.mrb[0].mxu0
  %v1721 = vadd.f32 %v1636, %v1720
  %v1722 = vpop.f32.mrb[0].mxu0
  %1723 = vmatprep.mubr.f32.mxu0 %v35
  %1724 = vmatmul.mubr.f32.gmra.mrb[0].mxu0 %v34
  %v1725 = vpop.f32.mrb[0].mxu0
  %v1726 = vadd.f32 %v1641, %v1725
  %v1727 = vpop.f32.mrb[0].mxu0
  %1728 = vmatprep.mubr.f32.mxu0 %v42
  %1729 = vmatmul.mubr.f32.gmra.mrb[0].mxu0 %v41
  %v1730 = vpop.f32.mrb[0].mxu0
  %v1731 = vadd.f32 %v1646, %v1730
  %v1732 = vpop.f32.mrb[0].mxu0
  %1733 = vmatprep.mubr.f32.mxu0 %v49
  %1734 = vmatmul.mubr.f32.gmra.mrb[0].mxu0 %v48
  %v1735 = vpop.f32.mrb[0].mxu0
  %v1736 = vadd.f32 %v1651, %v1735
  %v1737 = vpop.f32.mrb[0].mxu0
  %1738 = vdwg.mxu0
  %1739 = vmatprep.subr.mxu0 0.0
  %1740 = vmatpush1.msra.mxu0 %v1480
  %1741 = vmatprep.subr.mxu0 0.0
  %1742 = vmatpush1.msra.mxu0 %v1481
  %1743 = vmatprep.subr.mxu0 0.0
  %1744 = vmatpush1.msra.mxu0 %v1482
  %1745 = vmatprep.subr.mxu0 0.0
  %1746 = vmatpush1.msra.mxu0 %v1483
  %1747 = vmatprep.subr.mxu0 0.0
  %1748 = vmatpush1.msra.mxu0 0.0
  %1749 = vmatprep.subr.mxu0 0.0
  %1750 = vmatpush1.msra.mxu0 0.0
  %1751 = vmatprep.subr.mxu0 0.0
  %1752 = vmatpush1.msra.mxu0 0.0
  %1753 = vmatprep.subr.mxu0 0.0
  %1754 = vmatpush1.msra.mxu0 0.0
  %1755 = vmatprep.subr.mxu0 0.0
  %1756 = vmatpush1.msra.mxu0 0.0
  %1757 = vmatprep.subr.mxu0 0.0
  %1758 = vmatpush1.msra.mxu0 0.0
  %1759 = vmatprep.subr.mxu0 0.0
  %1760 = vmatpush1.msra.mxu0 0.0
  %1761 = vmatprep.subr.mxu0 0.0
  %1762 = vmatpush1.msra.mxu0 0.0
  %1763 = vmatprep.subr.mxu0 0.0
  %1764 = vmatpush1.msra.mxu0 0.0
  %1765 = vmatprep.subr.mxu0 0.0
  %1766 = vmatpush1.msra.mxu0 0.0
  %1767 = vmatprep.subr.mxu0 0.0
  %1768 = vmatpush1.msra.mxu0 0.0
  %1769 = vmatprep.subr.mxu0 0.0
  %1770 = vmatpush1.msra.mxu0 0.0
  %1771 = vmatprep.subr.mxu0 0.0
  %1772 = vmatpush1.msra.mxu0 0.0
  %1773 = vmatprep.subr.mxu0 0.0
  %1774 = vmatpush1.msra.mxu0 0.0
  %1775 = vmatprep.subr.mxu0 0.0
  %1776 = vmatpush1.msra.mxu0 0.0
  %1777 = vmatprep.subr.mxu0 0.0
  %1778 = vmatpush1.msra.mxu0 0.0
  %1779 = vmatprep.subr.mxu0 0.0
  %1780 = vmatpush1.msra.mxu0 0.0
  %1781 = vmatprep.subr.mxu0 0.0
  %1782 = vmatpush1.msra.mxu0 0.0
  %1783 = vmatprep.subr.mxu0 0.0
  %1784 = vmatpush1.msra.mxu0 0.0
  %1785 = vmatprep.subr.mxu0 0.0
  %1786 = vmatpush1.msra.mxu0 0.0
  %1787 = vmatprep.subr.mxu0 0.0
  %1788 = vmatpush1.msra.mxu0 0.0
  %1789 = vmatprep.subr.mxu0 0.0
  %1790 = vmatpush1.msra.mxu0 0.0
  %1791 = vmatprep.subr.mxu0 0.0
  %1792 = vmatpush1.msra.mxu0 0.0
  %1793 = vmatprep.subr.mxu0 0.0
  %1794 = vmatpush1.msra.mxu0 0.0
  %1795 = vmatprep.subr.mxu0 0.0
  %1796 = vmatpush1.msra.mxu0 0.0
  %1797 = vmatprep.subr.mxu0 0.0
  %1798 = vmatpush1.msra.mxu0 0.0
  %1799 = vmatprep.subr.mxu0 0.0
  %1800 = vmatpush1.msra.mxu0 0.0
  %1801 = vmatprep.subr.mxu0 0.0
  %1802 = vmatpush1.msra.mxu0 0.0
  %1803 = vmatprep.mubr.f32.mxu0 0.0
  %1804 = vmatmul.mubr.f32.gmra.mrb[0].mxu0 %v153
  %v1805 = vpop.f32.mrb[0].mxu0
  %v1806 = vadd.f32 %v1721, %v1805
  %v1807 = vpop.f32.mrb[0].mxu0
  %1808 = vmatprep.mubr.f32.mxu0 0.0
  %1809 = vmatmul.mubr.f32.gmra.mrb[0].mxu0 %v156
  %v1810 = vpop.f32.mrb[0].mxu0
  %v1811 = vadd.f32 %v1726, %v1810
  %v1812 = vpop.f32.mrb[0].mxu0
  %1813 = vmatprep.mubr.f32.mxu0 0.0
  %1814 = vmatmul.mubr.f32.gmra.mrb[0].mxu0 %v159
  %v1815 = vpop.f32.mrb[0].mxu0
  %v1816 = vadd.f32 %v1731, %v1815
  %v1817 = vpop.f32.mrb[0].mxu0
  %1818 = vmatprep.mubr.f32.mxu0 0.0
  %1819 = vmatmul.mubr.f32.gmra.mrb[0].mxu0 %v162
  %v1820 = vpop.f32.mrb[0].mxu0
  %v1821 = vadd.f32 %v1736, %v1820
  %v1822 = vpop.f32.mrb[0].mxu0
  %1823 = vdwg.mxu0
  %v1824 = vmax.f32 %v486, %v926
  %v1825 = vmax.f32 %v491, %v931
  %v1826 = vmax.f32 %v496, %v936
  %v1827 = vmax.f32 %v501, %v941
  %v1828 = vmax.f32 %v1366, %v1806
  %v1829 = vmax.f32 %v1371, %v1811
  %v1830 = vmax.f32 %v1376, %v1816
  %v1831 = vmax.f32 %v1381, %v1821
  %v1832 = vmax.f32 %v1824, %v1828
  %v1833 = vmax.f32 %v1825, %v1829
  %v1834 = vmax.f32 %v1826, %v1830
  %v1835 = vmax.f32 %v1827, %v1831
  %v1836 = vld [vmem:[%s1] sm:$0xff]
  %v1837 = vld [vmem:[%s1 + $0x8] sm:$0xff]
  %v1838 = vld [vmem:[%s1 + $0x10] sm:$0xff]
  %v1839 = vld [vmem:[%s1 + $0x18] sm:$0xff]
  %1841 = vset.pattern.permute.xlu0 0
  %1842 = vperm.xlu0 %1841, %v1836
  %v1843 = vpop.permute.xlu0 %1842
  %1846 = vset.pattern.permute.xlu0 0
  %1847 = vperm.xlu0 %1846, %v1837
  %v1848 = vpop.permute.xlu0 %1847
  %1851 = vset.pattern.permute.xlu0 0
  %1852 = vperm.xlu0 %1851, %v1838
  %v1853 = vpop.permute.xlu0 %1852
  %1856 = vset.pattern.permute.xlu0 0
  %1857 = vperm.xlu0 %1856, %v1839
  %v1858 = vpop.permute.xlu0 %1857
  %v1860 = vadd.f32 %v1832, %v1843
  %v1861 = vadd.f32 %v1833, %v1848
  %v1862 = vadd.f32 %v1834, %v1853
  %v1863 = vadd.f32 %v1835, %v1858
  %1864 = vst [vmem:[%s6] sm:$0xff] %v1860
  %1865 = vst [vmem:[%s6 + $0x8] sm:$0xff] %v1861
  %1866 = vst [vmem:[%s6 + $0x10] sm:$0xff] %v1862
  %1867 = vst [vmem:[%s6 + $0x18] sm:$0xff] %v1863
  // Predicated region
  $region26: #{forward.5} parent=0 // pred_check
    _
  $region27: #{forward.5} parent=0 // pred_check_branch
    %1869 = sbr.rel (0) target = $region29
  $region28: #{forward.5} parent=0 // pred_region
    _
  $region29: #{forward.5} parent=0 // pred_fallthru
    _
  // Predicated region
  $region30: #{forward.5} parent=0 // pred_check
    _
  $region31: #{forward.5} parent=0 // pred_check_branch
    %1871 = sbr.rel (0) target = $region33
  $region32: #{forward.5} parent=0 // pred_region
    _
  $region33: #{forward.5} parent=0 // pred_fallthru
    _

// kernel: forward.6
$region0: #{forward.6}
  #allocation0 [shape = 'u32[]', space=smem, size = 0x4, offset = 0x4, fixed_abs, tag = 'smem constant byte address 0x4 - core index']
  #allocation1 [shape = 'u32[144,128]{1,0:T(1,128)}', space=vmem, size = 0x12000, scoped, tag = 'internal scratch']
  %s0 = inlined_call_operand.vmem [shape: f32[64,800], index: 0, kind: input, shape index: {}]
  %s1 = inlined_call_operand.vmem [shape: f32[64,1], index: 1, kind: input, shape index: {}]
  %s2 = inlined_call_operand.vmem [shape: f32[800,32], index: 2, kind: input, shape index: {}]
  %s3 = inlined_call_operand.vmem [shape: f32[800,32], index: 3, kind: input, shape index: {}]
  %s4 = inlined_call_operand.vmem [shape: f32[800,32], index: 4, kind: input, shape index: {}]
  %s5 = inlined_call_operand.vmem [shape: f32[800,32], index: 5, kind: input, shape index: {}]
  %s6 = inlined_call_operand.vmem [shape: f32[64,32], index: 6, kind: output, shape index: {}]
  %s7 = sld [smem:[#allocation0]]
  $region34: #{forward.6} parent=0
    _
  %s9 = ssub.s32 1, %s7
  %s10 = scalar_select 0, %s9, %s7
  // Predicated region
  $region2: #{forward.6} parent=0 // pred_check
    _
  $region3: #{forward.6} parent=0 // pred_check_branch
    %12 = sbr.rel (0) target = $region5
  $region4: #{forward.6} parent=0 // pred_region
    _
  $region5: #{forward.6} parent=0 // pred_fallthru
    _
  // Predicated region
  $region6: #{forward.6} parent=0 // pred_check
    _
  $region7: #{forward.6} parent=0 // pred_check_branch
    %14 = sbr.rel (0) target = $region9
  $region8: #{forward.6} parent=0 // pred_region
    _
  $region9: #{forward.6} parent=0 // pred_fallthru
    _
  // Predicated region
  $region10: #{forward.6} parent=0 // pred_check
    _
  $region11: #{forward.6} parent=0 // pred_check_branch
    %16 = sbr.rel (0) target = $region13
  $region12: #{forward.6} parent=0 // pred_region
    _
  $region13: #{forward.6} parent=0 // pred_fallthru
    _
  // Predicated region
  $region14: #{forward.6} parent=0 // pred_check
    _
  $region15: #{forward.6} parent=0 // pred_check_branch
    %18 = sbr.rel (0) target = $region17
  $region16: #{forward.6} parent=0 // pred_region
    _
  $region17: #{forward.6} parent=0 // pred_fallthru
    _
  // Predicated region
  $region18: #{forward.6} parent=0 // pred_check
    _
  $region19: #{forward.6} parent=0 // pred_check_branch
    %20 = sbr.rel (0) target = $region21
  $region20: #{forward.6} parent=0 // pred_region
    _
  $region21: #{forward.6} parent=0 // pred_fallthru
    _
  // Predicated region
  $region22: #{forward.6} parent=0 // pred_check
    _
  $region23: #{forward.6} parent=0 // pred_check_branch
    %22 = sbr.rel (0) target = $region25
  $region24: #{forward.6} parent=0 // pred_region
    _
  $region25: #{forward.6} parent=0 // pred_fallthru
    _
  %v23 = vld [vmem:[%s0] sm:$0xff]
  %v24 = vld [vmem:[%s0 + $0x8] sm:$0xff]
  %v25 = vld [vmem:[%s0 + $0x10] sm:$0xff]
  %v26 = vld [vmem:[%s0 + $0x18] sm:$0xff]
  %v27 = vld [vmem:[%s0 + $0x20] sm:$0xff]
  %v28 = vld [vmem:[%s0 + $0x28] sm:$0xff]
  %v29 = vld [vmem:[%s0 + $0x30] sm:$0xff]
  %v30 = vld [vmem:[%s0 + $0x38] sm:$0xff]
  %v31 = vld [vmem:[%s0 + $0x40] sm:$0xff]
  %v32 = vld [vmem:[%s0 + $0x48] sm:$0xff]
  %v33 = vld [vmem:[%s0 + $0x50] sm:$0xff]
  %v34 = vld [vmem:[%s0 + $0x58] sm:$0xff]
  %v35 = vld [vmem:[%s0 + $0x60] sm:$0xff]
  %v36 = vld [vmem:[%s0 + $0x68] sm:$0xff]
  %v37 = vld [vmem:[%s0 + $0x70] sm:$0xff]
  %v38 = vld [vmem:[%s0 + $0x78] sm:$0xff]
  %v39 = vld [vmem:[%s0 + $0x80] sm:$0xff]
  %v40 = vld [vmem:[%s0 + $0x88] sm:$0xff]
  %v41 = vld [vmem:[%s0 + $0x90] sm:$0xff]
  %v42 = vld [vmem:[%s0 + $0x98] sm:$0xff]
  %v43 = vld [vmem:[%s0 + $0xa0] sm:$0xff]
  %v44 = vld [vmem:[%s0 + $0xa8] sm:$0xff]
  %v45 = vld [vmem:[%s0 + $0xb0] sm:$0xff]
  %v46 = vld [vmem:[%s0 + $0xb8] sm:$0xff]
  %v47 = vld [vmem:[%s0 + $0xc0] sm:$0xff]
  %v48 = vld [vmem:[%s0 + $0xc8] sm:$0xff]
  %v49 = vld [vmem:[%s0 + $0xd0] sm:$0xff]
  %v50 = vld [vmem:[%s0 + $0xd8] sm:$0xff]
  %v51 = vld [vmem:[%s0 + $0xe0] sm:$0xff]
  %v52 = vld [vmem:[%s0 + $0xe8] sm:$0xff]
  %v53 = vld [vmem:[%s0 + $0xf0] sm:$0xff]
  %v54 = vld [vmem:[%s0 + $0xf8] sm:$0xff]
  %v55 = vld [vmem:[%s0 + $0x100] sm:$0xff]
  %v56 = vld [vmem:[%s0 + $0x108] sm:$0xff]
  %v57 = vld [vmem:[%s0 + $0x110] sm:$0xff]
  %v58 = vld [vmem:[%s0 + $0x118] sm:$0xff]
  %v59 = vld [vmem:[%s0 + $0x120] sm:$0xff]
  %v60 = vld [vmem:[%s0 + $0x128] sm:$0xff]
  %v61 = vld [vmem:[%s0 + $0x130] sm:$0xff]
  %v62 = vld [vmem:[%s0 + $0x138] sm:$0xff]
  %v63 = vld [vmem:[%s0 + $0x140] sm:$0xff]
  %v64 = vld [vmem:[%s0 + $0x148] sm:$0xff]
  %v65 = vld [vmem:[%s0 + $0x150] sm:$0xff]
  %v66 = vld [vmem:[%s0 + $0x158] sm:$0xff]
  %v67 = vld [vmem:[%s0 + $0x160] sm:$0xff]
  %v68 = vld [vmem:[%s0 + $0x168] sm:$0xff]
  %v69 = vld [vmem:[%s0 + $0x170] sm:$0xff]
  %v70 = vld [vmem:[%s0 + $0x178] sm:$0xff]
  %v71 = vld [vmem:[%s0 + $0x180] sm:$0xff]
  %v72 = vld [vmem:[%s0 + $0x188] sm:$0xff]
  %v73 = vld [vmem:[%s0 + $0x190] sm:$0xff]
  %v74 = vld [vmem:[%s0 + $0x198] sm:$0xff]
  %v75 = vld [vmem:[%s0 + $0x1a0] sm:$0xff]
  %v76 = vld [vmem:[%s0 + $0x1a8] sm:$0xff]
  %v77 = vld [vmem:[%s0 + $0x1b0] sm:$0xff]
  %v78 = vld [vmem:[%s0 + $0x1b8] sm:$0xff]
  %v79 = vld [vmem:[%s2] sm:$0xff]
  %v80 = vld [vmem:[%s2 + $0x8] sm:$0xff]
  %v81 = vld [vmem:[%s2 + $0x10] sm:$0xff]
  %v82 = vld [vmem:[%s2 + $0x18] sm:$0xff]
  %v83 = vld [vmem:[%s2 + $0x20] sm:$0xff]
  %v84 = vld [vmem:[%s2 + $0x28] sm:$0xff]
  %v85 = vld [vmem:[%s2 + $0x30] sm:$0xff]
  %v86 = vld [vmem:[%s2 + $0x38] sm:$0xff]
  %v87 = vld [vmem:[%s2 + $0x40] sm:$0xff]
  %v88 = vld [vmem:[%s2 + $0x48] sm:$0xff]
  %v89 = vld [vmem:[%s2 + $0x50] sm:$0xff]
  %v90 = vld [vmem:[%s2 + $0x58] sm:$0xff]
  %v91 = vld [vmem:[%s2 + $0x60] sm:$0xff]
  %v92 = vld [vmem:[%s2 + $0x68] sm:$0xff]
  %v93 = vld [vmem:[%s2 + $0x70] sm:$0xff]
  %v94 = vld [vmem:[%s2 + $0x78] sm:$0xff]
  %v95 = vld [vmem:[%s2 + $0x80] sm:$0xff]
  %v96 = vld [vmem:[%s2 + $0x88] sm:$0xff]
  %v97 = vld [vmem:[%s2 + $0x90] sm:$0xff]
  %v98 = vld [vmem:[%s2 + $0x98] sm:$0xff]
  %v99 = vld [vmem:[%s2 + $0xa0] sm:$0xff]
  %v100 = vld [vmem:[%s2 + $0xa8] sm:$0xff]
  %v101 = vld [vmem:[%s2 + $0xb0] sm:$0xff]
  %v102 = vld [vmem:[%s2 + $0xb8] sm:$0xff]
  %v103 = vld [vmem:[%s2 + $0xc0] sm:$0xff]
  %v104 = vld [vmem:[%s2 + $0xc8] sm:$0xff]
  %v105 = vld [vmem:[%s2 + $0xd0] sm:$0xff]
  %v106 = vld [vmem:[%s2 + $0xd8] sm:$0xff]
  %v107 = vld [vmem:[%s2 + $0xe0] sm:$0xff]
  %v108 = vld [vmem:[%s2 + $0xe8] sm:$0xff]
  %v109 = vld [vmem:[%s2 + $0xf0] sm:$0xff]
  %v110 = vld [vmem:[%s2 + $0xf8] sm:$0xff]
  %v111 = vld [vmem:[%s2 + $0x100] sm:$0xff]
  %v112 = vld [vmem:[%s2 + $0x108] sm:$0xff]
  %v113 = vld [vmem:[%s2 + $0x110] sm:$0xff]
  %v114 = vld [vmem:[%s2 + $0x118] sm:$0xff]
  %v115 = vld [vmem:[%s2 + $0x120] sm:$0xff]
  %v116 = vld [vmem:[%s2 + $0x128] sm:$0xff]
  %v117 = vld [vmem:[%s2 + $0x130] sm:$0xff]
  %v118 = vld [vmem:[%s2 + $0x138] sm:$0xff]
  %v119 = vld [vmem:[%s2 + $0x140] sm:$0xff]
  %v120 = vld [vmem:[%s2 + $0x148] sm:$0xff]
  %v121 = vld [vmem:[%s2 + $0x150] sm:$0xff]
  %v122 = vld [vmem:[%s2 + $0x158] sm:$0xff]
  %v123 = vld [vmem:[%s2 + $0x160] sm:$0xff]
  %v124 = vld [vmem:[%s2 + $0x168] sm:$0xff]
  %v125 = vld [vmem:[%s2 + $0x170] sm:$0xff]
  %v126 = vld [vmem:[%s2 + $0x178] sm:$0xff]
  %v127 = vld [vmem:[%s2 + $0x180] sm:$0xff]
  %v128 = vld [vmem:[%s2 + $0x188] sm:$0xff]
  %v129 = vld [vmem:[%s2 + $0x190] sm:$0xff]
  %v130 = vld [vmem:[%s2 + $0x198] sm:$0xff]
  %v131 = vld [vmem:[%s2 + $0x1a0] sm:$0xff]
  %v132 = vld [vmem:[%s2 + $0x1a8] sm:$0xff]
  %v133 = vld [vmem:[%s2 + $0x1b0] sm:$0xff]
  %v134 = vld [vmem:[%s2 + $0x1b8] sm:$0xff]
  %v135 = vld [vmem:[%s2 + $0x1c0] sm:$0xff]
  %v136 = vld [vmem:[%s2 + $0x1c8] sm:$0xff]
  %v137 = vld [vmem:[%s2 + $0x1d0] sm:$0xff]
  %v138 = vld [vmem:[%s2 + $0x1d8] sm:$0xff]
  %v139 = vld [vmem:[%s2 + $0x1e0] sm:$0xff]
  %v140 = vld [vmem:[%s2 + $0x1e8] sm:$0xff]
  %v141 = vld [vmem:[%s2 + $0x1f0] sm:$0xff]
  %v142 = vld [vmem:[%s2 + $0x1f8] sm:$0xff]
  %v143 = vld [vmem:[%s2 + $0x200] sm:$0xff]
  %v144 = vld [vmem:[%s2 + $0x208] sm:$0xff]
  %v145 = vld [vmem:[%s2 + $0x210] sm:$0xff]
  %v146 = vld [vmem:[%s2 + $0x218] sm:$0xff]
  %v147 = vld [vmem:[%s2 + $0x220] sm:$0xff]
  %v148 = vld [vmem:[%s2 + $0x228] sm:$0xff]
  %v149 = vld [vmem:[%s2 + $0x230] sm:$0xff]
  %v150 = vld [vmem:[%s2 + $0x238] sm:$0xff]
  %v151 = vld [vmem:[%s2 + $0x240] sm:$0xff]
  %v152 = vld [vmem:[%s2 + $0x248] sm:$0xff]
  %v153 = vld [vmem:[%s2 + $0x250] sm:$0xff]
  %v154 = vld [vmem:[%s2 + $0x258] sm:$0xff]
  %v155 = vld [vmem:[%s2 + $0x260] sm:$0xff]
  %v156 = vld [vmem:[%s2 + $0x268] sm:$0xff]
  %v157 = vld [vmem:[%s2 + $0x270] sm:$0xff]
  %v158 = vld [vmem:[%s2 + $0x278] sm:$0xff]
  %v159 = vld [vmem:[%s2 + $0x280] sm:$0xff]
  %v160 = vld [vmem:[%s2 + $0x288] sm:$0xff]
  %v161 = vld [vmem:[%s2 + $0x290] sm:$0xff]
  %v162 = vld [vmem:[%s2 + $0x298] sm:$0xff]
  %v163 = vld [vmem:[%s2 + $0x2a0] sm:$0xff]
  %v164 = vld [vmem:[%s2 + $0x2a8] sm:$0xff]
  %v165 = vld [vmem:[%s2 + $0x2b0] sm:$0xff]
  %v166 = vld [vmem:[%s2 + $0x2b8] sm:$0xff]
  %v167 = vld [vmem:[%s2 + $0x2c0] sm:$0xff]
  %v168 = vld [vmem:[%s2 + $0x2c8] sm:$0xff]
  %v169 = vld [vmem:[%s2 + $0x2d0] sm:$0xff]
  %v170 = vld [vmem:[%s2 + $0x2d8] sm:$0xff]
  %v171 = vld [vmem:[%s2 + $0x2e0] sm:$0xff]
  %v172 = vld [vmem:[%s2 + $0x2e8] sm:$0xff]
  %v173 = vld [vmem:[%s2 + $0x2f0] sm:$0xff]
  %v174 = vld [vmem:[%s2 + $0x2f8] sm:$0xff]
  %v175 = vld [vmem:[%s2 + $0x300] sm:$0xff]
  %v176 = vld [vmem:[%s2 + $0x308] sm:$0xff]
  %v177 = vld [vmem:[%s2 + $0x310] sm:$0xff]
  %v178 = vld [vmem:[%s2 + $0x318] sm:$0xff]
  %vm179 = vcmask 261120
  %v181 = vsel %vm179, %v29, 0
  %v184 = vsel %vm179, %v36, 0
  %v187 = vsel %vm179, %v43, 0
  %v190 = vsel %vm179, %v50, 0
  %v193 = vsel %vm179, %v57, 0
  %v196 = vsel %vm179, %v64, 0
  %v199 = vsel %vm179, %v71, 0
  %v202 = vsel %vm179, %v78, 0
  %204 = vmatprep.subr.mxu0 0.0
  %205 = vmatpush1.msra.mxu0 %v79
  %206 = vmatprep.subr.mxu0 0.0
  %207 = vmatpush1.msra.mxu0 %v80
  %208 = vmatprep.subr.mxu0 0.0
  %209 = vmatpush1.msra.mxu0 %v81
  %210 = vmatprep.subr.mxu0 0.0
  %211 = vmatpush1.msra.mxu0 %v82
  %212 = vmatprep.subr.mxu0 0.0
  %213 = vmatpush1.msra.mxu0 %v83
  %214 = vmatprep.subr.mxu0 0.0
  %215 = vmatpush1.msra.mxu0 %v84
  %216 = vmatprep.subr.mxu0 0.0
  %217 = vmatpush1.msra.mxu0 %v85
  %218 = vmatprep.subr.mxu0 0.0
  %219 = vmatpush1.msra.mxu0 %v86
  %220 = vmatprep.subr.mxu0 0.0
  %221 = vmatpush1.msra.mxu0 %v87
  %222 = vmatprep.subr.mxu0 0.0
  %223 = vmatpush1.msra.mxu0 %v88
  %224 = vmatprep.subr.mxu0 0.0
  %225 = vmatpush1.msra.mxu0 %v89
  %226 = vmatprep.subr.mxu0 0.0
  %227 = vmatpush1.msra.mxu0 %v90
  %228 = vmatprep.subr.mxu0 0.0
  %229 = vmatpush1.msra.mxu0 %v91
  %230 = vmatprep.subr.mxu0 0.0
  %231 = vmatpush1.msra.mxu0 %v92
  %232 = vmatprep.subr.mxu0 0.0
  %233 = vmatpush1.msra.mxu0 %v93
  %234 = vmatprep.subr.mxu0 0.0
  %235 = vmatpush1.msra.mxu0 %v94
  %236 = vmatprep.subr.mxu0 0.0
  %237 = vmatpush1.msra.mxu0 %v95
  %238 = vmatprep.subr.mxu0 0.0
  %239 = vmatpush1.msra.mxu0 %v96
  %240 = vmatprep.subr.mxu0 0.0
  %241 = vmatpush1.msra.mxu0 %v97
  %242 = vmatprep.subr.mxu0 0.0
  %243 = vmatpush1.msra.mxu0 %v98
  %244 = vmatprep.subr.mxu0 0.0
  %245 = vmatpush1.msra.mxu0 %v99
  %246 = vmatprep.subr.mxu0 0.0
  %247 = vmatpush1.msra.mxu0 %v100
  %248 = vmatprep.subr.mxu0 0.0
  %249 = vmatpush1.msra.mxu0 %v101
  %250 = vmatprep.subr.mxu0 0.0
  %251 = vmatpush1.msra.mxu0 %v102
  %252 = vmatprep.subr.mxu0 0.0
  %253 = vmatpush1.msra.mxu0 %v103
  %254 = vmatprep.subr.mxu0 0.0
  %255 = vmatpush1.msra.mxu0 %v104
  %256 = vmatprep.subr.mxu0 0.0
  %257 = vmatpush1.msra.mxu0 %v105
  %258 = vmatprep.subr.mxu0 0.0
  %259 = vmatpush1.msra.mxu0 %v106
  %260 = vmatprep.subr.mxu0 0.0
  %261 = vmatpush1.msra.mxu0 %v107
  %262 = vmatprep.subr.mxu0 0.0
  %263 = vmatpush1.msra.mxu0 %v108
  %264 = vmatprep.subr.mxu0 0.0
  %265 = vmatpush1.msra.mxu0 %v109
  %266 = vmatprep.subr.mxu0 0.0
  %267 = vmatpush1.msra.mxu0 %v110
  %268 = vmatprep.mubr.f32.mxu0 %v24
  %269 = vmatmul.mubr.f32.gmra.mrb[0].mxu0 %v23
  %v270 = vpop.f32.mrb[0].mxu0
  %v271 = vadd.f32 0.0, %v270
  %v272 = vpop.f32.mrb[0].mxu0
  %273 = vmatprep.mubr.f32.mxu0 %v31
  %274 = vmatmul.mubr.f32.gmra.mrb[0].mxu0 %v30
  %v275 = vpop.f32.mrb[0].mxu0
  %v276 = vadd.f32 0.0, %v275
  %v277 = vpop.f32.mrb[0].mxu0
  %278 = vmatprep.mubr.f32.mxu0 %v38
  %279 = vmatmul.mubr.f32.gmra.mrb[0].mxu0 %v37
  %v280 = vpop.f32.mrb[0].mxu0
  %v281 = vadd.f32 0.0, %v280
  %v282 = vpop.f32.mrb[0].mxu0
  %283 = vmatprep.mubr.f32.mxu0 %v45
  %284 = vmatmul.mubr.f32.gmra.mrb[0].mxu0 %v44
  %v285 = vpop.f32.mrb[0].mxu0
  %v286 = vadd.f32 0.0, %v285
  %v287 = vpop.f32.mrb[0].mxu0
  %288 = vmatprep.mubr.f32.mxu0 %v52
  %289 = vmatmul.mubr.f32.gmra.mrb[0].mxu0 %v51
  %v290 = vpop.f32.mrb[0].mxu0
  %v291 = vadd.f32 0.0, %v290
  %v292 = vpop.f32.mrb[0].mxu0
  %293 = vmatprep.mubr.f32.mxu0 %v59
  %294 = vmatmul.mubr.f32.gmra.mrb[0].mxu0 %v58
  %v295 = vpop.f32.mrb[0].mxu0
  %v296 = vadd.f32 0.0, %v295
  %v297 = vpop.f32.mrb[0].mxu0
  %298 = vmatprep.mubr.f32.mxu0 %v66
  %299 = vmatmul.mubr.f32.gmra.mrb[0].mxu0 %v65
  %v300 = vpop.f32.mrb[0].mxu0
  %v301 = vadd.f32 0.0, %v300
  %v302 = vpop.f32.mrb[0].mxu0
  %303 = vmatprep.mubr.f32.mxu0 %v73
  %304 = vmatmul.mubr.f32.gmra.mrb[0].mxu0 %v72
  %v305 = vpop.f32.mrb[0].mxu0
  %v306 = vadd.f32 0.0, %v305
  %v307 = vpop.f32.mrb[0].mxu0
  %308 = vdwg.mxu0
  %309 = vmatprep.subr.mxu0 0.0
  %310 = vmatpush1.msra.mxu0 %v111
  %311 = vmatprep.subr.mxu0 0.0
  %312 = vmatpush1.msra.mxu0 %v112
  %313 = vmatprep.subr.mxu0 0.0
  %314 = vmatpush1.msra.mxu0 %v113
  %315 = vmatprep.subr.mxu0 0.0
  %316 = vmatpush1.msra.mxu0 %v114
  %317 = vmatprep.subr.mxu0 0.0
  %318 = vmatpush1.msra.mxu0 %v115
  %319 = vmatprep.subr.mxu0 0.0
  %320 = vmatpush1.msra.mxu0 %v116
  %321 = vmatprep.subr.mxu0 0.0
  %322 = vmatpush1.msra.mxu0 %v117
  %323 = vmatprep.subr.mxu0 0.0
  %324 = vmatpush1.msra.mxu0 %v118
  %325 = vmatprep.subr.mxu0 0.0
  %326 = vmatpush1.msra.mxu0 %v119
  %327 = vmatprep.subr.mxu0 0.0
  %328 = vmatpush1.msra.mxu0 %v120
  %329 = vmatprep.subr.mxu0 0.0
  %330 = vmatpush1.msra.mxu0 %v121
  %331 = vmatprep.subr.mxu0 0.0
  %332 = vmatpush1.msra.mxu0 %v122
  %333 = vmatprep.subr.mxu0 0.0
  %334 = vmatpush1.msra.mxu0 %v123
  %335 = vmatprep.subr.mxu0 0.0
  %336 = vmatpush1.msra.mxu0 %v124
  %337 = vmatprep.subr.mxu0 0.0
  %338 = vmatpush1.msra.mxu0 %v125
  %339 = vmatprep.subr.mxu0 0.0
  %340 = vmatpush1.msra.mxu0 %v126
  %341 = vmatprep.subr.mxu0 0.0
  %342 = vmatpush1.msra.mxu0 %v127
  %343 = vmatprep.subr.mxu0 0.0
  %344 = vmatpush1.msra.mxu0 %v128
  %345 = vmatprep.subr.mxu0 0.0
  %346 = vmatpush1.msra.mxu0 %v129
  %347 = vmatprep.subr.mxu0 0.0
  %348 = vmatpush1.msra.mxu0 %v130
  %349 = vmatprep.subr.mxu0 0.0
  %350 = vmatpush1.msra.mxu0 %v131
  %351 = vmatprep.subr.mxu0 0.0
  %352 = vmatpush1.msra.mxu0 %v132
  %353 = vmatprep.subr.mxu0 0.0
  %354 = vmatpush1.msra.mxu0 %v133
  %355 = vmatprep.subr.mxu0 0.0
  %356 = vmatpush1.msra.mxu0 %v134
  %357 = vmatprep.subr.mxu0 0.0
  %358 = vmatpush1.msra.mxu0 %v135
  %359 = vmatprep.subr.mxu0 0.0
  %360 = vmatpush1.msra.mxu0 %v136
  %361 = vmatprep.subr.mxu0 0.0
  %362 = vmatpush1.msra.mxu0 %v137
  %363 = vmatprep.subr.mxu0 0.0
  %364 = vmatpush1.msra.mxu0 %v138
  %365 = vmatprep.subr.mxu0 0.0
  %366 = vmatpush1.msra.mxu0 %v139
  %367 = vmatprep.subr.mxu0 0.0
  %368 = vmatpush1.msra.mxu0 %v140
  %369 = vmatprep.subr.mxu0 0.0
  %370 = vmatpush1.msra.mxu0 %v141
  %371 = vmatprep.subr.mxu0 0.0
  %372 = vmatpush1.msra.mxu0 %v142
  %373 = vmatprep.mubr.f32.mxu0 %v26
  %374 = vmatmul.mubr.f32.gmra.mrb[0].mxu0 %v25
  %v375 = vpop.f32.mrb[0].mxu0
  %v376 = vadd.f32 %v271, %v375
  %v377 = vpop.f32.mrb[0].mxu0
  %378 = vmatprep.mubr.f32.mxu0 %v33
  %379 = vmatmul.mubr.f32.gmra.mrb[0].mxu0 %v32
  %v380 = vpop.f32.mrb[0].mxu0
  %v381 = vadd.f32 %v276, %v380
  %v382 = vpop.f32.mrb[0].mxu0
  %383 = vmatprep.mubr.f32.mxu0 %v40
  %384 = vmatmul.mubr.f32.gmra.mrb[0].mxu0 %v39
  %v385 = vpop.f32.mrb[0].mxu0
  %v386 = vadd.f32 %v281, %v385
  %v387 = vpop.f32.mrb[0].mxu0
  %388 = vmatprep.mubr.f32.mxu0 %v47
  %389 = vmatmul.mubr.f32.gmra.mrb[0].mxu0 %v46
  %v390 = vpop.f32.mrb[0].mxu0
  %v391 = vadd.f32 %v286, %v390
  %v392 = vpop.f32.mrb[0].mxu0
  %393 = vmatprep.mubr.f32.mxu0 %v54
  %394 = vmatmul.mubr.f32.gmra.mrb[0].mxu0 %v53
  %v395 = vpop.f32.mrb[0].mxu0
  %v396 = vadd.f32 %v291, %v395
  %v397 = vpop.f32.mrb[0].mxu0
  %398 = vmatprep.mubr.f32.mxu0 %v61
  %399 = vmatmul.mubr.f32.gmra.mrb[0].mxu0 %v60
  %v400 = vpop.f32.mrb[0].mxu0
  %v401 = vadd.f32 %v296, %v400
  %v402 = vpop.f32.mrb[0].mxu0
  %403 = vmatprep.mubr.f32.mxu0 %v68
  %404 = vmatmul.mubr.f32.gmra.mrb[0].mxu0 %v67
  %v405 = vpop.f32.mrb[0].mxu0
  %v406 = vadd.f32 %v301, %v405
  %v407 = vpop.f32.mrb[0].mxu0
  %408 = vmatprep.mubr.f32.mxu0 %v75
  %409 = vmatmul.mubr.f32.gmra.mrb[0].mxu0 %v74
  %v410 = vpop.f32.mrb[0].mxu0
  %v411 = vadd.f32 %v306, %v410
  %v412 = vpop.f32.mrb[0].mxu0
  %413 = vdwg.mxu0
  %414 = vmatprep.subr.mxu0 0.0
  %415 = vmatpush1.msra.mxu0 %v143
  %416 = vmatprep.subr.mxu0 0.0
  %417 = vmatpush1.msra.mxu0 %v144
  %418 = vmatprep.subr.mxu0 0.0
  %419 = vmatpush1.msra.mxu0 %v145
  %420 = vmatprep.subr.mxu0 0.0
  %421 = vmatpush1.msra.mxu0 %v146
  %422 = vmatprep.subr.mxu0 0.0
  %423 = vmatpush1.msra.mxu0 %v147
  %424 = vmatprep.subr.mxu0 0.0
  %425 = vmatpush1.msra.mxu0 %v148
  %426 = vmatprep.subr.mxu0 0.0
  %427 = vmatpush1.msra.mxu0 %v149
  %428 = vmatprep.subr.mxu0 0.0
  %429 = vmatpush1.msra.mxu0 %v150
  %430 = vmatprep.subr.mxu0 0.0
  %431 = vmatpush1.msra.mxu0 %v151
  %432 = vmatprep.subr.mxu0 0.0
  %433 = vmatpush1.msra.mxu0 %v152
  %434 = vmatprep.subr.mxu0 0.0
  %435 = vmatpush1.msra.mxu0 %v153
  %436 = vmatprep.subr.mxu0 0.0
  %437 = vmatpush1.msra.mxu0 %v154
  %438 = vmatprep.subr.mxu0 0.0
  %439 = vmatpush1.msra.mxu0 %v155
  %440 = vmatprep.subr.mxu0 0.0
  %441 = vmatpush1.msra.mxu0 %v156
  %442 = vmatprep.subr.mxu0 0.0
  %443 = vmatpush1.msra.mxu0 %v157
  %444 = vmatprep.subr.mxu0 0.0
  %445 = vmatpush1.msra.mxu0 %v158
  %446 = vmatprep.subr.mxu0 0.0
  %447 = vmatpush1.msra.mxu0 %v159
  %448 = vmatprep.subr.mxu0 0.0
  %449 = vmatpush1.msra.mxu0 %v160
  %450 = vmatprep.subr.mxu0 0.0
  %451 = vmatpush1.msra.mxu0 %v161
  %452 = vmatprep.subr.mxu0 0.0
  %453 = vmatpush1.msra.mxu0 %v162
  %454 = vmatprep.subr.mxu0 0.0
  %455 = vmatpush1.msra.mxu0 %v163
  %456 = vmatprep.subr.mxu0 0.0
  %457 = vmatpush1.msra.mxu0 %v164
  %458 = vmatprep.subr.mxu0 0.0
  %459 = vmatpush1.msra.mxu0 %v165
  %460 = vmatprep.subr.mxu0 0.0
  %461 = vmatpush1.msra.mxu0 %v166
  %462 = vmatprep.subr.mxu0 0.0
  %463 = vmatpush1.msra.mxu0 %v167
  %464 = vmatprep.subr.mxu0 0.0
  %465 = vmatpush1.msra.mxu0 %v168
  %466 = vmatprep.subr.mxu0 0.0
  %467 = vmatpush1.msra.mxu0 %v169
  %468 = vmatprep.subr.mxu0 0.0
  %469 = vmatpush1.msra.mxu0 %v170
  %470 = vmatprep.subr.mxu0 0.0
  %471 = vmatpush1.msra.mxu0 %v171
  %472 = vmatprep.subr.mxu0 0.0
  %473 = vmatpush1.msra.mxu0 %v172
  %474 = vmatprep.subr.mxu0 0.0
  %475 = vmatpush1.msra.mxu0 %v173
  %476 = vmatprep.subr.mxu0 0.0
  %477 = vmatpush1.msra.mxu0 %v174
  %478 = vmatprep.mubr.f32.mxu0 %v28
  %479 = vmatmul.mubr.f32.gmra.mrb[0].mxu0 %v27
  %v480 = vpop.f32.mrb[0].mxu0
  %v481 = vadd.f32 %v376, %v480
  %v482 = vpop.f32.mrb[0].mxu0
  %483 = vmatprep.mubr.f32.mxu0 %v35
  %484 = vmatmul.mubr.f32.gmra.mrb[0].mxu0 %v34
  %v485 = vpop.f32.mrb[0].mxu0
  %v486 = vadd.f32 %v381, %v485
  %v487 = vpop.f32.mrb[0].mxu0
  %488 = vmatprep.mubr.f32.mxu0 %v42
  %489 = vmatmul.mubr.f32.gmra.mrb[0].mxu0 %v41
  %v490 = vpop.f32.mrb[0].mxu0
  %v491 = vadd.f32 %v386, %v490
  %v492 = vpop.f32.mrb[0].mxu0
  %493 = vmatprep.mubr.f32.mxu0 %v49
  %494 = vmatmul.mubr.f32.gmra.mrb[0].mxu0 %v48
  %v495 = vpop.f32.mrb[0].mxu0
  %v496 = vadd.f32 %v391, %v495
  %v497 = vpop.f32.mrb[0].mxu0
  %498 = vmatprep.mubr.f32.mxu0 %v56
  %499 = vmatmul.mubr.f32.gmra.mrb[0].mxu0 %v55
  %v500 = vpop.f32.mrb[0].mxu0
  %v501 = vadd.f32 %v396, %v500
  %v502 = vpop.f32.mrb[0].mxu0
  %503 = vmatprep.mubr.f32.mxu0 %v63
  %504 = vmatmul.mubr.f32.gmra.mrb[0].mxu0 %v62
  %v505 = vpop.f32.mrb[0].mxu0
  %v506 = vadd.f32 %v401, %v505
  %v507 = vpop.f32.mrb[0].mxu0
  %508 = vmatprep.mubr.f32.mxu0 %v70
  %509 = vmatmul.mubr.f32.gmra.mrb[0].mxu0 %v69
  %v510 = vpop.f32.mrb[0].mxu0
  %v511 = vadd.f32 %v406, %v510
  %v512 = vpop.f32.mrb[0].mxu0
  %513 = vmatprep.mubr.f32.mxu0 %v77
  %514 = vmatmul.mubr.f32.gmra.mrb[0].mxu0 %v76
  %v515 = vpop.f32.mrb[0].mxu0
  %v516 = vadd.f32 %v411, %v515
  %v517 = vpop.f32.mrb[0].mxu0
  %518 = vdwg.mxu0
  %519 = vmatprep.subr.mxu0 0.0
  %520 = vmatpush1.msra.mxu0 %v175
  %521 = vmatprep.subr.mxu0 0.0
  %522 = vmatpush1.msra.mxu0 %v176
  %523 = vmatprep.subr.mxu0 0.0
  %524 = vmatpush1.msra.mxu0 %v177
  %525 = vmatprep.subr.mxu0 0.0
  %526 = vmatpush1.msra.mxu0 %v178
  %527 = vmatprep.subr.mxu0 0.0
  %528 = vmatpush1.msra.mxu0 0.0
  %529 = vmatprep.subr.mxu0 0.0
  %530 = vmatpush1.msra.mxu0 0.0
  %531 = vmatprep.subr.mxu0 0.0
  %532 = vmatpush1.msra.mxu0 0.0
  %533 = vmatprep.subr.mxu0 0.0
  %534 = vmatpush1.msra.mxu0 0.0
  %535 = vmatprep.subr.mxu0 0.0
  %536 = vmatpush1.msra.mxu0 0.0
  %537 = vmatprep.subr.mxu0 0.0
  %538 = vmatpush1.msra.mxu0 0.0
  %539 = vmatprep.subr.mxu0 0.0
  %540 = vmatpush1.msra.mxu0 0.0
  %541 = vmatprep.subr.mxu0 0.0
  %542 = vmatpush1.msra.mxu0 0.0
  %543 = vmatprep.subr.mxu0 0.0
  %544 = vmatpush1.msra.mxu0 0.0
  %545 = vmatprep.subr.mxu0 0.0
  %546 = vmatpush1.msra.mxu0 0.0
  %547 = vmatprep.subr.mxu0 0.0
  %548 = vmatpush1.msra.mxu0 0.0
  %549 = vmatprep.subr.mxu0 0.0
  %550 = vmatpush1.msra.mxu0 0.0
  %551 = vmatprep.subr.mxu0 0.0
  %552 = vmatpush1.msra.mxu0 0.0
  %553 = vmatprep.subr.mxu0 0.0
  %554 = vmatpush1.msra.mxu0 0.0
  %555 = vmatprep.subr.mxu0 0.0
  %556 = vmatpush1.msra.mxu0 0.0
  %557 = vmatprep.subr.mxu0 0.0
  %558 = vmatpush1.msra.mxu0 0.0
  %559 = vmatprep.subr.mxu0 0.0
  %560 = vmatpush1.msra.mxu0 0.0
  %561 = vmatprep.subr.mxu0 0.0
  %562 = vmatpush1.msra.mxu0 0.0
  %563 = vmatprep.subr.mxu0 0.0
  %564 = vmatpush1.msra.mxu0 0.0
  %565 = vmatprep.subr.mxu0 0.0
  %566 = vmatpush1.msra.mxu0 0.0
  %567 = vmatprep.subr.mxu0 0.0
  %568 = vmatpush1.msra.mxu0 0.0
  %569 = vmatprep.subr.mxu0 0.0
  %570 = vmatpush1.msra.mxu0 0.0
  %571 = vmatprep.subr.mxu0 0.0
  %572 = vmatpush1.msra.mxu0 0.0
  %573 = vmatprep.subr.mxu0 0.0
  %574 = vmatpush1.msra.mxu0 0.0
  %575 = vmatprep.subr.mxu0 0.0
  %576 = vmatpush1.msra.mxu0 0.0
  %577 = vmatprep.subr.mxu0 0.0
  %578 = vmatpush1.msra.mxu0 0.0
  %579 = vmatprep.subr.mxu0 0.0
  %580 = vmatpush1.msra.mxu0 0.0
  %581 = vmatprep.subr.mxu0 0.0
  %582 = vmatpush1.msra.mxu0 0.0
  %583 = vmatprep.mubr.f32.mxu0 0.0
  %584 = vmatmul.mubr.f32.gmra.mrb[0].mxu0 %v181
  %v585 = vpop.f32.mrb[0].mxu0
  %v586 = vadd.f32 %v481, %v585
  %v587 = vpop.f32.mrb[0].mxu0
  %588 = vmatprep.mubr.f32.mxu0 0.0
  %589 = vmatmul.mubr.f32.gmra.mrb[0].mxu0 %v184
  %v590 = vpop.f32.mrb[0].mxu0
  %v591 = vadd.f32 %v486, %v590
  %v592 = vpop.f32.mrb[0].mxu0
  %593 = vmatprep.mubr.f32.mxu0 0.0
  %594 = vmatmul.mubr.f32.gmra.mrb[0].mxu0 %v187
  %v595 = vpop.f32.mrb[0].mxu0
  %v596 = vadd.f32 %v491, %v595
  %v597 = vpop.f32.mrb[0].mxu0
  %598 = vmatprep.mubr.f32.mxu0 0.0
  %599 = vmatmul.mubr.f32.gmra.mrb[0].mxu0 %v190
  %v600 = vpop.f32.mrb[0].mxu0
  %v601 = vadd.f32 %v496, %v600
  %v602 = vpop.f32.mrb[0].mxu0
  %603 = vmatprep.mubr.f32.mxu0 0.0
  %604 = vmatmul.mubr.f32.gmra.mrb[0].mxu0 %v193
  %v605 = vpop.f32.mrb[0].mxu0
  %v606 = vadd.f32 %v501, %v605
  %v607 = vpop.f32.mrb[0].mxu0
  %608 = vmatprep.mubr.f32.mxu0 0.0
  %609 = vmatmul.mubr.f32.gmra.mrb[0].mxu0 %v196
  %v610 = vpop.f32.mrb[0].mxu0
  %v611 = vadd.f32 %v506, %v610
  %v612 = vpop.f32.mrb[0].mxu0
  %613 = vmatprep.mubr.f32.mxu0 0.0
  %614 = vmatmul.mubr.f32.gmra.mrb[0].mxu0 %v199
  %v615 = vpop.f32.mrb[0].mxu0
  %v616 = vadd.f32 %v511, %v615
  %v617 = vpop.f32.mrb[0].mxu0
  %618 = vmatprep.mubr.f32.mxu0 0.0
  %619 = vmatmul.mubr.f32.gmra.mrb[0].mxu0 %v202
  %v620 = vpop.f32.mrb[0].mxu0
  %v621 = vadd.f32 %v516, %v620
  %v622 = vpop.f32.mrb[0].mxu0
  %623 = vdwg.mxu0
  %v624 = vld [vmem:[%s3] sm:$0xff]
  %v625 = vld [vmem:[%s3 + $0x8] sm:$0xff]
  %v626 = vld [vmem:[%s3 + $0x10] sm:$0xff]
  %v627 = vld [vmem:[%s3 + $0x18] sm:$0xff]
  %v628 = vld [vmem:[%s3 + $0x20] sm:$0xff]
  %v629 = vld [vmem:[%s3 + $0x28] sm:$0xff]
  %v630 = vld [vmem:[%s3 + $0x30] sm:$0xff]
  %v631 = vld [vmem:[%s3 + $0x38] sm:$0xff]
  %v632 = vld [vmem:[%s3 + $0x40] sm:$0xff]
  %v633 = vld [vmem:[%s3 + $0x48] sm:$0xff]
  %v634 = vld [vmem:[%s3 + $0x50] sm:$0xff]
  %v635 = vld [vmem:[%s3 + $0x58] sm:$0xff]
  %v636 = vld [vmem:[%s3 + $0x60] sm:$0xff]
  %v637 = vld [vmem:[%s3 + $0x68] sm:$0xff]
  %v638 = vld [vmem:[%s3 + $0x70] sm:$0xff]
  %v639 = vld [vmem:[%s3 + $0x78] sm:$0xff]
  %v640 = vld [vmem:[%s3 + $0x80] sm:$0xff]
  %v641 = vld [vmem:[%s3 + $0x88] sm:$0xff]
  %v642 = vld [vmem:[%s3 + $0x90] sm:$0xff]
  %v643 = vld [vmem:[%s3 + $0x98] sm:$0xff]
  %v644 = vld [vmem:[%s3 + $0xa0] sm:$0xff]
  %v645 = vld [vmem:[%s3 + $0xa8] sm:$0xff]
  %v646 = vld [vmem:[%s3 + $0xb0] sm:$0xff]
  %v647 = vld [vmem:[%s3 + $0xb8] sm:$0xff]
  %v648 = vld [vmem:[%s3 + $0xc0] sm:$0xff]
  %v649 = vld [vmem:[%s3 + $0xc8] sm:$0xff]
  %v650 = vld [vmem:[%s3 + $0xd0] sm:$0xff]
  %v651 = vld [vmem:[%s3 + $0xd8] sm:$0xff]
  %v652 = vld [vmem:[%s3 + $0xe0] sm:$0xff]
  %v653 = vld [vmem:[%s3 + $0xe8] sm:$0xff]
  %v654 = vld [vmem:[%s3 + $0xf0] sm:$0xff]
  %v655 = vld [vmem:[%s3 + $0xf8] sm:$0xff]
  %v656 = vld [vmem:[%s3 + $0x100] sm:$0xff]
  %v657 = vld [vmem:[%s3 + $0x108] sm:$0xff]
  %v658 = vld [vmem:[%s3 + $0x110] sm:$0xff]
  %v659 = vld [vmem:[%s3 + $0x118] sm:$0xff]
  %v660 = vld [vmem:[%s3 + $0x120] sm:$0xff]
  %v661 = vld [vmem:[%s3 + $0x128] sm:$0xff]
  %v662 = vld [vmem:[%s3 + $0x130] sm:$0xff]
  %v663 = vld [vmem:[%s3 + $0x138] sm:$0xff]
  %v664 = vld [vmem:[%s3 + $0x140] sm:$0xff]
  %v665 = vld [vmem:[%s3 + $0x148] sm:$0xff]
  %v666 = vld [vmem:[%s3 + $0x150] sm:$0xff]
  %v667 = vld [vmem:[%s3 + $0x158] sm:$0xff]
  %v668 = vld [vmem:[%s3 + $0x160] sm:$0xff]
  %v669 = vld [vmem:[%s3 + $0x168] sm:$0xff]
  %v670 = vld [vmem:[%s3 + $0x170] sm:$0xff]
  %v671 = vld [vmem:[%s3 + $0x178] sm:$0xff]
  %v672 = vld [vmem:[%s3 + $0x180] sm:$0xff]
  %v673 = vld [vmem:[%s3 + $0x188] sm:$0xff]
  %v674 = vld [vmem:[%s3 + $0x190] sm:$0xff]
  %v675 = vld [vmem:[%s3 + $0x198] sm:$0xff]
  %v676 = vld [vmem:[%s3 + $0x1a0] sm:$0xff]
  %v677 = vld [vmem:[%s3 + $0x1a8] sm:$0xff]
  %v678 = vld [vmem:[%s3 + $0x1b0] sm:$0xff]
  %v679 = vld [vmem:[%s3 + $0x1b8] sm:$0xff]
  %v680 = vld [vmem:[%s3 + $0x1c0] sm:$0xff]
  %v681 = vld [vmem:[%s3 + $0x1c8] sm:$0xff]
  %v682 = vld [vmem:[%s3 + $0x1d0] sm:$0xff]
  %v683 = vld [vmem:[%s3 + $0x1d8] sm:$0xff]
  %v684 = vld [vmem:[%s3 + $0x1e0] sm:$0xff]
  %v685 = vld [vmem:[%s3 + $0x1e8] sm:$0xff]
  %v686 = vld [vmem:[%s3 + $0x1f0] sm:$0xff]
  %v687 = vld [vmem:[%s3 + $0x1f8] sm:$0xff]
  %v688 = vld [vmem:[%s3 + $0x200] sm:$0xff]
  %v689 = vld [vmem:[%s3 + $0x208] sm:$0xff]
  %v690 = vld [vmem:[%s3 + $0x210] sm:$0xff]
  %v691 = vld [vmem:[%s3 + $0x218] sm:$0xff]
  %v692 = vld [vmem:[%s3 + $0x220] sm:$0xff]
  %v693 = vld [vmem:[%s3 + $0x228] sm:$0xff]
  %v694 = vld [vmem:[%s3 + $0x230] sm:$0xff]
  %v695 = vld [vmem:[%s3 + $0x238] sm:$0xff]
  %v696 = vld [vmem:[%s3 + $0x240] sm:$0xff]
  %v697 = vld [vmem:[%s3 + $0x248] sm:$0xff]
  %v698 = vld [vmem:[%s3 + $0x250] sm:$0xff]
  %v699 = vld [vmem:[%s3 + $0x258] sm:$0xff]
  %v700 = vld [vmem:[%s3 + $0x260] sm:$0xff]
  %v701 = vld [vmem:[%s3 + $0x268] sm:$0xff]
  %v702 = vld [vmem:[%s3 + $0x270] sm:$0xff]
  %v703 = vld [vmem:[%s3 + $0x278] sm:$0xff]
  %v704 = vld [vmem:[%s3 + $0x280] sm:$0xff]
  %v705 = vld [vmem:[%s3 + $0x288] sm:$0xff]
  %v706 = vld [vmem:[%s3 + $0x290] sm:$0xff]
  %v707 = vld [vmem:[%s3 + $0x298] sm:$0xff]
  %v708 = vld [vmem:[%s3 + $0x2a0] sm:$0xff]
  %v709 = vld [vmem:[%s3 + $0x2a8] sm:$0xff]
  %v710 = vld [vmem:[%s3 + $0x2b0] sm:$0xff]
  %v711 = vld [vmem:[%s3 + $0x2b8] sm:$0xff]
  %v712 = vld [vmem:[%s3 + $0x2c0] sm:$0xff]
  %v713 = vld [vmem:[%s3 + $0x2c8] sm:$0xff]
  %v714 = vld [vmem:[%s3 + $0x2d0] sm:$0xff]
  %v715 = vld [vmem:[%s3 + $0x2d8] sm:$0xff]
  %v716 = vld [vmem:[%s3 + $0x2e0] sm:$0xff]
  %v717 = vld [vmem:[%s3 + $0x2e8] sm:$0xff]
  %v718 = vld [vmem:[%s3 + $0x2f0] sm:$0xff]
  %v719 = vld [vmem:[%s3 + $0x2f8] sm:$0xff]
  %v720 = vld [vmem:[%s3 + $0x300] sm:$0xff]
  %v721 = vld [vmem:[%s3 + $0x308] sm:$0xff]
  %v722 = vld [vmem:[%s3 + $0x310] sm:$0xff]
  %v723 = vld [vmem:[%s3 + $0x318] sm:$0xff]
  %724 = vmatprep.subr.mxu0 0.0
  %725 = vmatpush1.msra.mxu0 %v624
  %726 = vmatprep.subr.mxu0 0.0
  %727 = vmatpush1.msra.mxu0 %v625
  %728 = vmatprep.subr.mxu0 0.0
  %729 = vmatpush1.msra.mxu0 %v626
  %730 = vmatprep.subr.mxu0 0.0
  %731 = vmatpush1.msra.mxu0 %v627
  %732 = vmatprep.subr.mxu0 0.0
  %733 = vmatpush1.msra.mxu0 %v628
  %734 = vmatprep.subr.mxu0 0.0
  %735 = vmatpush1.msra.mxu0 %v629
  %736 = vmatprep.subr.mxu0 0.0
  %737 = vmatpush1.msra.mxu0 %v630
  %738 = vmatprep.subr.mxu0 0.0
  %739 = vmatpush1.msra.mxu0 %v631
  %740 = vmatprep.subr.mxu0 0.0
  %741 = vmatpush1.msra.mxu0 %v632
  %742 = vmatprep.subr.mxu0 0.0
  %743 = vmatpush1.msra.mxu0 %v633
  %744 = vmatprep.subr.mxu0 0.0
  %745 = vmatpush1.msra.mxu0 %v634
  %746 = vmatprep.subr.mxu0 0.0
  %747 = vmatpush1.msra.mxu0 %v635
  %748 = vmatprep.subr.mxu0 0.0
  %749 = vmatpush1.msra.mxu0 %v636
  %750 = vmatprep.subr.mxu0 0.0
  %751 = vmatpush1.msra.mxu0 %v637
  %752 = vmatprep.subr.mxu0 0.0
  %753 = vmatpush1.msra.mxu0 %v638
  %754 = vmatprep.subr.mxu0 0.0
  %755 = vmatpush1.msra.mxu0 %v639
  %756 = vmatprep.subr.mxu0 0.0
  %757 = vmatpush1.msra.mxu0 %v640
  %758 = vmatprep.subr.mxu0 0.0
  %759 = vmatpush1.msra.mxu0 %v641
  %760 = vmatprep.subr.mxu0 0.0
  %761 = vmatpush1.msra.mxu0 %v642
  %762 = vmatprep.subr.mxu0 0.0
  %763 = vmatpush1.msra.mxu0 %v643
  %764 = vmatprep.subr.mxu0 0.0
  %765 = vmatpush1.msra.mxu0 %v644
  %766 = vmatprep.subr.mxu0 0.0
  %767 = vmatpush1.msra.mxu0 %v645
  %768 = vmatprep.subr.mxu0 0.0
  %769 = vmatpush1.msra.mxu0 %v646
  %770 = vmatprep.subr.mxu0 0.0
  %771 = vmatpush1.msra.mxu0 %v647
  %772 = vmatprep.subr.mxu0 0.0
  %773 = vmatpush1.msra.mxu0 %v648
  %774 = vmatprep.subr.mxu0 0.0
  %775 = vmatpush1.msra.mxu0 %v649
  %776 = vmatprep.subr.mxu0 0.0
  %777 = vmatpush1.msra.mxu0 %v650
  %778 = vmatprep.subr.mxu0 0.0
  %779 = vmatpush1.msra.mxu0 %v651
  %780 = vmatprep.subr.mxu0 0.0
  %781 = vmatpush1.msra.mxu0 %v652
  %782 = vmatprep.subr.mxu0 0.0
  %783 = vmatpush1.msra.mxu0 %v653
  %784 = vmatprep.subr.mxu0 0.0
  %785 = vmatpush1.msra.mxu0 %v654
  %786 = vmatprep.subr.mxu0 0.0
  %787 = vmatpush1.msra.mxu0 %v655
  %788 = vmatprep.mubr.f32.mxu0 %v24
  %789 = vmatmul.mubr.f32.gmra.mrb[0].mxu0 %v23
  %v790 = vpop.f32.mrb[0].mxu0
  %v791 = vadd.f32 0.0, %v790
  %v792 = vpop.f32.mrb[0].mxu0
  %793 = vmatprep.mubr.f32.mxu0 %v31
  %794 = vmatmul.mubr.f32.gmra.mrb[0].mxu0 %v30
  %v795 = vpop.f32.mrb[0].mxu0
  %v796 = vadd.f32 0.0, %v795
  %v797 = vpop.f32.mrb[0].mxu0
  %798 = vmatprep.mubr.f32.mxu0 %v38
  %799 = vmatmul.mubr.f32.gmra.mrb[0].mxu0 %v37
  %v800 = vpop.f32.mrb[0].mxu0
  %v801 = vadd.f32 0.0, %v800
  %v802 = vpop.f32.mrb[0].mxu0
  %803 = vmatprep.mubr.f32.mxu0 %v45
  %804 = vmatmul.mubr.f32.gmra.mrb[0].mxu0 %v44
  %v805 = vpop.f32.mrb[0].mxu0
  %v806 = vadd.f32 0.0, %v805
  %v807 = vpop.f32.mrb[0].mxu0
  %808 = vmatprep.mubr.f32.mxu0 %v52
  %809 = vmatmul.mubr.f32.gmra.mrb[0].mxu0 %v51
  %v810 = vpop.f32.mrb[0].mxu0
  %v811 = vadd.f32 0.0, %v810
  %v812 = vpop.f32.mrb[0].mxu0
  %813 = vmatprep.mubr.f32.mxu0 %v59
  %814 = vmatmul.mubr.f32.gmra.mrb[0].mxu0 %v58
  %v815 = vpop.f32.mrb[0].mxu0
  %v816 = vadd.f32 0.0, %v815
  %v817 = vpop.f32.mrb[0].mxu0
  %818 = vmatprep.mubr.f32.mxu0 %v66
  %819 = vmatmul.mubr.f32.gmra.mrb[0].mxu0 %v65
  %v820 = vpop.f32.mrb[0].mxu0
  %v821 = vadd.f32 0.0, %v820
  %v822 = vpop.f32.mrb[0].mxu0
  %823 = vmatprep.mubr.f32.mxu0 %v73
  %824 = vmatmul.mubr.f32.gmra.mrb[0].mxu0 %v72
  %v825 = vpop.f32.mrb[0].mxu0
  %v826 = vadd.f32 0.0, %v825
  %v827 = vpop.f32.mrb[0].mxu0
  %828 = vdwg.mxu0
  %829 = vmatprep.subr.mxu0 0.0
  %830 = vmatpush1.msra.mxu0 %v656
  %831 = vmatprep.subr.mxu0 0.0
  %832 = vmatpush1.msra.mxu0 %v657
  %833 = vmatprep.subr.mxu0 0.0
  %834 = vmatpush1.msra.mxu0 %v658
  %835 = vmatprep.subr.mxu0 0.0
  %836 = vmatpush1.msra.mxu0 %v659
  %837 = vmatprep.subr.mxu0 0.0
  %838 = vmatpush1.msra.mxu0 %v660
  %839 = vmatprep.subr.mxu0 0.0
  %840 = vmatpush1.msra.mxu0 %v661
  %841 = vmatprep.subr.mxu0 0.0
  %842 = vmatpush1.msra.mxu0 %v662
  %843 = vmatprep.subr.mxu0 0.0
  %844 = vmatpush1.msra.mxu0 %v663
  %845 = vmatprep.subr.mxu0 0.0
  %846 = vmatpush1.msra.mxu0 %v664
  %847 = vmatprep.subr.mxu0 0.0
  %848 = vmatpush1.msra.mxu0 %v665
  %849 = vmatprep.subr.mxu0 0.0
  %850 = vmatpush1.msra.mxu0 %v666
  %851 = vmatprep.subr.mxu0 0.0
  %852 = vmatpush1.msra.mxu0 %v667
  %853 = vmatprep.subr.mxu0 0.0
  %854 = vmatpush1.msra.mxu0 %v668
  %855 = vmatprep.subr.mxu0 0.0
  %856 = vmatpush1.msra.mxu0 %v669
  %857 = vmatprep.subr.mxu0 0.0
  %858 = vmatpush1.msra.mxu0 %v670
  %859 = vmatprep.subr.mxu0 0.0
  %860 = vmatpush1.msra.mxu0 %v671
  %861 = vmatprep.subr.mxu0 0.0
  %862 = vmatpush1.msra.mxu0 %v672
  %863 = vmatprep.subr.mxu0 0.0
  %864 = vmatpush1.msra.mxu0 %v673
  %865 = vmatprep.subr.mxu0 0.0
  %866 = vmatpush1.msra.mxu0 %v674
  %867 = vmatprep.subr.mxu0 0.0
  %868 = vmatpush1.msra.mxu0 %v675
  %869 = vmatprep.subr.mxu0 0.0
  %870 = vmatpush1.msra.mxu0 %v676
  %871 = vmatprep.subr.mxu0 0.0
  %872 = vmatpush1.msra.mxu0 %v677
  %873 = vmatprep.subr.mxu0 0.0
  %874 = vmatpush1.msra.mxu0 %v678
  %875 = vmatprep.subr.mxu0 0.0
  %876 = vmatpush1.msra.mxu0 %v679
  %877 = vmatprep.subr.mxu0 0.0
  %878 = vmatpush1.msra.mxu0 %v680
  %879 = vmatprep.subr.mxu0 0.0
  %880 = vmatpush1.msra.mxu0 %v681
  %881 = vmatprep.subr.mxu0 0.0
  %882 = vmatpush1.msra.mxu0 %v682
  %883 = vmatprep.subr.mxu0 0.0
  %884 = vmatpush1.msra.mxu0 %v683
  %885 = vmatprep.subr.mxu0 0.0
  %886 = vmatpush1.msra.mxu0 %v684
  %887 = vmatprep.subr.mxu0 0.0
  %888 = vmatpush1.msra.mxu0 %v685
  %889 = vmatprep.subr.mxu0 0.0
  %890 = vmatpush1.msra.mxu0 %v686
  %891 = vmatprep.subr.mxu0 0.0
  %892 = vmatpush1.msra.mxu0 %v687
  %893 = vmatprep.mubr.f32.mxu0 %v26
  %894 = vmatmul.mubr.f32.gmra.mrb[0].mxu0 %v25
  %v895 = vpop.f32.mrb[0].mxu0
  %v896 = vadd.f32 %v791, %v895
  %v897 = vpop.f32.mrb[0].mxu0
  %898 = vmatprep.mubr.f32.mxu0 %v33
  %899 = vmatmul.mubr.f32.gmra.mrb[0].mxu0 %v32
  %v900 = vpop.f32.mrb[0].mxu0
  %v901 = vadd.f32 %v796, %v900
  %v902 = vpop.f32.mrb[0].mxu0
  %903 = vmatprep.mubr.f32.mxu0 %v40
  %904 = vmatmul.mubr.f32.gmra.mrb[0].mxu0 %v39
  %v905 = vpop.f32.mrb[0].mxu0
  %v906 = vadd.f32 %v801, %v905
  %v907 = vpop.f32.mrb[0].mxu0
  %908 = vmatprep.mubr.f32.mxu0 %v47
  %909 = vmatmul.mubr.f32.gmra.mrb[0].mxu0 %v46
  %v910 = vpop.f32.mrb[0].mxu0
  %v911 = vadd.f32 %v806, %v910
  %v912 = vpop.f32.mrb[0].mxu0
  %913 = vmatprep.mubr.f32.mxu0 %v54
  %914 = vmatmul.mubr.f32.gmra.mrb[0].mxu0 %v53
  %v915 = vpop.f32.mrb[0].mxu0
  %v916 = vadd.f32 %v811, %v915
  %v917 = vpop.f32.mrb[0].mxu0
  %918 = vmatprep.mubr.f32.mxu0 %v61
  %919 = vmatmul.mubr.f32.gmra.mrb[0].mxu0 %v60
  %v920 = vpop.f32.mrb[0].mxu0
  %v921 = vadd.f32 %v816, %v920
  %v922 = vpop.f32.mrb[0].mxu0
  %923 = vmatprep.mubr.f32.mxu0 %v68
  %924 = vmatmul.mubr.f32.gmra.mrb[0].mxu0 %v67
  %v925 = vpop.f32.mrb[0].mxu0
  %v926 = vadd.f32 %v821, %v925
  %v927 = vpop.f32.mrb[0].mxu0
  %928 = vmatprep.mubr.f32.mxu0 %v75
  %929 = vmatmul.mubr.f32.gmra.mrb[0].mxu0 %v74
  %v930 = vpop.f32.mrb[0].mxu0
  %v931 = vadd.f32 %v826, %v930
  %v932 = vpop.f32.mrb[0].mxu0
  %933 = vdwg.mxu0
  %934 = vmatprep.subr.mxu0 0.0
  %935 = vmatpush1.msra.mxu0 %v688
  %936 = vmatprep.subr.mxu0 0.0
  %937 = vmatpush1.msra.mxu0 %v689
  %938 = vmatprep.subr.mxu0 0.0
  %939 = vmatpush1.msra.mxu0 %v690
  %940 = vmatprep.subr.mxu0 0.0
  %941 = vmatpush1.msra.mxu0 %v691
  %942 = vmatprep.subr.mxu0 0.0
  %943 = vmatpush1.msra.mxu0 %v692
  %944 = vmatprep.subr.mxu0 0.0
  %945 = vmatpush1.msra.mxu0 %v693
  %946 = vmatprep.subr.mxu0 0.0
  %947 = vmatpush1.msra.mxu0 %v694
  %948 = vmatprep.subr.mxu0 0.0
  %949 = vmatpush1.msra.mxu0 %v695
  %950 = vmatprep.subr.mxu0 0.0
  %951 = vmatpush1.msra.mxu0 %v696
  %952 = vmatprep.subr.mxu0 0.0
  %953 = vmatpush1.msra.mxu0 %v697
  %954 = vmatprep.subr.mxu0 0.0
  %955 = vmatpush1.msra.mxu0 %v698
  %956 = vmatprep.subr.mxu0 0.0
  %957 = vmatpush1.msra.mxu0 %v699
  %958 = vmatprep.subr.mxu0 0.0
  %959 = vmatpush1.msra.mxu0 %v700
  %960 = vmatprep.subr.mxu0 0.0
  %961 = vmatpush1.msra.mxu0 %v701
  %962 = vmatprep.subr.mxu0 0.0
  %963 = vmatpush1.msra.mxu0 %v702
  %964 = vmatprep.subr.mxu0 0.0
  %965 = vmatpush1.msra.mxu0 %v703
  %966 = vmatprep.subr.mxu0 0.0
  %967 = vmatpush1.msra.mxu0 %v704
  %968 = vmatprep.subr.mxu0 0.0
  %969 = vmatpush1.msra.mxu0 %v705
  %970 = vmatprep.subr.mxu0 0.0
  %971 = vmatpush1.msra.mxu0 %v706
  %972 = vmatprep.subr.mxu0 0.0
  %973 = vmatpush1.msra.mxu0 %v707
  %974 = vmatprep.subr.mxu0 0.0
  %975 = vmatpush1.msra.mxu0 %v708
  %976 = vmatprep.subr.mxu0 0.0
  %977 = vmatpush1.msra.mxu0 %v709
  %978 = vmatprep.subr.mxu0 0.0
  %979 = vmatpush1.msra.mxu0 %v710
  %980 = vmatprep.subr.mxu0 0.0
  %981 = vmatpush1.msra.mxu0 %v711
  %982 = vmatprep.subr.mxu0 0.0
  %983 = vmatpush1.msra.mxu0 %v712
  %984 = vmatprep.subr.mxu0 0.0
  %985 = vmatpush1.msra.mxu0 %v713
  %986 = vmatprep.subr.mxu0 0.0
  %987 = vmatpush1.msra.mxu0 %v714
  %988 = vmatprep.subr.mxu0 0.0
  %989 = vmatpush1.msra.mxu0 %v715
  %990 = vmatprep.subr.mxu0 0.0
  %991 = vmatpush1.msra.mxu0 %v716
  %992 = vmatprep.subr.mxu0 0.0
  %993 = vmatpush1.msra.mxu0 %v717
  %994 = vmatprep.subr.mxu0 0.0
  %995 = vmatpush1.msra.mxu0 %v718
  %996 = vmatprep.subr.mxu0 0.0
  %997 = vmatpush1.msra.mxu0 %v719
  %998 = vmatprep.mubr.f32.mxu0 %v28
  %999 = vmatmul.mubr.f32.gmra.mrb[0].mxu0 %v27
  %v1000 = vpop.f32.mrb[0].mxu0
  %v1001 = vadd.f32 %v896, %v1000
  %v1002 = vpop.f32.mrb[0].mxu0
  %1003 = vmatprep.mubr.f32.mxu0 %v35
  %1004 = vmatmul.mubr.f32.gmra.mrb[0].mxu0 %v34
  %v1005 = vpop.f32.mrb[0].mxu0
  %v1006 = vadd.f32 %v901, %v1005
  %v1007 = vpop.f32.mrb[0].mxu0
  %1008 = vmatprep.mubr.f32.mxu0 %v42
  %1009 = vmatmul.mubr.f32.gmra.mrb[0].mxu0 %v41
  %v1010 = vpop.f32.mrb[0].mxu0
  %v1011 = vadd.f32 %v906, %v1010
  %v1012 = vpop.f32.mrb[0].mxu0
  %1013 = vmatprep.mubr.f32.mxu0 %v49
  %1014 = vmatmul.mubr.f32.gmra.mrb[0].mxu0 %v48
  %v1015 = vpop.f32.mrb[0].mxu0
  %v1016 = vadd.f32 %v911, %v1015
  %v1017 = vpop.f32.mrb[0].mxu0
  %1018 = vmatprep.mubr.f32.mxu0 %v56
  %1019 = vmatmul.mubr.f32.gmra.mrb[0].mxu0 %v55
  %v1020 = vpop.f32.mrb[0].mxu0
  %v1021 = vadd.f32 %v916, %v1020
  %v1022 = vpop.f32.mrb[0].mxu0
  %1023 = vmatprep.mubr.f32.mxu0 %v63
  %1024 = vmatmul.mubr.f32.gmra.mrb[0].mxu0 %v62
  %v1025 = vpop.f32.mrb[0].mxu0
  %v1026 = vadd.f32 %v921, %v1025
  %v1027 = vpop.f32.mrb[0].mxu0
  %1028 = vmatprep.mubr.f32.mxu0 %v70
  %1029 = vmatmul.mubr.f32.gmra.mrb[0].mxu0 %v69
  %v1030 = vpop.f32.mrb[0].mxu0
  %v1031 = vadd.f32 %v926, %v1030
  %v1032 = vpop.f32.mrb[0].mxu0
  %1033 = vmatprep.mubr.f32.mxu0 %v77
  %1034 = vmatmul.mubr.f32.gmra.mrb[0].mxu0 %v76
  %v1035 = vpop.f32.mrb[0].mxu0
  %v1036 = vadd.f32 %v931, %v1035
  %v1037 = vpop.f32.mrb[0].mxu0
  %1038 = vdwg.mxu0
  %1039 = vmatprep.subr.mxu0 0.0
  %1040 = vmatpush1.msra.mxu0 %v720
  %1041 = vmatprep.subr.mxu0 0.0
  %1042 = vmatpush1.msra.mxu0 %v721
  %1043 = vmatprep.subr.mxu0 0.0
  %1044 = vmatpush1.msra.mxu0 %v722
  %1045 = vmatprep.subr.mxu0 0.0
  %1046 = vmatpush1.msra.mxu0 %v723
  %1047 = vmatprep.subr.mxu0 0.0
  %1048 = vmatpush1.msra.mxu0 0.0
  %1049 = vmatprep.subr.mxu0 0.0
  %1050 = vmatpush1.msra.mxu0 0.0
  %1051 = vmatprep.subr.mxu0 0.0
  %1052 = vmatpush1.msra.mxu0 0.0
  %1053 = vmatprep.subr.mxu0 0.0
  %1054 = vmatpush1.msra.mxu0 0.0
  %1055 = vmatprep.subr.mxu0 0.0
  %1056 = vmatpush1.msra.mxu0 0.0
  %1057 = vmatprep.subr.mxu0 0.0
  %1058 = vmatpush1.msra.mxu0 0.0
  %1059 = vmatprep.subr.mxu0 0.0
  %1060 = vmatpush1.msra.mxu0 0.0
  %1061 = vmatprep.subr.mxu0 0.0
  %1062 = vmatpush1.msra.mxu0 0.0
  %1063 = vmatprep.subr.mxu0 0.0
  %1064 = vmatpush1.msra.mxu0 0.0
  %1065 = vmatprep.subr.mxu0 0.0
  %1066 = vmatpush1.msra.mxu0 0.0
  %1067 = vmatprep.subr.mxu0 0.0
  %1068 = vmatpush1.msra.mxu0 0.0
  %1069 = vmatprep.subr.mxu0 0.0
  %1070 = vmatpush1.msra.mxu0 0.0
  %1071 = vmatprep.subr.mxu0 0.0
  %1072 = vmatpush1.msra.mxu0 0.0
  %1073 = vmatprep.subr.mxu0 0.0
  %1074 = vmatpush1.msra.mxu0 0.0
  %1075 = vmatprep.subr.mxu0 0.0
  %1076 = vmatpush1.msra.mxu0 0.0
  %1077 = vmatprep.subr.mxu0 0.0
  %1078 = vmatpush1.msra.mxu0 0.0
  %1079 = vmatprep.subr.mxu0 0.0
  %1080 = vmatpush1.msra.mxu0 0.0
  %1081 = vmatprep.subr.mxu0 0.0
  %1082 = vmatpush1.msra.mxu0 0.0
  %1083 = vmatprep.subr.mxu0 0.0
  %1084 = vmatpush1.msra.mxu0 0.0
  %1085 = vmatprep.subr.mxu0 0.0
  %1086 = vmatpush1.msra.mxu0 0.0
  %1087 = vmatprep.subr.mxu0 0.0
  %1088 = vmatpush1.msra.mxu0 0.0
  %1089 = vmatprep.subr.mxu0 0.0
  %1090 = vmatpush1.msra.mxu0 0.0
  %1091 = vmatprep.subr.mxu0 0.0
  %1092 = vmatpush1.msra.mxu0 0.0
  %1093 = vmatprep.subr.mxu0 0.0
  %1094 = vmatpush1.msra.mxu0 0.0
  %1095 = vmatprep.subr.mxu0 0.0
  %1096 = vmatpush1.msra.mxu0 0.0
  %1097 = vmatprep.subr.mxu0 0.0
  %1098 = vmatpush1.msra.mxu0 0.0
  %1099 = vmatprep.subr.mxu0 0.0
  %1100 = vmatpush1.msra.mxu0 0.0
  %1101 = vmatprep.subr.mxu0 0.0
  %1102 = vmatpush1.msra.mxu0 0.0
  %1103 = vmatprep.mubr.f32.mxu0 0.0
  %1104 = vmatmul.mubr.f32.gmra.mrb[0].mxu0 %v181
  %v1105 = vpop.f32.mrb[0].mxu0
  %v1106 = vadd.f32 %v1001, %v1105
  %v1107 = vpop.f32.mrb[0].mxu0
  %1108 = vmatprep.mubr.f32.mxu0 0.0
  %1109 = vmatmul.mubr.f32.gmra.mrb[0].mxu0 %v184
  %v1110 = vpop.f32.mrb[0].mxu0
  %v1111 = vadd.f32 %v1006, %v1110
  %v1112 = vpop.f32.mrb[0].mxu0
  %1113 = vmatprep.mubr.f32.mxu0 0.0
  %1114 = vmatmul.mubr.f32.gmra.mrb[0].mxu0 %v187
  %v1115 = vpop.f32.mrb[0].mxu0
  %v1116 = vadd.f32 %v1011, %v1115
  %v1117 = vpop.f32.mrb[0].mxu0
  %1118 = vmatprep.mubr.f32.mxu0 0.0
  %1119 = vmatmul.mubr.f32.gmra.mrb[0].mxu0 %v190
  %v1120 = vpop.f32.mrb[0].mxu0
  %v1121 = vadd.f32 %v1016, %v1120
  %v1122 = vpop.f32.mrb[0].mxu0
  %1123 = vmatprep.mubr.f32.mxu0 0.0
  %1124 = vmatmul.mubr.f32.gmra.mrb[0].mxu0 %v193
  %v1125 = vpop.f32.mrb[0].mxu0
  %v1126 = vadd.f32 %v1021, %v1125
  %v1127 = vpop.f32.mrb[0].mxu0
  %1128 = vmatprep.mubr.f32.mxu0 0.0
  %1129 = vmatmul.mubr.f32.gmra.mrb[0].mxu0 %v196
  %v1130 = vpop.f32.mrb[0].mxu0
  %v1131 = vadd.f32 %v1026, %v1130
  %v1132 = vpop.f32.mrb[0].mxu0
  %1133 = vmatprep.mubr.f32.mxu0 0.0
  %1134 = vmatmul.mubr.f32.gmra.mrb[0].mxu0 %v199
  %v1135 = vpop.f32.mrb[0].mxu0
  %v1136 = vadd.f32 %v1031, %v1135
  %v1137 = vpop.f32.mrb[0].mxu0
  %1138 = vmatprep.mubr.f32.mxu0 0.0
  %1139 = vmatmul.mubr.f32.gmra.mrb[0].mxu0 %v202
  %v1140 = vpop.f32.mrb[0].mxu0
  %v1141 = vadd.f32 %v1036, %v1140
  %v1142 = vpop.f32.mrb[0].mxu0
  %1143 = vdwg.mxu0
  %v1144 = vld [vmem:[%s4] sm:$0xff]
  %v1145 = vld [vmem:[%s4 + $0x8] sm:$0xff]
  %v1146 = vld [vmem:[%s4 + $0x10] sm:$0xff]
  %v1147 = vld [vmem:[%s4 + $0x18] sm:$0xff]
  %v1148 = vld [vmem:[%s4 + $0x20] sm:$0xff]
  %v1149 = vld [vmem:[%s4 + $0x28] sm:$0xff]
  %v1150 = vld [vmem:[%s4 + $0x30] sm:$0xff]
  %v1151 = vld [vmem:[%s4 + $0x38] sm:$0xff]
  %v1152 = vld [vmem:[%s4 + $0x40] sm:$0xff]
  %v1153 = vld [vmem:[%s4 + $0x48] sm:$0xff]
  %v1154 = vld [vmem:[%s4 + $0x50] sm:$0xff]
  %v1155 = vld [vmem:[%s4 + $0x58] sm:$0xff]
  %v1156 = vld [vmem:[%s4 + $0x60] sm:$0xff]
  %v1157 = vld [vmem:[%s4 + $0x68] sm:$0xff]
  %v1158 = vld [vmem:[%s4 + $0x70] sm:$0xff]
  %v1159 = vld [vmem:[%s4 + $0x78] sm:$0xff]
  %v1160 = vld [vmem:[%s4 + $0x80] sm:$0xff]
  %v1161 = vld [vmem:[%s4 + $0x88] sm:$0xff]
  %v1162 = vld [vmem:[%s4 + $0x90] sm:$0xff]
  %v1163 = vld [vmem:[%s4 + $0x98] sm:$0xff]
  %v1164 = vld [vmem:[%s4 + $0xa0] sm:$0xff]
  %v1165 = vld [vmem:[%s4 + $0xa8] sm:$0xff]
  %v1166 = vld [vmem:[%s4 + $0xb0] sm:$0xff]
  %v1167 = vld [vmem:[%s4 + $0xb8] sm:$0xff]
  %v1168 = vld [vmem:[%s4 + $0xc0] sm:$0xff]
  %v1169 = vld [vmem:[%s4 + $0xc8] sm:$0xff]
  %v1170 = vld [vmem:[%s4 + $0xd0] sm:$0xff]
  %v1171 = vld [vmem:[%s4 + $0xd8] sm:$0xff]
  %v1172 = vld [vmem:[%s4 + $0xe0] sm:$0xff]
  %v1173 = vld [vmem:[%s4 + $0xe8] sm:$0xff]
  %v1174 = vld [vmem:[%s4 + $0xf0] sm:$0xff]
  %v1175 = vld [vmem:[%s4 + $0xf8] sm:$0xff]
  %v1176 = vld [vmem:[%s4 + $0x100] sm:$0xff]
  %v1177 = vld [vmem:[%s4 + $0x108] sm:$0xff]
  %v1178 = vld [vmem:[%s4 + $0x110] sm:$0xff]
  %v1179 = vld [vmem:[%s4 + $0x118] sm:$0xff]
  %v1180 = vld [vmem:[%s4 + $0x120] sm:$0xff]
  %v1181 = vld [vmem:[%s4 + $0x128] sm:$0xff]
  %v1182 = vld [vmem:[%s4 + $0x130] sm:$0xff]
  %v1183 = vld [vmem:[%s4 + $0x138] sm:$0xff]
  %v1184 = vld [vmem:[%s4 + $0x140] sm:$0xff]
  %v1185 = vld [vmem:[%s4 + $0x148] sm:$0xff]
  %v1186 = vld [vmem:[%s4 + $0x150] sm:$0xff]
  %v1187 = vld [vmem:[%s4 + $0x158] sm:$0xff]
  %v1188 = vld [vmem:[%s4 + $0x160] sm:$0xff]
  %v1189 = vld [vmem:[%s4 + $0x168] sm:$0xff]
  %v1190 = vld [vmem:[%s4 + $0x170] sm:$0xff]
  %v1191 = vld [vmem:[%s4 + $0x178] sm:$0xff]
  %v1192 = vld [vmem:[%s4 + $0x180] sm:$0xff]
  %v1193 = vld [vmem:[%s4 + $0x188] sm:$0xff]
  %v1194 = vld [vmem:[%s4 + $0x190] sm:$0xff]
  %v1195 = vld [vmem:[%s4 + $0x198] sm:$0xff]
  %v1196 = vld [vmem:[%s4 + $0x1a0] sm:$0xff]
  %v1197 = vld [vmem:[%s4 + $0x1a8] sm:$0xff]
  %v1198 = vld [vmem:[%s4 + $0x1b0] sm:$0xff]
  %v1199 = vld [vmem:[%s4 + $0x1b8] sm:$0xff]
  %v1200 = vld [vmem:[%s4 + $0x1c0] sm:$0xff]
  %v1201 = vld [vmem:[%s4 + $0x1c8] sm:$0xff]
  %v1202 = vld [vmem:[%s4 + $0x1d0] sm:$0xff]
  %v1203 = vld [vmem:[%s4 + $0x1d8] sm:$0xff]
  %v1204 = vld [vmem:[%s4 + $0x1e0] sm:$0xff]
  %v1205 = vld [vmem:[%s4 + $0x1e8] sm:$0xff]
  %v1206 = vld [vmem:[%s4 + $0x1f0] sm:$0xff]
  %v1207 = vld [vmem:[%s4 + $0x1f8] sm:$0xff]
  %v1208 = vld [vmem:[%s4 + $0x200] sm:$0xff]
  %v1209 = vld [vmem:[%s4 + $0x208] sm:$0xff]
  %v1210 = vld [vmem:[%s4 + $0x210] sm:$0xff]
  %v1211 = vld [vmem:[%s4 + $0x218] sm:$0xff]
  %v1212 = vld [vmem:[%s4 + $0x220] sm:$0xff]
  %v1213 = vld [vmem:[%s4 + $0x228] sm:$0xff]
  %v1214 = vld [vmem:[%s4 + $0x230] sm:$0xff]
  %v1215 = vld [vmem:[%s4 + $0x238] sm:$0xff]
  %v1216 = vld [vmem:[%s4 + $0x240] sm:$0xff]
  %v1217 = vld [vmem:[%s4 + $0x248] sm:$0xff]
  %v1218 = vld [vmem:[%s4 + $0x250] sm:$0xff]
  %v1219 = vld [vmem:[%s4 + $0x258] sm:$0xff]
  %v1220 = vld [vmem:[%s4 + $0x260] sm:$0xff]
  %v1221 = vld [vmem:[%s4 + $0x268] sm:$0xff]
  %v1222 = vld [vmem:[%s4 + $0x270] sm:$0xff]
  %v1223 = vld [vmem:[%s4 + $0x278] sm:$0xff]
  %v1224 = vld [vmem:[%s4 + $0x280] sm:$0xff]
  %v1225 = vld [vmem:[%s4 + $0x288] sm:$0xff]
  %v1226 = vld [vmem:[%s4 + $0x290] sm:$0xff]
  %v1227 = vld [vmem:[%s4 + $0x298] sm:$0xff]
  %v1228 = vld [vmem:[%s4 + $0x2a0] sm:$0xff]
  %v1229 = vld [vmem:[%s4 + $0x2a8] sm:$0xff]
  %v1230 = vld [vmem:[%s4 + $0x2b0] sm:$0xff]
  %v1231 = vld [vmem:[%s4 + $0x2b8] sm:$0xff]
  %v1232 = vld [vmem:[%s4 + $0x2c0] sm:$0xff]
  %v1233 = vld [vmem:[%s4 + $0x2c8] sm:$0xff]
  %v1234 = vld [vmem:[%s4 + $0x2d0] sm:$0xff]
  %v1235 = vld [vmem:[%s4 + $0x2d8] sm:$0xff]
  %v1236 = vld [vmem:[%s4 + $0x2e0] sm:$0xff]
  %v1237 = vld [vmem:[%s4 + $0x2e8] sm:$0xff]
  %v1238 = vld [vmem:[%s4 + $0x2f0] sm:$0xff]
  %v1239 = vld [vmem:[%s4 + $0x2f8] sm:$0xff]
  %v1240 = vld [vmem:[%s4 + $0x300] sm:$0xff]
  %v1241 = vld [vmem:[%s4 + $0x308] sm:$0xff]
  %v1242 = vld [vmem:[%s4 + $0x310] sm:$0xff]
  %v1243 = vld [vmem:[%s4 + $0x318] sm:$0xff]
  %1244 = vmatprep.subr.mxu0 0.0
  %1245 = vmatpush1.msra.mxu0 %v1144
  %1246 = vmatprep.subr.mxu0 0.0
  %1247 = vmatpush1.msra.mxu0 %v1145
  %1248 = vmatprep.subr.mxu0 0.0
  %1249 = vmatpush1.msra.mxu0 %v1146
  %1250 = vmatprep.subr.mxu0 0.0
  %1251 = vmatpush1.msra.mxu0 %v1147
  %1252 = vmatprep.subr.mxu0 0.0
  %1253 = vmatpush1.msra.mxu0 %v1148
  %1254 = vmatprep.subr.mxu0 0.0
  %1255 = vmatpush1.msra.mxu0 %v1149
  %1256 = vmatprep.subr.mxu0 0.0
  %1257 = vmatpush1.msra.mxu0 %v1150
  %1258 = vmatprep.subr.mxu0 0.0
  %1259 = vmatpush1.msra.mxu0 %v1151
  %1260 = vmatprep.subr.mxu0 0.0
  %1261 = vmatpush1.msra.mxu0 %v1152
  %1262 = vmatprep.subr.mxu0 0.0
  %1263 = vmatpush1.msra.mxu0 %v1153
  %1264 = vmatprep.subr.mxu0 0.0
  %1265 = vmatpush1.msra.mxu0 %v1154
  %1266 = vmatprep.subr.mxu0 0.0
  %1267 = vmatpush1.msra.mxu0 %v1155
  %1268 = vmatprep.subr.mxu0 0.0
  %1269 = vmatpush1.msra.mxu0 %v1156
  %1270 = vmatprep.subr.mxu0 0.0
  %1271 = vmatpush1.msra.mxu0 %v1157
  %1272 = vmatprep.subr.mxu0 0.0
  %1273 = vmatpush1.msra.mxu0 %v1158
  %1274 = vmatprep.subr.mxu0 0.0
  %1275 = vmatpush1.msra.mxu0 %v1159
  %1276 = vmatprep.subr.mxu0 0.0
  %1277 = vmatpush1.msra.mxu0 %v1160
  %1278 = vmatprep.subr.mxu0 0.0
  %1279 = vmatpush1.msra.mxu0 %v1161
  %1280 = vmatprep.subr.mxu0 0.0
  %1281 = vmatpush1.msra.mxu0 %v1162
  %1282 = vmatprep.subr.mxu0 0.0
  %1283 = vmatpush1.msra.mxu0 %v1163
  %1284 = vmatprep.subr.mxu0 0.0
  %1285 = vmatpush1.msra.mxu0 %v1164
  %1286 = vmatprep.subr.mxu0 0.0
  %1287 = vmatpush1.msra.mxu0 %v1165
  %1288 = vmatprep.subr.mxu0 0.0
  %1289 = vmatpush1.msra.mxu0 %v1166
  %1290 = vmatprep.subr.mxu0 0.0
  %1291 = vmatpush1.msra.mxu0 %v1167
  %1292 = vmatprep.subr.mxu0 0.0
  %1293 = vmatpush1.msra.mxu0 %v1168
  %1294 = vmatprep.subr.mxu0 0.0
  %1295 = vmatpush1.msra.mxu0 %v1169
  %1296 = vmatprep.subr.mxu0 0.0
  %1297 = vmatpush1.msra.mxu0 %v1170
  %1298 = vmatprep.subr.mxu0 0.0
  %1299 = vmatpush1.msra.mxu0 %v1171
  %1300 = vmatprep.subr.mxu0 0.0
  %1301 = vmatpush1.msra.mxu0 %v1172
  %1302 = vmatprep.subr.mxu0 0.0
  %1303 = vmatpush1.msra.mxu0 %v1173
  %1304 = vmatprep.subr.mxu0 0.0
  %1305 = vmatpush1.msra.mxu0 %v1174
  %1306 = vmatprep.subr.mxu0 0.0
  %1307 = vmatpush1.msra.mxu0 %v1175
  %1308 = vmatprep.mubr.f32.mxu0 %v24
  %1309 = vmatmul.mubr.f32.gmra.mrb[0].mxu0 %v23
  %v1310 = vpop.f32.mrb[0].mxu0
  %v1311 = vadd.f32 0.0, %v1310
  %v1312 = vpop.f32.mrb[0].mxu0
  %1313 = vmatprep.mubr.f32.mxu0 %v31
  %1314 = vmatmul.mubr.f32.gmra.mrb[0].mxu0 %v30
  %v1315 = vpop.f32.mrb[0].mxu0
  %v1316 = vadd.f32 0.0, %v1315
  %v1317 = vpop.f32.mrb[0].mxu0
  %1318 = vmatprep.mubr.f32.mxu0 %v38
  %1319 = vmatmul.mubr.f32.gmra.mrb[0].mxu0 %v37
  %v1320 = vpop.f32.mrb[0].mxu0
  %v1321 = vadd.f32 0.0, %v1320
  %v1322 = vpop.f32.mrb[0].mxu0
  %1323 = vmatprep.mubr.f32.mxu0 %v45
  %1324 = vmatmul.mubr.f32.gmra.mrb[0].mxu0 %v44
  %v1325 = vpop.f32.mrb[0].mxu0
  %v1326 = vadd.f32 0.0, %v1325
  %v1327 = vpop.f32.mrb[0].mxu0
  %1328 = vmatprep.mubr.f32.mxu0 %v52
  %1329 = vmatmul.mubr.f32.gmra.mrb[0].mxu0 %v51
  %v1330 = vpop.f32.mrb[0].mxu0
  %v1331 = vadd.f32 0.0, %v1330
  %v1332 = vpop.f32.mrb[0].mxu0
  %1333 = vmatprep.mubr.f32.mxu0 %v59
  %1334 = vmatmul.mubr.f32.gmra.mrb[0].mxu0 %v58
  %v1335 = vpop.f32.mrb[0].mxu0
  %v1336 = vadd.f32 0.0, %v1335
  %v1337 = vpop.f32.mrb[0].mxu0
  %1338 = vmatprep.mubr.f32.mxu0 %v66
  %1339 = vmatmul.mubr.f32.gmra.mrb[0].mxu0 %v65
  %v1340 = vpop.f32.mrb[0].mxu0
  %v1341 = vadd.f32 0.0, %v1340
  %v1342 = vpop.f32.mrb[0].mxu0
  %1343 = vmatprep.mubr.f32.mxu0 %v73
  %1344 = vmatmul.mubr.f32.gmra.mrb[0].mxu0 %v72
  %v1345 = vpop.f32.mrb[0].mxu0
  %v1346 = vadd.f32 0.0, %v1345
  %v1347 = vpop.f32.mrb[0].mxu0
  %1348 = vdwg.mxu0
  %1349 = vmatprep.subr.mxu0 0.0
  %1350 = vmatpush1.msra.mxu0 %v1176
  %1351 = vmatprep.subr.mxu0 0.0
  %1352 = vmatpush1.msra.mxu0 %v1177
  %1353 = vmatprep.subr.mxu0 0.0
  %1354 = vmatpush1.msra.mxu0 %v1178
  %1355 = vmatprep.subr.mxu0 0.0
  %1356 = vmatpush1.msra.mxu0 %v1179
  %1357 = vmatprep.subr.mxu0 0.0
  %1358 = vmatpush1.msra.mxu0 %v1180
  %1359 = vmatprep.subr.mxu0 0.0
  %1360 = vmatpush1.msra.mxu0 %v1181
  %1361 = vmatprep.subr.mxu0 0.0
  %1362 = vmatpush1.msra.mxu0 %v1182
  %1363 = vmatprep.subr.mxu0 0.0
  %1364 = vmatpush1.msra.mxu0 %v1183
  %1365 = vmatprep.subr.mxu0 0.0
  %1366 = vmatpush1.msra.mxu0 %v1184
  %1367 = vmatprep.subr.mxu0 0.0
  %1368 = vmatpush1.msra.mxu0 %v1185
  %1369 = vmatprep.subr.mxu0 0.0
  %1370 = vmatpush1.msra.mxu0 %v1186
  %1371 = vmatprep.subr.mxu0 0.0
  %1372 = vmatpush1.msra.mxu0 %v1187
  %1373 = vmatprep.subr.mxu0 0.0
  %1374 = vmatpush1.msra.mxu0 %v1188
  %1375 = vmatprep.subr.mxu0 0.0
  %1376 = vmatpush1.msra.mxu0 %v1189
  %1377 = vmatprep.subr.mxu0 0.0
  %1378 = vmatpush1.msra.mxu0 %v1190
  %1379 = vmatprep.subr.mxu0 0.0
  %1380 = vmatpush1.msra.mxu0 %v1191
  %1381 = vmatprep.subr.mxu0 0.0
  %1382 = vmatpush1.msra.mxu0 %v1192
  %1383 = vmatprep.subr.mxu0 0.0
  %1384 = vmatpush1.msra.mxu0 %v1193
  %1385 = vmatprep.subr.mxu0 0.0
  %1386 = vmatpush1.msra.mxu0 %v1194
  %1387 = vmatprep.subr.mxu0 0.0
  %1388 = vmatpush1.msra.mxu0 %v1195
  %1389 = vmatprep.subr.mxu0 0.0
  %1390 = vmatpush1.msra.mxu0 %v1196
  %1391 = vmatprep.subr.mxu0 0.0
  %1392 = vmatpush1.msra.mxu0 %v1197
  %1393 = vmatprep.subr.mxu0 0.0
  %1394 = vmatpush1.msra.mxu0 %v1198
  %1395 = vmatprep.subr.mxu0 0.0
  %1396 = vmatpush1.msra.mxu0 %v1199
  %1397 = vmatprep.subr.mxu0 0.0
  %1398 = vmatpush1.msra.mxu0 %v1200
  %1399 = vmatprep.subr.mxu0 0.0
  %1400 = vmatpush1.msra.mxu0 %v1201
  %1401 = vmatprep.subr.mxu0 0.0
  %1402 = vmatpush1.msra.mxu0 %v1202
  %1403 = vmatprep.subr.mxu0 0.0
  %1404 = vmatpush1.msra.mxu0 %v1203
  %1405 = vmatprep.subr.mxu0 0.0
  %1406 = vmatpush1.msra.mxu0 %v1204
  %1407 = vmatprep.subr.mxu0 0.0
  %1408 = vmatpush1.msra.mxu0 %v1205
  %1409 = vmatprep.subr.mxu0 0.0
  %1410 = vmatpush1.msra.mxu0 %v1206
  %1411 = vmatprep.subr.mxu0 0.0
  %1412 = vmatpush1.msra.mxu0 %v1207
  %1413 = vmatprep.mubr.f32.mxu0 %v26
  %1414 = vmatmul.mubr.f32.gmra.mrb[0].mxu0 %v25
  %v1415 = vpop.f32.mrb[0].mxu0
  %v1416 = vadd.f32 %v1311, %v1415
  %v1417 = vpop.f32.mrb[0].mxu0
  %1418 = vmatprep.mubr.f32.mxu0 %v33
  %1419 = vmatmul.mubr.f32.gmra.mrb[0].mxu0 %v32
  %v1420 = vpop.f32.mrb[0].mxu0
  %v1421 = vadd.f32 %v1316, %v1420
  %v1422 = vpop.f32.mrb[0].mxu0
  %1423 = vmatprep.mubr.f32.mxu0 %v40
  %1424 = vmatmul.mubr.f32.gmra.mrb[0].mxu0 %v39
  %v1425 = vpop.f32.mrb[0].mxu0
  %v1426 = vadd.f32 %v1321, %v1425
  %v1427 = vpop.f32.mrb[0].mxu0
  %1428 = vmatprep.mubr.f32.mxu0 %v47
  %1429 = vmatmul.mubr.f32.gmra.mrb[0].mxu0 %v46
  %v1430 = vpop.f32.mrb[0].mxu0
  %v1431 = vadd.f32 %v1326, %v1430
  %v1432 = vpop.f32.mrb[0].mxu0
  %1433 = vmatprep.mubr.f32.mxu0 %v54
  %1434 = vmatmul.mubr.f32.gmra.mrb[0].mxu0 %v53
  %v1435 = vpop.f32.mrb[0].mxu0
  %v1436 = vadd.f32 %v1331, %v1435
  %v1437 = vpop.f32.mrb[0].mxu0
  %1438 = vmatprep.mubr.f32.mxu0 %v61
  %1439 = vmatmul.mubr.f32.gmra.mrb[0].mxu0 %v60
  %v1440 = vpop.f32.mrb[0].mxu0
  %v1441 = vadd.f32 %v1336, %v1440
  %v1442 = vpop.f32.mrb[0].mxu0
  %1443 = vmatprep.mubr.f32.mxu0 %v68
  %1444 = vmatmul.mubr.f32.gmra.mrb[0].mxu0 %v67
  %v1445 = vpop.f32.mrb[0].mxu0
  %v1446 = vadd.f32 %v1341, %v1445
  %v1447 = vpop.f32.mrb[0].mxu0
  %1448 = vmatprep.mubr.f32.mxu0 %v75
  %1449 = vmatmul.mubr.f32.gmra.mrb[0].mxu0 %v74
  %v1450 = vpop.f32.mrb[0].mxu0
  %v1451 = vadd.f32 %v1346, %v1450
  %v1452 = vpop.f32.mrb[0].mxu0
  %1453 = vdwg.mxu0
  %1454 = vmatprep.subr.mxu0 0.0
  %1455 = vmatpush1.msra.mxu0 %v1208
  %1456 = vmatprep.subr.mxu0 0.0
  %1457 = vmatpush1.msra.mxu0 %v1209
  %1458 = vmatprep.subr.mxu0 0.0
  %1459 = vmatpush1.msra.mxu0 %v1210
  %1460 = vmatprep.subr.mxu0 0.0
  %1461 = vmatpush1.msra.mxu0 %v1211
  %1462 = vmatprep.subr.mxu0 0.0
  %1463 = vmatpush1.msra.mxu0 %v1212
  %1464 = vmatprep.subr.mxu0 0.0
  %1465 = vmatpush1.msra.mxu0 %v1213
  %1466 = vmatprep.subr.mxu0 0.0
  %1467 = vmatpush1.msra.mxu0 %v1214
  %1468 = vmatprep.subr.mxu0 0.0
  %1469 = vmatpush1.msra.mxu0 %v1215
  %1470 = vmatprep.subr.mxu0 0.0
  %1471 = vmatpush1.msra.mxu0 %v1216
  %1472 = vmatprep.subr.mxu0 0.0
  %1473 = vmatpush1.msra.mxu0 %v1217
  %1474 = vmatprep.subr.mxu0 0.0
  %1475 = vmatpush1.msra.mxu0 %v1218
  %1476 = vmatprep.subr.mxu0 0.0
  %1477 = vmatpush1.msra.mxu0 %v1219
  %1478 = vmatprep.subr.mxu0 0.0
  %1479 = vmatpush1.msra.mxu0 %v1220
  %1480 = vmatprep.subr.mxu0 0.0
  %1481 = vmatpush1.msra.mxu0 %v1221
  %1482 = vmatprep.subr.mxu0 0.0
  %1483 = vmatpush1.msra.mxu0 %v1222
  %1484 = vmatprep.subr.mxu0 0.0
  %1485 = vmatpush1.msra.mxu0 %v1223
  %1486 = vmatprep.subr.mxu0 0.0
  %1487 = vmatpush1.msra.mxu0 %v1224
  %1488 = vmatprep.subr.mxu0 0.0
  %1489 = vmatpush1.msra.mxu0 %v1225
  %1490 = vmatprep.subr.mxu0 0.0
  %1491 = vmatpush1.msra.mxu0 %v1226
  %1492 = vmatprep.subr.mxu0 0.0
  %1493 = vmatpush1.msra.mxu0 %v1227
  %1494 = vmatprep.subr.mxu0 0.0
  %1495 = vmatpush1.msra.mxu0 %v1228
  %1496 = vmatprep.subr.mxu0 0.0
  %1497 = vmatpush1.msra.mxu0 %v1229
  %1498 = vmatprep.subr.mxu0 0.0
  %1499 = vmatpush1.msra.mxu0 %v1230
  %1500 = vmatprep.subr.mxu0 0.0
  %1501 = vmatpush1.msra.mxu0 %v1231
  %1502 = vmatprep.subr.mxu0 0.0
  %1503 = vmatpush1.msra.mxu0 %v1232
  %1504 = vmatprep.subr.mxu0 0.0
  %1505 = vmatpush1.msra.mxu0 %v1233
  %1506 = vmatprep.subr.mxu0 0.0
  %1507 = vmatpush1.msra.mxu0 %v1234
  %1508 = vmatprep.subr.mxu0 0.0
  %1509 = vmatpush1.msra.mxu0 %v1235
  %1510 = vmatprep.subr.mxu0 0.0
  %1511 = vmatpush1.msra.mxu0 %v1236
  %1512 = vmatprep.subr.mxu0 0.0
  %1513 = vmatpush1.msra.mxu0 %v1237
  %1514 = vmatprep.subr.mxu0 0.0
  %1515 = vmatpush1.msra.mxu0 %v1238
  %1516 = vmatprep.subr.mxu0 0.0
  %1517 = vmatpush1.msra.mxu0 %v1239
  %1518 = vmatprep.mubr.f32.mxu0 %v28
  %1519 = vmatmul.mubr.f32.gmra.mrb[0].mxu0 %v27
  %v1520 = vpop.f32.mrb[0].mxu0
  %v1521 = vadd.f32 %v1416, %v1520
  %v1522 = vpop.f32.mrb[0].mxu0
  %1523 = vmatprep.mubr.f32.mxu0 %v35
  %1524 = vmatmul.mubr.f32.gmra.mrb[0].mxu0 %v34
  %v1525 = vpop.f32.mrb[0].mxu0
  %v1526 = vadd.f32 %v1421, %v1525
  %v1527 = vpop.f32.mrb[0].mxu0
  %1528 = vmatprep.mubr.f32.mxu0 %v42
  %1529 = vmatmul.mubr.f32.gmra.mrb[0].mxu0 %v41
  %v1530 = vpop.f32.mrb[0].mxu0
  %v1531 = vadd.f32 %v1426, %v1530
  %v1532 = vpop.f32.mrb[0].mxu0
  %1533 = vmatprep.mubr.f32.mxu0 %v49
  %1534 = vmatmul.mubr.f32.gmra.mrb[0].mxu0 %v48
  %v1535 = vpop.f32.mrb[0].mxu0
  %v1536 = vadd.f32 %v1431, %v1535
  %v1537 = vpop.f32.mrb[0].mxu0
  %1538 = vmatprep.mubr.f32.mxu0 %v56
  %1539 = vmatmul.mubr.f32.gmra.mrb[0].mxu0 %v55
  %v1540 = vpop.f32.mrb[0].mxu0
  %v1541 = vadd.f32 %v1436, %v1540
  %v1542 = vpop.f32.mrb[0].mxu0
  %1543 = vmatprep.mubr.f32.mxu0 %v63
  %1544 = vmatmul.mubr.f32.gmra.mrb[0].mxu0 %v62
  %v1545 = vpop.f32.mrb[0].mxu0
  %v1546 = vadd.f32 %v1441, %v1545
  %v1547 = vpop.f32.mrb[0].mxu0
  %1548 = vmatprep.mubr.f32.mxu0 %v70
  %1549 = vmatmul.mubr.f32.gmra.mrb[0].mxu0 %v69
  %v1550 = vpop.f32.mrb[0].mxu0
  %v1551 = vadd.f32 %v1446, %v1550
  %v1552 = vpop.f32.mrb[0].mxu0
  %1553 = vmatprep.mubr.f32.mxu0 %v77
  %1554 = vmatmul.mubr.f32.gmra.mrb[0].mxu0 %v76
  %v1555 = vpop.f32.mrb[0].mxu0
  %v1556 = vadd.f32 %v1451, %v1555
  %v1557 = vpop.f32.mrb[0].mxu0
  %1558 = vdwg.mxu0
  %1559 = vmatprep.subr.mxu0 0.0
  %1560 = vmatpush1.msra.mxu0 %v1240
  %1561 = vmatprep.subr.mxu0 0.0
  %1562 = vmatpush1.msra.mxu0 %v1241
  %1563 = vmatprep.subr.mxu0 0.0
  %1564 = vmatpush1.msra.mxu0 %v1242
  %1565 = vmatprep.subr.mxu0 0.0
  %1566 = vmatpush1.msra.mxu0 %v1243
  %1567 = vmatprep.subr.mxu0 0.0
  %1568 = vmatpush1.msra.mxu0 0.0
  %1569 = vmatprep.subr.mxu0 0.0
  %1570 = vmatpush1.msra.mxu0 0.0
  %1571 = vmatprep.subr.mxu0 0.0
  %1572 = vmatpush1.msra.mxu0 0.0
  %1573 = vmatprep.subr.mxu0 0.0
  %1574 = vmatpush1.msra.mxu0 0.0
  %1575 = vmatprep.subr.mxu0 0.0
  %1576 = vmatpush1.msra.mxu0 0.0
  %1577 = vmatprep.subr.mxu0 0.0
  %1578 = vmatpush1.msra.mxu0 0.0
  %1579 = vmatprep.subr.mxu0 0.0
  %1580 = vmatpush1.msra.mxu0 0.0
  %1581 = vmatprep.subr.mxu0 0.0
  %1582 = vmatpush1.msra.mxu0 0.0
  %1583 = vmatprep.subr.mxu0 0.0
  %1584 = vmatpush1.msra.mxu0 0.0
  %1585 = vmatprep.subr.mxu0 0.0
  %1586 = vmatpush1.msra.mxu0 0.0
  %1587 = vmatprep.subr.mxu0 0.0
  %1588 = vmatpush1.msra.mxu0 0.0
  %1589 = vmatprep.subr.mxu0 0.0
  %1590 = vmatpush1.msra.mxu0 0.0
  %1591 = vmatprep.subr.mxu0 0.0
  %1592 = vmatpush1.msra.mxu0 0.0
  %1593 = vmatprep.subr.mxu0 0.0
  %1594 = vmatpush1.msra.mxu0 0.0
  %1595 = vmatprep.subr.mxu0 0.0
  %1596 = vmatpush1.msra.mxu0 0.0
  %1597 = vmatprep.subr.mxu0 0.0
  %1598 = vmatpush1.msra.mxu0 0.0
  %1599 = vmatprep.subr.mxu0 0.0
  %1600 = vmatpush1.msra.mxu0 0.0
  %1601 = vmatprep.subr.mxu0 0.0
  %1602 = vmatpush1.msra.mxu0 0.0
  %1603 = vmatprep.subr.mxu0 0.0
  %1604 = vmatpush1.msra.mxu0 0.0
  %1605 = vmatprep.subr.mxu0 0.0
  %1606 = vmatpush1.msra.mxu0 0.0
  %1607 = vmatprep.subr.mxu0 0.0
  %1608 = vmatpush1.msra.mxu0 0.0
  %1609 = vmatprep.subr.mxu0 0.0
  %1610 = vmatpush1.msra.mxu0 0.0
  %1611 = vmatprep.subr.mxu0 0.0
  %1612 = vmatpush1.msra.mxu0 0.0
  %1613 = vmatprep.subr.mxu0 0.0
  %1614 = vmatpush1.msra.mxu0 0.0
  %1615 = vmatprep.subr.mxu0 0.0
  %1616 = vmatpush1.msra.mxu0 0.0
  %1617 = vmatprep.subr.mxu0 0.0
  %1618 = vmatpush1.msra.mxu0 0.0
  %1619 = vmatprep.subr.mxu0 0.0
  %1620 = vmatpush1.msra.mxu0 0.0
  %1621 = vmatprep.subr.mxu0 0.0
  %1622 = vmatpush1.msra.mxu0 0.0
  %1623 = vmatprep.mubr.f32.mxu0 0.0
  %1624 = vmatmul.mubr.f32.gmra.mrb[0].mxu0 %v181
  %v1625 = vpop.f32.mrb[0].mxu0
  %v1626 = vadd.f32 %v1521, %v1625
  %v1627 = vpop.f32.mrb[0].mxu0
  %1628 = vmatprep.mubr.f32.mxu0 0.0
  %1629 = vmatmul.mubr.f32.gmra.mrb[0].mxu0 %v184
  %v1630 = vpop.f32.mrb[0].mxu0
  %v1631 = vadd.f32 %v1526, %v1630
  %v1632 = vpop.f32.mrb[0].mxu0
  %1633 = vmatprep.mubr.f32.mxu0 0.0
  %1634 = vmatmul.mubr.f32.gmra.mrb[0].mxu0 %v187
  %v1635 = vpop.f32.mrb[0].mxu0
  %v1636 = vadd.f32 %v1531, %v1635
  %v1637 = vpop.f32.mrb[0].mxu0
  %1638 = vmatprep.mubr.f32.mxu0 0.0
  %1639 = vmatmul.mubr.f32.gmra.mrb[0].mxu0 %v190
  %v1640 = vpop.f32.mrb[0].mxu0
  %v1641 = vadd.f32 %v1536, %v1640
  %v1642 = vpop.f32.mrb[0].mxu0
  %1643 = vmatprep.mubr.f32.mxu0 0.0
  %1644 = vmatmul.mubr.f32.gmra.mrb[0].mxu0 %v193
  %v1645 = vpop.f32.mrb[0].mxu0
  %v1646 = vadd.f32 %v1541, %v1645
  %v1647 = vpop.f32.mrb[0].mxu0
  %1648 = vmatprep.mubr.f32.mxu0 0.0
  %1649 = vmatmul.mubr.f32.gmra.mrb[0].mxu0 %v196
  %v1650 = vpop.f32.mrb[0].mxu0
  %v1651 = vadd.f32 %v1546, %v1650
  %v1652 = vpop.f32.mrb[0].mxu0
  %1653 = vmatprep.mubr.f32.mxu0 0.0
  %1654 = vmatmul.mubr.f32.gmra.mrb[0].mxu0 %v199
  %v1655 = vpop.f32.mrb[0].mxu0
  %v1656 = vadd.f32 %v1551, %v1655
  %v1657 = vpop.f32.mrb[0].mxu0
  %1658 = vmatprep.mubr.f32.mxu0 0.0
  %1659 = vmatmul.mubr.f32.gmra.mrb[0].mxu0 %v202
  %v1660 = vpop.f32.mrb[0].mxu0
  %v1661 = vadd.f32 %v1556, %v1660
  %v1662 = vpop.f32.mrb[0].mxu0
  %1663 = vdwg.mxu0
  %v1664 = vld [vmem:[%s5] sm:$0xff]
  %v1665 = vld [vmem:[%s5 + $0x8] sm:$0xff]
  %v1666 = vld [vmem:[%s5 + $0x10] sm:$0xff]
  %v1667 = vld [vmem:[%s5 + $0x18] sm:$0xff]
  %v1668 = vld [vmem:[%s5 + $0x20] sm:$0xff]
  %v1669 = vld [vmem:[%s5 + $0x28] sm:$0xff]
  %v1670 = vld [vmem:[%s5 + $0x30] sm:$0xff]
  %v1671 = vld [vmem:[%s5 + $0x38] sm:$0xff]
  %v1672 = vld [vmem:[%s5 + $0x40] sm:$0xff]
  %v1673 = vld [vmem:[%s5 + $0x48] sm:$0xff]
  %v1674 = vld [vmem:[%s5 + $0x50] sm:$0xff]
  %v1675 = vld [vmem:[%s5 + $0x58] sm:$0xff]
  %v1676 = vld [vmem:[%s5 + $0x60] sm:$0xff]
  %v1677 = vld [vmem:[%s5 + $0x68] sm:$0xff]
  %v1678 = vld [vmem:[%s5 + $0x70] sm:$0xff]
  %v1679 = vld [vmem:[%s5 + $0x78] sm:$0xff]
  %v1680 = vld [vmem:[%s5 + $0x80] sm:$0xff]
  %v1681 = vld [vmem:[%s5 + $0x88] sm:$0xff]
  %v1682 = vld [vmem:[%s5 + $0x90] sm:$0xff]
  %v1683 = vld [vmem:[%s5 + $0x98] sm:$0xff]
  %v1684 = vld [vmem:[%s5 + $0xa0] sm:$0xff]
  %v1685 = vld [vmem:[%s5 + $0xa8] sm:$0xff]
  %v1686 = vld [vmem:[%s5 + $0xb0] sm:$0xff]
  %v1687 = vld [vmem:[%s5 + $0xb8] sm:$0xff]
  %v1688 = vld [vmem:[%s5 + $0xc0] sm:$0xff]
  %v1689 = vld [vmem:[%s5 + $0xc8] sm:$0xff]
  %v1690 = vld [vmem:[%s5 + $0xd0] sm:$0xff]
  %v1691 = vld [vmem:[%s5 + $0xd8] sm:$0xff]
  %v1692 = vld [vmem:[%s5 + $0xe0] sm:$0xff]
  %v1693 = vld [vmem:[%s5 + $0xe8] sm:$0xff]
  %v1694 = vld [vmem:[%s5 + $0xf0] sm:$0xff]
  %v1695 = vld [vmem:[%s5 + $0xf8] sm:$0xff]
  %v1696 = vld [vmem:[%s5 + $0x100] sm:$0xff]
  %v1697 = vld [vmem:[%s5 + $0x108] sm:$0xff]
  %v1698 = vld [vmem:[%s5 + $0x110] sm:$0xff]
  %v1699 = vld [vmem:[%s5 + $0x118] sm:$0xff]
  %v1700 = vld [vmem:[%s5 + $0x120] sm:$0xff]
  %v1701 = vld [vmem:[%s5 + $0x128] sm:$0xff]
  %v1702 = vld [vmem:[%s5 + $0x130] sm:$0xff]
  %v1703 = vld [vmem:[%s5 + $0x138] sm:$0xff]
  %v1704 = vld [vmem:[%s5 + $0x140] sm:$0xff]
  %v1705 = vld [vmem:[%s5 + $0x148] sm:$0xff]
  %v1706 = vld [vmem:[%s5 + $0x150] sm:$0xff]
  %v1707 = vld [vmem:[%s5 + $0x158] sm:$0xff]
  %v1708 = vld [vmem:[%s5 + $0x160] sm:$0xff]
  %v1709 = vld [vmem:[%s5 + $0x168] sm:$0xff]
  %v1710 = vld [vmem:[%s5 + $0x170] sm:$0xff]
  %v1711 = vld [vmem:[%s5 + $0x178] sm:$0xff]
  %v1712 = vld [vmem:[%s5 + $0x180] sm:$0xff]
  %v1713 = vld [vmem:[%s5 + $0x188] sm:$0xff]
  %v1714 = vld [vmem:[%s5 + $0x190] sm:$0xff]
  %v1715 = vld [vmem:[%s5 + $0x198] sm:$0xff]
  %v1716 = vld [vmem:[%s5 + $0x1a0] sm:$0xff]
  %v1717 = vld [vmem:[%s5 + $0x1a8] sm:$0xff]
  %v1718 = vld [vmem:[%s5 + $0x1b0] sm:$0xff]
  %v1719 = vld [vmem:[%s5 + $0x1b8] sm:$0xff]
  %v1720 = vld [vmem:[%s5 + $0x1c0] sm:$0xff]
  %v1721 = vld [vmem:[%s5 + $0x1c8] sm:$0xff]
  %v1722 = vld [vmem:[%s5 + $0x1d0] sm:$0xff]
  %v1723 = vld [vmem:[%s5 + $0x1d8] sm:$0xff]
  %v1724 = vld [vmem:[%s5 + $0x1e0] sm:$0xff]
  %v1725 = vld [vmem:[%s5 + $0x1e8] sm:$0xff]
  %v1726 = vld [vmem:[%s5 + $0x1f0] sm:$0xff]
  %v1727 = vld [vmem:[%s5 + $0x1f8] sm:$0xff]
  %v1728 = vld [vmem:[%s5 + $0x200] sm:$0xff]
  %v1729 = vld [vmem:[%s5 + $0x208] sm:$0xff]
  %v1730 = vld [vmem:[%s5 + $0x210] sm:$0xff]
  %v1731 = vld [vmem:[%s5 + $0x218] sm:$0xff]
  %v1732 = vld [vmem:[%s5 + $0x220] sm:$0xff]
  %v1733 = vld [vmem:[%s5 + $0x228] sm:$0xff]
  %v1734 = vld [vmem:[%s5 + $0x230] sm:$0xff]
  %v1735 = vld [vmem:[%s5 + $0x238] sm:$0xff]
  %v1736 = vld [vmem:[%s5 + $0x240] sm:$0xff]
  %v1737 = vld [vmem:[%s5 + $0x248] sm:$0xff]
  %v1738 = vld [vmem:[%s5 + $0x250] sm:$0xff]
  %v1739 = vld [vmem:[%s5 + $0x258] sm:$0xff]
  %v1740 = vld [vmem:[%s5 + $0x260] sm:$0xff]
  %v1741 = vld [vmem:[%s5 + $0x268] sm:$0xff]
  %v1742 = vld [vmem:[%s5 + $0x270] sm:$0xff]
  %v1743 = vld [vmem:[%s5 + $0x278] sm:$0xff]
  %v1744 = vld [vmem:[%s5 + $0x280] sm:$0xff]
  %v1745 = vld [vmem:[%s5 + $0x288] sm:$0xff]
  %v1746 = vld [vmem:[%s5 + $0x290] sm:$0xff]
  %v1747 = vld [vmem:[%s5 + $0x298] sm:$0xff]
  %v1748 = vld [vmem:[%s5 + $0x2a0] sm:$0xff]
  %v1749 = vld [vmem:[%s5 + $0x2a8] sm:$0xff]
  %v1750 = vld [vmem:[%s5 + $0x2b0] sm:$0xff]
  %v1751 = vld [vmem:[%s5 + $0x2b8] sm:$0xff]
  %v1752 = vld [vmem:[%s5 + $0x2c0] sm:$0xff]
  %v1753 = vld [vmem:[%s5 + $0x2c8] sm:$0xff]
  %v1754 = vld [vmem:[%s5 + $0x2d0] sm:$0xff]
  %v1755 = vld [vmem:[%s5 + $0x2d8] sm:$0xff]
  %v1756 = vld [vmem:[%s5 + $0x2e0] sm:$0xff]
  %v1757 = vld [vmem:[%s5 + $0x2e8] sm:$0xff]
  %v1758 = vld [vmem:[%s5 + $0x2f0] sm:$0xff]
  %v1759 = vld [vmem:[%s5 + $0x2f8] sm:$0xff]
  %v1760 = vld [vmem:[%s5 + $0x300] sm:$0xff]
  %v1761 = vld [vmem:[%s5 + $0x308] sm:$0xff]
  %v1762 = vld [vmem:[%s5 + $0x310] sm:$0xff]
  %v1763 = vld [vmem:[%s5 + $0x318] sm:$0xff]
  %1764 = vmatprep.subr.mxu0 0.0
  %1765 = vmatpush1.msra.mxu0 %v1664
  %1766 = vmatprep.subr.mxu0 0.0
  %1767 = vmatpush1.msra.mxu0 %v1665
  %1768 = vmatprep.subr.mxu0 0.0
  %1769 = vmatpush1.msra.mxu0 %v1666
  %1770 = vmatprep.subr.mxu0 0.0
  %1771 = vmatpush1.msra.mxu0 %v1667
  %1772 = vmatprep.subr.mxu0 0.0
  %1773 = vmatpush1.msra.mxu0 %v1668
  %1774 = vmatprep.subr.mxu0 0.0
  %1775 = vmatpush1.msra.mxu0 %v1669
  %1776 = vmatprep.subr.mxu0 0.0
  %1777 = vmatpush1.msra.mxu0 %v1670
  %1778 = vmatprep.subr.mxu0 0.0
  %1779 = vmatpush1.msra.mxu0 %v1671
  %1780 = vmatprep.subr.mxu0 0.0
  %1781 = vmatpush1.msra.mxu0 %v1672
  %1782 = vmatprep.subr.mxu0 0.0
  %1783 = vmatpush1.msra.mxu0 %v1673
  %1784 = vmatprep.subr.mxu0 0.0
  %1785 = vmatpush1.msra.mxu0 %v1674
  %1786 = vmatprep.subr.mxu0 0.0
  %1787 = vmatpush1.msra.mxu0 %v1675
  %1788 = vmatprep.subr.mxu0 0.0
  %1789 = vmatpush1.msra.mxu0 %v1676
  %1790 = vmatprep.subr.mxu0 0.0
  %1791 = vmatpush1.msra.mxu0 %v1677
  %1792 = vmatprep.subr.mxu0 0.0
  %1793 = vmatpush1.msra.mxu0 %v1678
  %1794 = vmatprep.subr.mxu0 0.0
  %1795 = vmatpush1.msra.mxu0 %v1679
  %1796 = vmatprep.subr.mxu0 0.0
  %1797 = vmatpush1.msra.mxu0 %v1680
  %1798 = vmatprep.subr.mxu0 0.0
  %1799 = vmatpush1.msra.mxu0 %v1681
  %1800 = vmatprep.subr.mxu0 0.0
  %1801 = vmatpush1.msra.mxu0 %v1682
  %1802 = vmatprep.subr.mxu0 0.0
  %1803 = vmatpush1.msra.mxu0 %v1683
  %1804 = vmatprep.subr.mxu0 0.0
  %1805 = vmatpush1.msra.mxu0 %v1684
  %1806 = vmatprep.subr.mxu0 0.0
  %1807 = vmatpush1.msra.mxu0 %v1685
  %1808 = vmatprep.subr.mxu0 0.0
  %1809 = vmatpush1.msra.mxu0 %v1686
  %1810 = vmatprep.subr.mxu0 0.0
  %1811 = vmatpush1.msra.mxu0 %v1687
  %1812 = vmatprep.subr.mxu0 0.0
  %1813 = vmatpush1.msra.mxu0 %v1688
  %1814 = vmatprep.subr.mxu0 0.0
  %1815 = vmatpush1.msra.mxu0 %v1689
  %1816 = vmatprep.subr.mxu0 0.0
  %1817 = vmatpush1.msra.mxu0 %v1690
  %1818 = vmatprep.subr.mxu0 0.0
  %1819 = vmatpush1.msra.mxu0 %v1691
  %1820 = vmatprep.subr.mxu0 0.0
  %1821 = vmatpush1.msra.mxu0 %v1692
  %1822 = vmatprep.subr.mxu0 0.0
  %1823 = vmatpush1.msra.mxu0 %v1693
  %1824 = vmatprep.subr.mxu0 0.0
  %1825 = vmatpush1.msra.mxu0 %v1694
  %1826 = vmatprep.subr.mxu0 0.0
  %1827 = vmatpush1.msra.mxu0 %v1695
  %1828 = vmatprep.mubr.f32.mxu0 %v24
  %1829 = vmatmul.mubr.f32.gmra.mrb[0].mxu0 %v23
  %v1830 = vpop.f32.mrb[0].mxu0
  %v1831 = vadd.f32 0.0, %v1830
  %v1832 = vpop.f32.mrb[0].mxu0
  %1833 = vmatprep.mubr.f32.mxu0 %v31
  %1834 = vmatmul.mubr.f32.gmra.mrb[0].mxu0 %v30
  %v1835 = vpop.f32.mrb[0].mxu0
  %v1836 = vadd.f32 0.0, %v1835
  %v1837 = vpop.f32.mrb[0].mxu0
  %1838 = vmatprep.mubr.f32.mxu0 %v38
  %1839 = vmatmul.mubr.f32.gmra.mrb[0].mxu0 %v37
  %v1840 = vpop.f32.mrb[0].mxu0
  %v1841 = vadd.f32 0.0, %v1840
  %v1842 = vpop.f32.mrb[0].mxu0
  %1843 = vmatprep.mubr.f32.mxu0 %v45
  %1844 = vmatmul.mubr.f32.gmra.mrb[0].mxu0 %v44
  %v1845 = vpop.f32.mrb[0].mxu0
  %v1846 = vadd.f32 0.0, %v1845
  %v1847 = vpop.f32.mrb[0].mxu0
  %1848 = vmatprep.mubr.f32.mxu0 %v52
  %1849 = vmatmul.mubr.f32.gmra.mrb[0].mxu0 %v51
  %v1850 = vpop.f32.mrb[0].mxu0
  %v1851 = vadd.f32 0.0, %v1850
  %v1852 = vpop.f32.mrb[0].mxu0
  %1853 = vmatprep.mubr.f32.mxu0 %v59
  %1854 = vmatmul.mubr.f32.gmra.mrb[0].mxu0 %v58
  %v1855 = vpop.f32.mrb[0].mxu0
  %v1856 = vadd.f32 0.0, %v1855
  %v1857 = vpop.f32.mrb[0].mxu0
  %1858 = vmatprep.mubr.f32.mxu0 %v66
  %1859 = vmatmul.mubr.f32.gmra.mrb[0].mxu0 %v65
  %v1860 = vpop.f32.mrb[0].mxu0
  %v1861 = vadd.f32 0.0, %v1860
  %v1862 = vpop.f32.mrb[0].mxu0
  %1863 = vmatprep.mubr.f32.mxu0 %v73
  %1864 = vmatmul.mubr.f32.gmra.mrb[0].mxu0 %v72
  %v1865 = vpop.f32.mrb[0].mxu0
  %v1866 = vadd.f32 0.0, %v1865
  %v1867 = vpop.f32.mrb[0].mxu0
  %1868 = vdwg.mxu0
  %1869 = vmatprep.subr.mxu0 0.0
  %1870 = vmatpush1.msra.mxu0 %v1696
  %1871 = vmatprep.subr.mxu0 0.0
  %1872 = vmatpush1.msra.mxu0 %v1697
  %1873 = vmatprep.subr.mxu0 0.0
  %1874 = vmatpush1.msra.mxu0 %v1698
  %1875 = vmatprep.subr.mxu0 0.0
  %1876 = vmatpush1.msra.mxu0 %v1699
  %1877 = vmatprep.subr.mxu0 0.0
  %1878 = vmatpush1.msra.mxu0 %v1700
  %1879 = vmatprep.subr.mxu0 0.0
  %1880 = vmatpush1.msra.mxu0 %v1701
  %1881 = vmatprep.subr.mxu0 0.0
  %1882 = vmatpush1.msra.mxu0 %v1702
  %1883 = vmatprep.subr.mxu0 0.0
  %1884 = vmatpush1.msra.mxu0 %v1703
  %1885 = vmatprep.subr.mxu0 0.0
  %1886 = vmatpush1.msra.mxu0 %v1704
  %1887 = vmatprep.subr.mxu0 0.0
  %1888 = vmatpush1.msra.mxu0 %v1705
  %1889 = vmatprep.subr.mxu0 0.0
  %1890 = vmatpush1.msra.mxu0 %v1706
  %1891 = vmatprep.subr.mxu0 0.0
  %1892 = vmatpush1.msra.mxu0 %v1707
  %1893 = vmatprep.subr.mxu0 0.0
  %1894 = vmatpush1.msra.mxu0 %v1708
  %1895 = vmatprep.subr.mxu0 0.0
  %1896 = vmatpush1.msra.mxu0 %v1709
  %1897 = vmatprep.subr.mxu0 0.0
  %1898 = vmatpush1.msra.mxu0 %v1710
  %1899 = vmatprep.subr.mxu0 0.0
  %1900 = vmatpush1.msra.mxu0 %v1711
  %1901 = vmatprep.subr.mxu0 0.0
  %1902 = vmatpush1.msra.mxu0 %v1712
  %1903 = vmatprep.subr.mxu0 0.0
  %1904 = vmatpush1.msra.mxu0 %v1713
  %1905 = vmatprep.subr.mxu0 0.0
  %1906 = vmatpush1.msra.mxu0 %v1714
  %1907 = vmatprep.subr.mxu0 0.0
  %1908 = vmatpush1.msra.mxu0 %v1715
  %1909 = vmatprep.subr.mxu0 0.0
  %1910 = vmatpush1.msra.mxu0 %v1716
  %1911 = vmatprep.subr.mxu0 0.0
  %1912 = vmatpush1.msra.mxu0 %v1717
  %1913 = vmatprep.subr.mxu0 0.0
  %1914 = vmatpush1.msra.mxu0 %v1718
  %1915 = vmatprep.subr.mxu0 0.0
  %1916 = vmatpush1.msra.mxu0 %v1719
  %1917 = vmatprep.subr.mxu0 0.0
  %1918 = vmatpush1.msra.mxu0 %v1720
  %1919 = vmatprep.subr.mxu0 0.0
  %1920 = vmatpush1.msra.mxu0 %v1721
  %1921 = vmatprep.subr.mxu0 0.0
  %1922 = vmatpush1.msra.mxu0 %v1722
  %1923 = vmatprep.subr.mxu0 0.0
  %1924 = vmatpush1.msra.mxu0 %v1723
  %1925 = vmatprep.subr.mxu0 0.0
  %1926 = vmatpush1.msra.mxu0 %v1724
  %1927 = vmatprep.subr.mxu0 0.0
  %1928 = vmatpush1.msra.mxu0 %v1725
  %1929 = vmatprep.subr.mxu0 0.0
  %1930 = vmatpush1.msra.mxu0 %v1726
  %1931 = vmatprep.subr.mxu0 0.0
  %1932 = vmatpush1.msra.mxu0 %v1727
  %1933 = vmatprep.mubr.f32.mxu0 %v26
  %1934 = vmatmul.mubr.f32.gmra.mrb[0].mxu0 %v25
  %v1935 = vpop.f32.mrb[0].mxu0
  %v1936 = vadd.f32 %v1831, %v1935
  %v1937 = vpop.f32.mrb[0].mxu0
  %1938 = vmatprep.mubr.f32.mxu0 %v33
  %1939 = vmatmul.mubr.f32.gmra.mrb[0].mxu0 %v32
  %v1940 = vpop.f32.mrb[0].mxu0
  %v1941 = vadd.f32 %v1836, %v1940
  %v1942 = vpop.f32.mrb[0].mxu0
  %1943 = vmatprep.mubr.f32.mxu0 %v40
  %1944 = vmatmul.mubr.f32.gmra.mrb[0].mxu0 %v39
  %v1945 = vpop.f32.mrb[0].mxu0
  %v1946 = vadd.f32 %v1841, %v1945
  %v1947 = vpop.f32.mrb[0].mxu0
  %1948 = vmatprep.mubr.f32.mxu0 %v47
  %1949 = vmatmul.mubr.f32.gmra.mrb[0].mxu0 %v46
  %v1950 = vpop.f32.mrb[0].mxu0
  %v1951 = vadd.f32 %v1846, %v1950
  %v1952 = vpop.f32.mrb[0].mxu0
  %1953 = vmatprep.mubr.f32.mxu0 %v54
  %1954 = vmatmul.mubr.f32.gmra.mrb[0].mxu0 %v53
  %v1955 = vpop.f32.mrb[0].mxu0
  %v1956 = vadd.f32 %v1851, %v1955
  %v1957 = vpop.f32.mrb[0].mxu0
  %1958 = vmatprep.mubr.f32.mxu0 %v61
  %1959 = vmatmul.mubr.f32.gmra.mrb[0].mxu0 %v60
  %v1960 = vpop.f32.mrb[0].mxu0
  %v1961 = vadd.f32 %v1856, %v1960
  %v1962 = vpop.f32.mrb[0].mxu0
  %1963 = vmatprep.mubr.f32.mxu0 %v68
  %1964 = vmatmul.mubr.f32.gmra.mrb[0].mxu0 %v67
  %v1965 = vpop.f32.mrb[0].mxu0
  %v1966 = vadd.f32 %v1861, %v1965
  %v1967 = vpop.f32.mrb[0].mxu0
  %1968 = vmatprep.mubr.f32.mxu0 %v75
  %1969 = vmatmul.mubr.f32.gmra.mrb[0].mxu0 %v74
  %v1970 = vpop.f32.mrb[0].mxu0
  %v1971 = vadd.f32 %v1866, %v1970
  %v1972 = vpop.f32.mrb[0].mxu0
  %1973 = vdwg.mxu0
  %1974 = vmatprep.subr.mxu0 0.0
  %1975 = vmatpush1.msra.mxu0 %v1728
  %1976 = vmatprep.subr.mxu0 0.0
  %1977 = vmatpush1.msra.mxu0 %v1729
  %1978 = vmatprep.subr.mxu0 0.0
  %1979 = vmatpush1.msra.mxu0 %v1730
  %1980 = vmatprep.subr.mxu0 0.0
  %1981 = vmatpush1.msra.mxu0 %v1731
  %1982 = vmatprep.subr.mxu0 0.0
  %1983 = vmatpush1.msra.mxu0 %v1732
  %1984 = vmatprep.subr.mxu0 0.0
  %1985 = vmatpush1.msra.mxu0 %v1733
  %1986 = vmatprep.subr.mxu0 0.0
  %1987 = vmatpush1.msra.mxu0 %v1734
  %1988 = vmatprep.subr.mxu0 0.0
  %1989 = vmatpush1.msra.mxu0 %v1735
  %1990 = vmatprep.subr.mxu0 0.0
  %1991 = vmatpush1.msra.mxu0 %v1736
  %1992 = vmatprep.subr.mxu0 0.0
  %1993 = vmatpush1.msra.mxu0 %v1737
  %1994 = vmatprep.subr.mxu0 0.0
  %1995 = vmatpush1.msra.mxu0 %v1738
  %1996 = vmatprep.subr.mxu0 0.0
  %1997 = vmatpush1.msra.mxu0 %v1739
  %1998 = vmatprep.subr.mxu0 0.0
  %1999 = vmatpush1.msra.mxu0 %v1740
  %2000 = vmatprep.subr.mxu0 0.0
  %2001 = vmatpush1.msra.mxu0 %v1741
  %2002 = vmatprep.subr.mxu0 0.0
  %2003 = vmatpush1.msra.mxu0 %v1742
  %2004 = vmatprep.subr.mxu0 0.0
  %2005 = vmatpush1.msra.mxu0 %v1743
  %2006 = vmatprep.subr.mxu0 0.0
  %2007 = vmatpush1.msra.mxu0 %v1744
  %2008 = vmatprep.subr.mxu0 0.0
  %2009 = vmatpush1.msra.mxu0 %v1745
  %2010 = vmatprep.subr.mxu0 0.0
  %2011 = vmatpush1.msra.mxu0 %v1746
  %2012 = vmatprep.subr.mxu0 0.0
  %2013 = vmatpush1.msra.mxu0 %v1747
  %2014 = vmatprep.subr.mxu0 0.0
  %2015 = vmatpush1.msra.mxu0 %v1748
  %2016 = vmatprep.subr.mxu0 0.0
  %2017 = vmatpush1.msra.mxu0 %v1749
  %2018 = vmatprep.subr.mxu0 0.0
  %2019 = vmatpush1.msra.mxu0 %v1750
  %2020 = vmatprep.subr.mxu0 0.0
  %2021 = vmatpush1.msra.mxu0 %v1751
  %2022 = vmatprep.subr.mxu0 0.0
  %2023 = vmatpush1.msra.mxu0 %v1752
  %2024 = vmatprep.subr.mxu0 0.0
  %2025 = vmatpush1.msra.mxu0 %v1753
  %2026 = vmatprep.subr.mxu0 0.0
  %2027 = vmatpush1.msra.mxu0 %v1754
  %2028 = vmatprep.subr.mxu0 0.0
  %2029 = vmatpush1.msra.mxu0 %v1755
  %2030 = vmatprep.subr.mxu0 0.0
  %2031 = vmatpush1.msra.mxu0 %v1756
  %2032 = vmatprep.subr.mxu0 0.0
  %2033 = vmatpush1.msra.mxu0 %v1757
  %2034 = vmatprep.subr.mxu0 0.0
  %2035 = vmatpush1.msra.mxu0 %v1758
  %2036 = vmatprep.subr.mxu0 0.0
  %2037 = vmatpush1.msra.mxu0 %v1759
  %2038 = vmatprep.mubr.f32.mxu0 %v28
  %2039 = vmatmul.mubr.f32.gmra.mrb[0].mxu0 %v27
  %v2040 = vpop.f32.mrb[0].mxu0
  %v2041 = vadd.f32 %v1936, %v2040
  %v2042 = vpop.f32.mrb[0].mxu0
  %2043 = vmatprep.mubr.f32.mxu0 %v35
  %2044 = vmatmul.mubr.f32.gmra.mrb[0].mxu0 %v34
  %v2045 = vpop.f32.mrb[0].mxu0
  %v2046 = vadd.f32 %v1941, %v2045
  %v2047 = vpop.f32.mrb[0].mxu0
  %2048 = vmatprep.mubr.f32.mxu0 %v42
  %2049 = vmatmul.mubr.f32.gmra.mrb[0].mxu0 %v41
  %v2050 = vpop.f32.mrb[0].mxu0
  %v2051 = vadd.f32 %v1946, %v2050
  %v2052 = vpop.f32.mrb[0].mxu0
  %2053 = vmatprep.mubr.f32.mxu0 %v49
  %2054 = vmatmul.mubr.f32.gmra.mrb[0].mxu0 %v48
  %v2055 = vpop.f32.mrb[0].mxu0
  %v2056 = vadd.f32 %v1951, %v2055
  %v2057 = vpop.f32.mrb[0].mxu0
  %2058 = vmatprep.mubr.f32.mxu0 %v56
  %2059 = vmatmul.mubr.f32.gmra.mrb[0].mxu0 %v55
  %v2060 = vpop.f32.mrb[0].mxu0
  %v2061 = vadd.f32 %v1956, %v2060
  %v2062 = vpop.f32.mrb[0].mxu0
  %2063 = vmatprep.mubr.f32.mxu0 %v63
  %2064 = vmatmul.mubr.f32.gmra.mrb[0].mxu0 %v62
  %v2065 = vpop.f32.mrb[0].mxu0
  %v2066 = vadd.f32 %v1961, %v2065
  %v2067 = vpop.f32.mrb[0].mxu0
  %2068 = vmatprep.mubr.f32.mxu0 %v70
  %2069 = vmatmul.mubr.f32.gmra.mrb[0].mxu0 %v69
  %v2070 = vpop.f32.mrb[0].mxu0
  %v2071 = vadd.f32 %v1966, %v2070
  %v2072 = vpop.f32.mrb[0].mxu0
  %2073 = vmatprep.mubr.f32.mxu0 %v77
  %2074 = vmatmul.mubr.f32.gmra.mrb[0].mxu0 %v76
  %v2075 = vpop.f32.mrb[0].mxu0
  %v2076 = vadd.f32 %v1971, %v2075
  %v2077 = vpop.f32.mrb[0].mxu0
  %2078 = vdwg.mxu0
  %2079 = vmatprep.subr.mxu0 0.0
  %2080 = vmatpush1.msra.mxu0 %v1760
  %2081 = vmatprep.subr.mxu0 0.0
  %2082 = vmatpush1.msra.mxu0 %v1761
  %2083 = vmatprep.subr.mxu0 0.0
  %2084 = vmatpush1.msra.mxu0 %v1762
  %2085 = vmatprep.subr.mxu0 0.0
  %2086 = vmatpush1.msra.mxu0 %v1763
  %2087 = vmatprep.subr.mxu0 0.0
  %2088 = vmatpush1.msra.mxu0 0.0
  %2089 = vmatprep.subr.mxu0 0.0
  %2090 = vmatpush1.msra.mxu0 0.0
  %2091 = vmatprep.subr.mxu0 0.0
  %2092 = vmatpush1.msra.mxu0 0.0
  %2093 = vmatprep.subr.mxu0 0.0
  %2094 = vmatpush1.msra.mxu0 0.0
  %2095 = vmatprep.subr.mxu0 0.0
  %2096 = vmatpush1.msra.mxu0 0.0
  %2097 = vmatprep.subr.mxu0 0.0
  %2098 = vmatpush1.msra.mxu0 0.0
  %2099 = vmatprep.subr.mxu0 0.0
  %2100 = vmatpush1.msra.mxu0 0.0
  %2101 = vmatprep.subr.mxu0 0.0
  %2102 = vmatpush1.msra.mxu0 0.0
  %2103 = vmatprep.subr.mxu0 0.0
  %2104 = vmatpush1.msra.mxu0 0.0
  %2105 = vmatprep.subr.mxu0 0.0
  %2106 = vmatpush1.msra.mxu0 0.0
  %2107 = vmatprep.subr.mxu0 0.0
  %2108 = vmatpush1.msra.mxu0 0.0
  %2109 = vmatprep.subr.mxu0 0.0
  %2110 = vmatpush1.msra.mxu0 0.0
  %2111 = vmatprep.subr.mxu0 0.0
  %2112 = vmatpush1.msra.mxu0 0.0
  %2113 = vmatprep.subr.mxu0 0.0
  %2114 = vmatpush1.msra.mxu0 0.0
  %2115 = vmatprep.subr.mxu0 0.0
  %2116 = vmatpush1.msra.mxu0 0.0
  %2117 = vmatprep.subr.mxu0 0.0
  %2118 = vmatpush1.msra.mxu0 0.0
  %2119 = vmatprep.subr.mxu0 0.0
  %2120 = vmatpush1.msra.mxu0 0.0
  %2121 = vmatprep.subr.mxu0 0.0
  %2122 = vmatpush1.msra.mxu0 0.0
  %2123 = vmatprep.subr.mxu0 0.0
  %2124 = vmatpush1.msra.mxu0 0.0
  %2125 = vmatprep.subr.mxu0 0.0
  %2126 = vmatpush1.msra.mxu0 0.0
  %2127 = vmatprep.subr.mxu0 0.0
  %2128 = vmatpush1.msra.mxu0 0.0
  %2129 = vmatprep.subr.mxu0 0.0
  %2130 = vmatpush1.msra.mxu0 0.0
  %2131 = vmatprep.subr.mxu0 0.0
  %2132 = vmatpush1.msra.mxu0 0.0
  %2133 = vmatprep.subr.mxu0 0.0
  %2134 = vmatpush1.msra.mxu0 0.0
  %2135 = vmatprep.subr.mxu0 0.0
  %2136 = vmatpush1.msra.mxu0 0.0
  %2137 = vmatprep.subr.mxu0 0.0
  %2138 = vmatpush1.msra.mxu0 0.0
  %2139 = vmatprep.subr.mxu0 0.0
  %2140 = vmatpush1.msra.mxu0 0.0
  %2141 = vmatprep.subr.mxu0 0.0
  %2142 = vmatpush1.msra.mxu0 0.0
  %2143 = vmatprep.mubr.f32.mxu0 0.0
  %2144 = vmatmul.mubr.f32.gmra.mrb[0].mxu0 %v181
  %v2145 = vpop.f32.mrb[0].mxu0
  %v2146 = vadd.f32 %v2041, %v2145
  %v2147 = vpop.f32.mrb[0].mxu0
  %2148 = vmatprep.mubr.f32.mxu0 0.0
  %2149 = vmatmul.mubr.f32.gmra.mrb[0].mxu0 %v184
  %v2150 = vpop.f32.mrb[0].mxu0
  %v2151 = vadd.f32 %v2046, %v2150
  %v2152 = vpop.f32.mrb[0].mxu0
  %2153 = vmatprep.mubr.f32.mxu0 0.0
  %2154 = vmatmul.mubr.f32.gmra.mrb[0].mxu0 %v187
  %v2155 = vpop.f32.mrb[0].mxu0
  %v2156 = vadd.f32 %v2051, %v2155
  %v2157 = vpop.f32.mrb[0].mxu0
  %2158 = vmatprep.mubr.f32.mxu0 0.0
  %2159 = vmatmul.mubr.f32.gmra.mrb[0].mxu0 %v190
  %v2160 = vpop.f32.mrb[0].mxu0
  %v2161 = vadd.f32 %v2056, %v2160
  %v2162 = vpop.f32.mrb[0].mxu0
  %2163 = vmatprep.mubr.f32.mxu0 0.0
  %2164 = vmatmul.mubr.f32.gmra.mrb[0].mxu0 %v193
  %v2165 = vpop.f32.mrb[0].mxu0
  %v2166 = vadd.f32 %v2061, %v2165
  %v2167 = vpop.f32.mrb[0].mxu0
  %2168 = vmatprep.mubr.f32.mxu0 0.0
  %2169 = vmatmul.mubr.f32.gmra.mrb[0].mxu0 %v196
  %v2170 = vpop.f32.mrb[0].mxu0
  %v2171 = vadd.f32 %v2066, %v2170
  %v2172 = vpop.f32.mrb[0].mxu0
  %2173 = vmatprep.mubr.f32.mxu0 0.0
  %2174 = vmatmul.mubr.f32.gmra.mrb[0].mxu0 %v199
  %v2175 = vpop.f32.mrb[0].mxu0
  %v2176 = vadd.f32 %v2071, %v2175
  %v2177 = vpop.f32.mrb[0].mxu0
  %2178 = vmatprep.mubr.f32.mxu0 0.0
  %2179 = vmatmul.mubr.f32.gmra.mrb[0].mxu0 %v202
  %v2180 = vpop.f32.mrb[0].mxu0
  %v2181 = vadd.f32 %v2076, %v2180
  %v2182 = vpop.f32.mrb[0].mxu0
  %2183 = vdwg.mxu0
  %v2184 = vmax.f32 %v586, %v1106
  %v2185 = vmax.f32 %v591, %v1111
  %v2186 = vmax.f32 %v596, %v1116
  %v2187 = vmax.f32 %v601, %v1121
  %v2188 = vmax.f32 %v606, %v1126
  %v2189 = vmax.f32 %v611, %v1131
  %v2190 = vmax.f32 %v616, %v1136
  %v2191 = vmax.f32 %v621, %v1141
  %v2192 = vmax.f32 %v1626, %v2146
  %v2193 = vmax.f32 %v1631, %v2151
  %v2194 = vmax.f32 %v1636, %v2156
  %v2195 = vmax.f32 %v1641, %v2161
  %v2196 = vmax.f32 %v1646, %v2166
  %v2197 = vmax.f32 %v1651, %v2171
  %v2198 = vmax.f32 %v1656, %v2176
  %v2199 = vmax.f32 %v1661, %v2181
  %v2200 = vmax.f32 %v2184, %v2192
  %v2201 = vmax.f32 %v2185, %v2193
  %v2202 = vmax.f32 %v2186, %v2194
  %v2203 = vmax.f32 %v2187, %v2195
  %v2204 = vmax.f32 %v2188, %v2196
  %v2205 = vmax.f32 %v2189, %v2197
  %v2206 = vmax.f32 %v2190, %v2198
  %v2207 = vmax.f32 %v2191, %v2199
  %v2208 = vld [vmem:[%s1] sm:$0xff]
  %v2209 = vld [vmem:[%s1 + $0x8] sm:$0xff]
  %v2210 = vld [vmem:[%s1 + $0x10] sm:$0xff]
  %v2211 = vld [vmem:[%s1 + $0x18] sm:$0xff]
  %v2212 = vld [vmem:[%s1 + $0x20] sm:$0xff]
  %v2213 = vld [vmem:[%s1 + $0x28] sm:$0xff]
  %v2214 = vld [vmem:[%s1 + $0x30] sm:$0xff]
  %v2215 = vld [vmem:[%s1 + $0x38] sm:$0xff]
  %2217 = vset.pattern.permute.xlu0 0
  %2218 = vperm.xlu0 %2217, %v2208
  %v2219 = vpop.permute.xlu0 %2218
  %2222 = vset.pattern.permute.xlu0 0
  %2223 = vperm.xlu0 %2222, %v2209
  %v2224 = vpop.permute.xlu0 %2223
  %2227 = vset.pattern.permute.xlu0 0
  %2228 = vperm.xlu0 %2227, %v2210
  %v2229 = vpop.permute.xlu0 %2228
  %2232 = vset.pattern.permute.xlu0 0
  %2233 = vperm.xlu0 %2232, %v2211
  %v2234 = vpop.permute.xlu0 %2233
  %2237 = vset.pattern.permute.xlu0 0
  %2238 = vperm.xlu0 %2237, %v2212
  %v2239 = vpop.permute.xlu0 %2238
  %2242 = vset.pattern.permute.xlu0 0
  %2243 = vperm.xlu0 %2242, %v2213
  %v2244 = vpop.permute.xlu0 %2243
  %2247 = vset.pattern.permute.xlu0 0
  %2248 = vperm.xlu0 %2247, %v2214
  %v2249 = vpop.permute.xlu0 %2248
  %2252 = vset.pattern.permute.xlu0 0
  %2253 = vperm.xlu0 %2252, %v2215
  %v2254 = vpop.permute.xlu0 %2253
  %v2256 = vadd.f32 %v2200, %v2219
  %v2257 = vadd.f32 %v2201, %v2224
  %v2258 = vadd.f32 %v2202, %v2229
  %v2259 = vadd.f32 %v2203, %v2234
  %v2260 = vadd.f32 %v2204, %v2239
  %v2261 = vadd.f32 %v2205, %v2244
  %v2262 = vadd.f32 %v2206, %v2249
  %v2263 = vadd.f32 %v2207, %v2254
  %2264 = vst.msk [vmem:[%s6] sm:$0xff] %vm179, %v2256
  %2265 = vst.msk [vmem:[%s6 + $0x8] sm:$0xff] %vm179, %v2257
  %2266 = vst.msk [vmem:[%s6 + $0x10] sm:$0xff] %vm179, %v2258
  %2267 = vst.msk [vmem:[%s6 + $0x18] sm:$0xff] %vm179, %v2259
  %2268 = vst.msk [vmem:[%s6 + $0x20] sm:$0xff] %vm179, %v2260
  %2269 = vst.msk [vmem:[%s6 + $0x28] sm:$0xff] %vm179, %v2261
  %2270 = vst.msk [vmem:[%s6 + $0x30] sm:$0xff] %vm179, %v2262
  %2271 = vst.msk [vmem:[%s6 + $0x38] sm:$0xff] %vm179, %v2263
  // Predicated region
  $region26: #{forward.6} parent=0 // pred_check
    _
  $region27: #{forward.6} parent=0 // pred_check_branch
    %2273 = sbr.rel (0) target = $region29
  $region28: #{forward.6} parent=0 // pred_region
    _
  $region29: #{forward.6} parent=0 // pred_fallthru
    _
  // Predicated region
  $region30: #{forward.6} parent=0 // pred_check
    _
  $region31: #{forward.6} parent=0 // pred_check_branch
    %2275 = sbr.rel (0) target = $region33
  $region32: #{forward.6} parent=0 // pred_region
    _
  $region33: #{forward.6} parent=0 // pred_fallthru
    _

// kernel: forward.7
$region0: #{forward.7}
  #allocation0 [shape = 'u32[]', space=smem, size = 0x4, offset = 0x4, fixed_abs, tag = 'smem constant byte address 0x4 - core index']
  #allocation1 [shape = 'u32[144,128]{1,0:T(1,128)}', space=vmem, size = 0x12000, scoped, tag = 'internal scratch']
  %s0 = inlined_call_operand.vmem [shape: f32[2,1024], index: 0, kind: input, shape index: {}]
  %s1 = inlined_call_operand.vmem [shape: f32[1024,64], index: 1, kind: input, shape index: {}]
  %s2 = inlined_call_operand.vmem [shape: f32[1,64], index: 2, kind: input, shape index: {}]
  %s3 = inlined_call_operand.vmem [shape: f32[64,10], index: 3, kind: input, shape index: {}]
  %s4 = inlined_call_operand.vmem [shape: f32[1,10], index: 4, kind: input, shape index: {}]
  %s5 = inlined_call_operand.hbm [shape: f32[2,10], index: 5, kind: output, shape index: {}]
  %s6 = sld [smem:[#allocation0]]
  $region30: #{forward.7} parent=0
    _
  %s8 = ssub.s32 1, %s6
  %s9 = scalar_select 0, %s8, %s6
  $region1: #{forward.7} parent=0
    #allocation2 [shape = 'u8[1024]{0}', space=vmem, size = 0x400, scoped, tag = 'output window, operand 0, single buffered']
    #allocation3 [shape = 's32[1]{0}', space=sflag, size = 0x4, scoped, tag = 'scoped memory for forward.7']
    %10 = vsyncpa [#allocation3], 0
    // Predicated region
    $region2: #{forward.7} parent=1 // pred_check
      _
    $region3: #{forward.7} parent=1 // pred_check_branch
      %12 = sbr.rel (0) target = $region5
    $region4: #{forward.7} parent=1 // pred_region
      _
    $region5: #{forward.7} parent=1 // pred_fallthru
      _
    // Predicated region
    $region6: #{forward.7} parent=1 // pred_check
      _
    $region7: #{forward.7} parent=1 // pred_check_branch
      %14 = sbr.rel (0) target = $region9
    $region8: #{forward.7} parent=1 // pred_region
      _
    $region9: #{forward.7} parent=1 // pred_fallthru
      _
    // Predicated region
    $region10: #{forward.7} parent=1 // pred_check
      _
    $region11: #{forward.7} parent=1 // pred_check_branch
      %16 = sbr.rel (0) target = $region13
    $region12: #{forward.7} parent=1 // pred_region
      _
    $region13: #{forward.7} parent=1 // pred_fallthru
      _
    // Predicated region
    $region14: #{forward.7} parent=1 // pred_check
      _
    $region15: #{forward.7} parent=1 // pred_check_branch
      %18 = sbr.rel (0) target = $region17
    $region16: #{forward.7} parent=1 // pred_region
      _
    $region17: #{forward.7} parent=1 // pred_fallthru
      _
    // Predicated region
    $region18: #{forward.7} parent=1 // pred_check
      _
    $region19: #{forward.7} parent=1 // pred_check_branch
      %20 = sbr.rel (0) target = $region21
    $region20: #{forward.7} parent=1 // pred_region
      _
    $region21: #{forward.7} parent=1 // pred_fallthru
      _
    %v21 = vld [vmem:[%s0] sm:$0xff]
    %v22 = vld [vmem:[%s0 + $0x8] sm:$0xff]
    %v23 = vld [vmem:[%s1] sm:$0xff]
    %v24 = vld [vmem:[%s1 + $0x8] sm:$0xff]
    %v25 = vld [vmem:[%s1 + $0x10] sm:$0xff]
    %v26 = vld [vmem:[%s1 + $0x18] sm:$0xff]
    %v27 = vld [vmem:[%s1 + $0x20] sm:$0xff]
    %v28 = vld [vmem:[%s1 + $0x28] sm:$0xff]
    %v29 = vld [vmem:[%s1 + $0x30] sm:$0xff]
    %v30 = vld [vmem:[%s1 + $0x38] sm:$0xff]
    %v31 = vld [vmem:[%s1 + $0x40] sm:$0xff]
    %v32 = vld [vmem:[%s1 + $0x48] sm:$0xff]
    %v33 = vld [vmem:[%s1 + $0x50] sm:$0xff]
    %v34 = vld [vmem:[%s1 + $0x58] sm:$0xff]
    %v35 = vld [vmem:[%s1 + $0x60] sm:$0xff]
    %v36 = vld [vmem:[%s1 + $0x68] sm:$0xff]
    %v37 = vld [vmem:[%s1 + $0x70] sm:$0xff]
    %v38 = vld [vmem:[%s1 + $0x78] sm:$0xff]
    %v39 = vld [vmem:[%s1 + $0x80] sm:$0xff]
    %v40 = vld [vmem:[%s1 + $0x88] sm:$0xff]
    %v41 = vld [vmem:[%s1 + $0x90] sm:$0xff]
    %v42 = vld [vmem:[%s1 + $0x98] sm:$0xff]
    %v43 = vld [vmem:[%s1 + $0xa0] sm:$0xff]
    %v44 = vld [vmem:[%s1 + $0xa8] sm:$0xff]
    %v45 = vld [vmem:[%s1 + $0xb0] sm:$0xff]
    %v46 = vld [vmem:[%s1 + $0xb8] sm:$0xff]
    %v47 = vld [vmem:[%s1 + $0xc0] sm:$0xff]
    %v48 = vld [vmem:[%s1 + $0xc8] sm:$0xff]
    %v49 = vld [vmem:[%s1 + $0xd0] sm:$0xff]
    %v50 = vld [vmem:[%s1 + $0xd8] sm:$0xff]
    %v51 = vld [vmem:[%s1 + $0xe0] sm:$0xff]
    %v52 = vld [vmem:[%s1 + $0xe8] sm:$0xff]
    %v53 = vld [vmem:[%s1 + $0xf0] sm:$0xff]
    %v54 = vld [vmem:[%s1 + $0xf8] sm:$0xff]
    %v55 = vld [vmem:[%s1 + $0x100] sm:$0xff]
    %v56 = vld [vmem:[%s1 + $0x108] sm:$0xff]
    %v57 = vld [vmem:[%s1 + $0x110] sm:$0xff]
    %v58 = vld [vmem:[%s1 + $0x118] sm:$0xff]
    %v59 = vld [vmem:[%s1 + $0x120] sm:$0xff]
    %v60 = vld [vmem:[%s1 + $0x128] sm:$0xff]
    %v61 = vld [vmem:[%s1 + $0x130] sm:$0xff]
    %v62 = vld [vmem:[%s1 + $0x138] sm:$0xff]
    %v63 = vld [vmem:[%s1 + $0x140] sm:$0xff]
    %v64 = vld [vmem:[%s1 + $0x148] sm:$0xff]
    %v65 = vld [vmem:[%s1 + $0x150] sm:$0xff]
    %v66 = vld [vmem:[%s1 + $0x158] sm:$0xff]
    %v67 = vld [vmem:[%s1 + $0x160] sm:$0xff]
    %v68 = vld [vmem:[%s1 + $0x168] sm:$0xff]
    %v69 = vld [vmem:[%s1 + $0x170] sm:$0xff]
    %v70 = vld [vmem:[%s1 + $0x178] sm:$0xff]
    %v71 = vld [vmem:[%s1 + $0x180] sm:$0xff]
    %v72 = vld [vmem:[%s1 + $0x188] sm:$0xff]
    %v73 = vld [vmem:[%s1 + $0x190] sm:$0xff]
    %v74 = vld [vmem:[%s1 + $0x198] sm:$0xff]
    %v75 = vld [vmem:[%s1 + $0x1a0] sm:$0xff]
    %v76 = vld [vmem:[%s1 + $0x1a8] sm:$0xff]
    %v77 = vld [vmem:[%s1 + $0x1b0] sm:$0xff]
    %v78 = vld [vmem:[%s1 + $0x1b8] sm:$0xff]
    %v79 = vld [vmem:[%s1 + $0x1c0] sm:$0xff]
    %v80 = vld [vmem:[%s1 + $0x1c8] sm:$0xff]
    %v81 = vld [vmem:[%s1 + $0x1d0] sm:$0xff]
    %v82 = vld [vmem:[%s1 + $0x1d8] sm:$0xff]
    %v83 = vld [vmem:[%s1 + $0x1e0] sm:$0xff]
    %v84 = vld [vmem:[%s1 + $0x1e8] sm:$0xff]
    %v85 = vld [vmem:[%s1 + $0x1f0] sm:$0xff]
    %v86 = vld [vmem:[%s1 + $0x1f8] sm:$0xff]
    %v87 = vld [vmem:[%s1 + $0x200] sm:$0xff]
    %v88 = vld [vmem:[%s1 + $0x208] sm:$0xff]
    %v89 = vld [vmem:[%s1 + $0x210] sm:$0xff]
    %v90 = vld [vmem:[%s1 + $0x218] sm:$0xff]
    %v91 = vld [vmem:[%s1 + $0x220] sm:$0xff]
    %v92 = vld [vmem:[%s1 + $0x228] sm:$0xff]
    %v93 = vld [vmem:[%s1 + $0x230] sm:$0xff]
    %v94 = vld [vmem:[%s1 + $0x238] sm:$0xff]
    %v95 = vld [vmem:[%s1 + $0x240] sm:$0xff]
    %v96 = vld [vmem:[%s1 + $0x248] sm:$0xff]
    %v97 = vld [vmem:[%s1 + $0x250] sm:$0xff]
    %v98 = vld [vmem:[%s1 + $0x258] sm:$0xff]
    %v99 = vld [vmem:[%s1 + $0x260] sm:$0xff]
    %v100 = vld [vmem:[%s1 + $0x268] sm:$0xff]
    %v101 = vld [vmem:[%s1 + $0x270] sm:$0xff]
    %v102 = vld [vmem:[%s1 + $0x278] sm:$0xff]
    %v103 = vld [vmem:[%s1 + $0x280] sm:$0xff]
    %v104 = vld [vmem:[%s1 + $0x288] sm:$0xff]
    %v105 = vld [vmem:[%s1 + $0x290] sm:$0xff]
    %v106 = vld [vmem:[%s1 + $0x298] sm:$0xff]
    %v107 = vld [vmem:[%s1 + $0x2a0] sm:$0xff]
    %v108 = vld [vmem:[%s1 + $0x2a8] sm:$0xff]
    %v109 = vld [vmem:[%s1 + $0x2b0] sm:$0xff]
    %v110 = vld [vmem:[%s1 + $0x2b8] sm:$0xff]
    %v111 = vld [vmem:[%s1 + $0x2c0] sm:$0xff]
    %v112 = vld [vmem:[%s1 + $0x2c8] sm:$0xff]
    %v113 = vld [vmem:[%s1 + $0x2d0] sm:$0xff]
    %v114 = vld [vmem:[%s1 + $0x2d8] sm:$0xff]
    %v115 = vld [vmem:[%s1 + $0x2e0] sm:$0xff]
    %v116 = vld [vmem:[%s1 + $0x2e8] sm:$0xff]
    %v117 = vld [vmem:[%s1 + $0x2f0] sm:$0xff]
    %v118 = vld [vmem:[%s1 + $0x2f8] sm:$0xff]
    %v119 = vld [vmem:[%s1 + $0x300] sm:$0xff]
    %v120 = vld [vmem:[%s1 + $0x308] sm:$0xff]
    %v121 = vld [vmem:[%s1 + $0x310] sm:$0xff]
    %v122 = vld [vmem:[%s1 + $0x318] sm:$0xff]
    %v123 = vld [vmem:[%s1 + $0x320] sm:$0xff]
    %v124 = vld [vmem:[%s1 + $0x328] sm:$0xff]
    %v125 = vld [vmem:[%s1 + $0x330] sm:$0xff]
    %v126 = vld [vmem:[%s1 + $0x338] sm:$0xff]
    %v127 = vld [vmem:[%s1 + $0x340] sm:$0xff]
    %v128 = vld [vmem:[%s1 + $0x348] sm:$0xff]
    %v129 = vld [vmem:[%s1 + $0x350] sm:$0xff]
    %v130 = vld [vmem:[%s1 + $0x358] sm:$0xff]
    %v131 = vld [vmem:[%s1 + $0x360] sm:$0xff]
    %v132 = vld [vmem:[%s1 + $0x368] sm:$0xff]
    %v133 = vld [vmem:[%s1 + $0x370] sm:$0xff]
    %v134 = vld [vmem:[%s1 + $0x378] sm:$0xff]
    %v135 = vld [vmem:[%s1 + $0x380] sm:$0xff]
    %v136 = vld [vmem:[%s1 + $0x388] sm:$0xff]
    %v137 = vld [vmem:[%s1 + $0x390] sm:$0xff]
    %v138 = vld [vmem:[%s1 + $0x398] sm:$0xff]
    %v139 = vld [vmem:[%s1 + $0x3a0] sm:$0xff]
    %v140 = vld [vmem:[%s1 + $0x3a8] sm:$0xff]
    %v141 = vld [vmem:[%s1 + $0x3b0] sm:$0xff]
    %v142 = vld [vmem:[%s1 + $0x3b8] sm:$0xff]
    %v143 = vld [vmem:[%s1 + $0x3c0] sm:$0xff]
    %v144 = vld [vmem:[%s1 + $0x3c8] sm:$0xff]
    %v145 = vld [vmem:[%s1 + $0x3d0] sm:$0xff]
    %v146 = vld [vmem:[%s1 + $0x3d8] sm:$0xff]
    %v147 = vld [vmem:[%s1 + $0x3e0] sm:$0xff]
    %v148 = vld [vmem:[%s1 + $0x3e8] sm:$0xff]
    %v149 = vld [vmem:[%s1 + $0x3f0] sm:$0xff]
    %v150 = vld [vmem:[%s1 + $0x3f8] sm:$0xff]
    %v151 = vld [vmem:[%s2] sm:$0x1]
    %v153 = vlaneseq
    %v154 = vshrl.u32 %v153, 7
    %v155 = vsub.s32 0, %v154
    %v156 = vrot.slane %v151, %v155
    %v160 = vcombine.high %v21, %v21
    %v162 = vunpack.c.l.s4 1983009808
    %v163 = vunpack.c.0.s8 %v162
    %v164 = vlaneseq
    %v165 = vshrl.u32 %v164, 7
    %v166 = vsub.s32 %v163, %v165
    %v167 = vrot.slane %v21, %v166
    %v169 = vunpack.c.l.s4 1983009808
    %v170 = vunpack.c.0.s8 %v169
    %v171 = vlaneseq
    %v172 = vshrl.u32 %v171, 7
    %v173 = vsub.s32 %v170, %v172
    %v174 = vrot.slane %v160, %v173
    %v175 = vcombine.high %v167, %v167
    %v176 = vcombine.high %v174, %v174
    %v177 = vcombine.high %v22, %v22
    %v179 = vunpack.c.l.s4 1983009808
    %v180 = vunpack.c.0.s8 %v179
    %v181 = vlaneseq
    %v182 = vshrl.u32 %v181, 7
    %v183 = vsub.s32 %v180, %v182
    %v184 = vrot.slane %v22, %v183
    %v186 = vunpack.c.l.s4 1983009808
    %v187 = vunpack.c.0.s8 %v186
    %v188 = vlaneseq
    %v189 = vshrl.u32 %v188, 7
    %v190 = vsub.s32 %v187, %v189
    %v191 = vrot.slane %v177, %v190
    %v192 = vcombine.high %v184, %v184
    %v193 = vcombine.high %v191, %v191
    %202 = vmatprep.subr.mxu0 0.0
    %203 = vmatpush1.msra.mxu0 %v23
    %204 = vmatprep.subr.mxu0 0.0
    %205 = vmatpush1.msra.mxu0 %v24
    %206 = vmatprep.subr.mxu0 0.0
    %207 = vmatpush1.msra.mxu0 %v25
    %208 = vmatprep.subr.mxu0 0.0
    %209 = vmatpush1.msra.mxu0 %v26
    %210 = vmatprep.subr.mxu0 0.0
    %211 = vmatpush1.msra.mxu0 %v27
    %212 = vmatprep.subr.mxu0 0.0
    %213 = vmatpush1.msra.mxu0 %v28
    %214 = vmatprep.subr.mxu0 0.0
    %215 = vmatpush1.msra.mxu0 %v29
    %216 = vmatprep.subr.mxu0 0.0
    %217 = vmatpush1.msra.mxu0 %v30
    %218 = vmatprep.subr.mxu0 0.0
    %219 = vmatpush1.msra.mxu0 %v31
    %220 = vmatprep.subr.mxu0 0.0
    %221 = vmatpush1.msra.mxu0 %v32
    %222 = vmatprep.subr.mxu0 0.0
    %223 = vmatpush1.msra.mxu0 %v33
    %224 = vmatprep.subr.mxu0 0.0
    %225 = vmatpush1.msra.mxu0 %v34
    %226 = vmatprep.subr.mxu0 0.0
    %227 = vmatpush1.msra.mxu0 %v35
    %228 = vmatprep.subr.mxu0 0.0
    %229 = vmatpush1.msra.mxu0 %v36
    %230 = vmatprep.subr.mxu0 0.0
    %231 = vmatpush1.msra.mxu0 %v37
    %232 = vmatprep.subr.mxu0 0.0
    %233 = vmatpush1.msra.mxu0 %v38
    %234 = vmatprep.subr.mxu0 0.0
    %235 = vmatpush1.msra.mxu0 %v39
    %236 = vmatprep.subr.mxu0 0.0
    %237 = vmatpush1.msra.mxu0 %v40
    %238 = vmatprep.subr.mxu0 0.0
    %239 = vmatpush1.msra.mxu0 %v41
    %240 = vmatprep.subr.mxu0 0.0
    %241 = vmatpush1.msra.mxu0 %v42
    %242 = vmatprep.subr.mxu0 0.0
    %243 = vmatpush1.msra.mxu0 %v43
    %244 = vmatprep.subr.mxu0 0.0
    %245 = vmatpush1.msra.mxu0 %v44
    %246 = vmatprep.subr.mxu0 0.0
    %247 = vmatpush1.msra.mxu0 %v45
    %248 = vmatprep.subr.mxu0 0.0
    %249 = vmatpush1.msra.mxu0 %v46
    %250 = vmatprep.subr.mxu0 0.0
    %251 = vmatpush1.msra.mxu0 %v47
    %252 = vmatprep.subr.mxu0 0.0
    %253 = vmatpush1.msra.mxu0 %v48
    %254 = vmatprep.subr.mxu0 0.0
    %255 = vmatpush1.msra.mxu0 %v49
    %256 = vmatprep.subr.mxu0 0.0
    %257 = vmatpush1.msra.mxu0 %v50
    %258 = vmatprep.subr.mxu0 0.0
    %259 = vmatpush1.msra.mxu0 %v51
    %260 = vmatprep.subr.mxu0 0.0
    %261 = vmatpush1.msra.mxu0 %v52
    %262 = vmatprep.subr.mxu0 0.0
    %263 = vmatpush1.msra.mxu0 %v53
    %264 = vmatprep.subr.mxu0 0.0
    %265 = vmatpush1.msra.mxu0 %v54
    %266 = vmatprep.mubr.f32.mxu0 %v175
    %267 = vmatmul.mubr.f32.gmra.mrb[0].mxu0 %v167
    %v268 = vpop.f32.mrb[0].mxu0
    %v269 = vadd.f32 %v156, %v268
    %v270 = vpop.f32.mrb[0].mxu0
    %271 = vdwg.mxu0
    %272 = vmatprep.subr.mxu0 0.0
    %273 = vmatpush1.msra.mxu0 %v55
    %274 = vmatprep.subr.mxu0 0.0
    %275 = vmatpush1.msra.mxu0 %v56
    %276 = vmatprep.subr.mxu0 0.0
    %277 = vmatpush1.msra.mxu0 %v57
    %278 = vmatprep.subr.mxu0 0.0
    %279 = vmatpush1.msra.mxu0 %v58
    %280 = vmatprep.subr.mxu0 0.0
    %281 = vmatpush1.msra.mxu0 %v59
    %282 = vmatprep.subr.mxu0 0.0
    %283 = vmatpush1.msra.mxu0 %v60
    %284 = vmatprep.subr.mxu0 0.0
    %285 = vmatpush1.msra.mxu0 %v61
    %286 = vmatprep.subr.mxu0 0.0
    %287 = vmatpush1.msra.mxu0 %v62
    %288 = vmatprep.subr.mxu0 0.0
    %289 = vmatpush1.msra.mxu0 %v63
    %290 = vmatprep.subr.mxu0 0.0
    %291 = vmatpush1.msra.mxu0 %v64
    %292 = vmatprep.subr.mxu0 0.0
    %293 = vmatpush1.msra.mxu0 %v65
    %294 = vmatprep.subr.mxu0 0.0
    %295 = vmatpush1.msra.mxu0 %v66
    %296 = vmatprep.subr.mxu0 0.0
    %297 = vmatpush1.msra.mxu0 %v67
    %298 = vmatprep.subr.mxu0 0.0
    %299 = vmatpush1.msra.mxu0 %v68
    %300 = vmatprep.subr.mxu0 0.0
    %301 = vmatpush1.msra.mxu0 %v69
    %302 = vmatprep.subr.mxu0 0.0
    %303 = vmatpush1.msra.mxu0 %v70
    %304 = vmatprep.subr.mxu0 0.0
    %305 = vmatpush1.msra.mxu0 %v71
    %306 = vmatprep.subr.mxu0 0.0
    %307 = vmatpush1.msra.mxu0 %v72
    %308 = vmatprep.subr.mxu0 0.0
    %309 = vmatpush1.msra.mxu0 %v73
    %310 = vmatprep.subr.mxu0 0.0
    %311 = vmatpush1.msra.mxu0 %v74
    %312 = vmatprep.subr.mxu0 0.0
    %313 = vmatpush1.msra.mxu0 %v75
    %314 = vmatprep.subr.mxu0 0.0
    %315 = vmatpush1.msra.mxu0 %v76
    %316 = vmatprep.subr.mxu0 0.0
    %317 = vmatpush1.msra.mxu0 %v77
    %318 = vmatprep.subr.mxu0 0.0
    %319 = vmatpush1.msra.mxu0 %v78
    %320 = vmatprep.subr.mxu0 0.0
    %321 = vmatpush1.msra.mxu0 %v79
    %322 = vmatprep.subr.mxu0 0.0
    %323 = vmatpush1.msra.mxu0 %v80
    %324 = vmatprep.subr.mxu0 0.0
    %325 = vmatpush1.msra.mxu0 %v81
    %326 = vmatprep.subr.mxu0 0.0
    %327 = vmatpush1.msra.mxu0 %v82
    %328 = vmatprep.subr.mxu0 0.0
    %329 = vmatpush1.msra.mxu0 %v83
    %330 = vmatprep.subr.mxu0 0.0
    %331 = vmatpush1.msra.mxu0 %v84
    %332 = vmatprep.subr.mxu0 0.0
    %333 = vmatpush1.msra.mxu0 %v85
    %334 = vmatprep.subr.mxu0 0.0
    %335 = vmatpush1.msra.mxu0 %v86
    %336 = vmatprep.mubr.f32.mxu0 %v176
    %337 = vmatmul.mubr.f32.gmra.mrb[0].mxu0 %v174
    %v338 = vpop.f32.mrb[0].mxu0
    %v339 = vadd.f32 %v269, %v338
    %v340 = vpop.f32.mrb[0].mxu0
    %341 = vdwg.mxu0
    %342 = vmatprep.subr.mxu0 0.0
    %343 = vmatpush1.msra.mxu0 %v87
    %344 = vmatprep.subr.mxu0 0.0
    %345 = vmatpush1.msra.mxu0 %v88
    %346 = vmatprep.subr.mxu0 0.0
    %347 = vmatpush1.msra.mxu0 %v89
    %348 = vmatprep.subr.mxu0 0.0
    %349 = vmatpush1.msra.mxu0 %v90
    %350 = vmatprep.subr.mxu0 0.0
    %351 = vmatpush1.msra.mxu0 %v91
    %352 = vmatprep.subr.mxu0 0.0
    %353 = vmatpush1.msra.mxu0 %v92
    %354 = vmatprep.subr.mxu0 0.0
    %355 = vmatpush1.msra.mxu0 %v93
    %356 = vmatprep.subr.mxu0 0.0
    %357 = vmatpush1.msra.mxu0 %v94
    %358 = vmatprep.subr.mxu0 0.0
    %359 = vmatpush1.msra.mxu0 %v95
    %360 = vmatprep.subr.mxu0 0.0
    %361 = vmatpush1.msra.mxu0 %v96
    %362 = vmatprep.subr.mxu0 0.0
    %363 = vmatpush1.msra.mxu0 %v97
    %364 = vmatprep.subr.mxu0 0.0
    %365 = vmatpush1.msra.mxu0 %v98
    %366 = vmatprep.subr.mxu0 0.0
    %367 = vmatpush1.msra.mxu0 %v99
    %368 = vmatprep.subr.mxu0 0.0
    %369 = vmatpush1.msra.mxu0 %v100
    %370 = vmatprep.subr.mxu0 0.0
    %371 = vmatpush1.msra.mxu0 %v101
    %372 = vmatprep.subr.mxu0 0.0
    %373 = vmatpush1.msra.mxu0 %v102
    %374 = vmatprep.subr.mxu0 0.0
    %375 = vmatpush1.msra.mxu0 %v103
    %376 = vmatprep.subr.mxu0 0.0
    %377 = vmatpush1.msra.mxu0 %v104
    %378 = vmatprep.subr.mxu0 0.0
    %379 = vmatpush1.msra.mxu0 %v105
    %380 = vmatprep.subr.mxu0 0.0
    %381 = vmatpush1.msra.mxu0 %v106
    %382 = vmatprep.subr.mxu0 0.0
    %383 = vmatpush1.msra.mxu0 %v107
    %384 = vmatprep.subr.mxu0 0.0
    %385 = vmatpush1.msra.mxu0 %v108
    %386 = vmatprep.subr.mxu0 0.0
    %387 = vmatpush1.msra.mxu0 %v109
    %388 = vmatprep.subr.mxu0 0.0
    %389 = vmatpush1.msra.mxu0 %v110
    %390 = vmatprep.subr.mxu0 0.0
    %391 = vmatpush1.msra.mxu0 %v111
    %392 = vmatprep.subr.mxu0 0.0
    %393 = vmatpush1.msra.mxu0 %v112
    %394 = vmatprep.subr.mxu0 0.0
    %395 = vmatpush1.msra.mxu0 %v113
    %396 = vmatprep.subr.mxu0 0.0
    %397 = vmatpush1.msra.mxu0 %v114
    %398 = vmatprep.subr.mxu0 0.0
    %399 = vmatpush1.msra.mxu0 %v115
    %400 = vmatprep.subr.mxu0 0.0
    %401 = vmatpush1.msra.mxu0 %v116
    %402 = vmatprep.subr.mxu0 0.0
    %403 = vmatpush1.msra.mxu0 %v117
    %404 = vmatprep.subr.mxu0 0.0
    %405 = vmatpush1.msra.mxu0 %v118
    %406 = vmatprep.mubr.f32.mxu0 %v192
    %407 = vmatmul.mubr.f32.gmra.mrb[0].mxu0 %v184
    %v408 = vpop.f32.mrb[0].mxu0
    %v409 = vadd.f32 %v339, %v408
    %v410 = vpop.f32.mrb[0].mxu0
    %411 = vdwg.mxu0
    %412 = vmatprep.subr.mxu0 0.0
    %413 = vmatpush1.msra.mxu0 %v119
    %414 = vmatprep.subr.mxu0 0.0
    %415 = vmatpush1.msra.mxu0 %v120
    %416 = vmatprep.subr.mxu0 0.0
    %417 = vmatpush1.msra.mxu0 %v121
    %418 = vmatprep.subr.mxu0 0.0
    %419 = vmatpush1.msra.mxu0 %v122
    %420 = vmatprep.subr.mxu0 0.0
    %421 = vmatpush1.msra.mxu0 %v123
    %422 = vmatprep.subr.mxu0 0.0
    %423 = vmatpush1.msra.mxu0 %v124
    %424 = vmatprep.subr.mxu0 0.0
    %425 = vmatpush1.msra.mxu0 %v125
    %426 = vmatprep.subr.mxu0 0.0
    %427 = vmatpush1.msra.mxu0 %v126
    %428 = vmatprep.subr.mxu0 0.0
    %429 = vmatpush1.msra.mxu0 %v127
    %430 = vmatprep.subr.mxu0 0.0
    %431 = vmatpush1.msra.mxu0 %v128
    %432 = vmatprep.subr.mxu0 0.0
    %433 = vmatpush1.msra.mxu0 %v129
    %434 = vmatprep.subr.mxu0 0.0
    %435 = vmatpush1.msra.mxu0 %v130
    %436 = vmatprep.subr.mxu0 0.0
    %437 = vmatpush1.msra.mxu0 %v131
    %438 = vmatprep.subr.mxu0 0.0
    %439 = vmatpush1.msra.mxu0 %v132
    %440 = vmatprep.subr.mxu0 0.0
    %441 = vmatpush1.msra.mxu0 %v133
    %442 = vmatprep.subr.mxu0 0.0
    %443 = vmatpush1.msra.mxu0 %v134
    %444 = vmatprep.subr.mxu0 0.0
    %445 = vmatpush1.msra.mxu0 %v135
    %446 = vmatprep.subr.mxu0 0.0
    %447 = vmatpush1.msra.mxu0 %v136
    %448 = vmatprep.subr.mxu0 0.0
    %449 = vmatpush1.msra.mxu0 %v137
    %450 = vmatprep.subr.mxu0 0.0
    %451 = vmatpush1.msra.mxu0 %v138
    %452 = vmatprep.subr.mxu0 0.0
    %453 = vmatpush1.msra.mxu0 %v139
    %454 = vmatprep.subr.mxu0 0.0
    %455 = vmatpush1.msra.mxu0 %v140
    %456 = vmatprep.subr.mxu0 0.0
    %457 = vmatpush1.msra.mxu0 %v141
    %458 = vmatprep.subr.mxu0 0.0
    %459 = vmatpush1.msra.mxu0 %v142
    %460 = vmatprep.subr.mxu0 0.0
    %461 = vmatpush1.msra.mxu0 %v143
    %462 = vmatprep.subr.mxu0 0.0
    %463 = vmatpush1.msra.mxu0 %v144
    %464 = vmatprep.subr.mxu0 0.0
    %465 = vmatpush1.msra.mxu0 %v145
    %466 = vmatprep.subr.mxu0 0.0
    %467 = vmatpush1.msra.mxu0 %v146
    %468 = vmatprep.subr.mxu0 0.0
    %469 = vmatpush1.msra.mxu0 %v147
    %470 = vmatprep.subr.mxu0 0.0
    %471 = vmatpush1.msra.mxu0 %v148
    %472 = vmatprep.subr.mxu0 0.0
    %473 = vmatpush1.msra.mxu0 %v149
    %474 = vmatprep.subr.mxu0 0.0
    %475 = vmatpush1.msra.mxu0 %v150
    %476 = vmatprep.mubr.f32.mxu0 %v193
    %477 = vmatmul.mubr.f32.gmra.mrb[0].mxu0 %v191
    %v478 = vpop.f32.mrb[0].mxu0
    %v479 = vadd.f32 %v409, %v478
    %v480 = vpop.f32.mrb[0].mxu0
    %481 = vdwg.mxu0
    %v482 = vld [vmem:[%s3] sm:$0xff]
    %v483 = vld [vmem:[%s3 + $0x8] sm:$0xff]
    %v484 = vld [vmem:[%s3 + $0x10] sm:$0xff]
    %v485 = vld [vmem:[%s3 + $0x18] sm:$0xff]
    %v486 = vld [vmem:[%s3 + $0x20] sm:$0xff]
    %v487 = vld [vmem:[%s3 + $0x28] sm:$0xff]
    %v488 = vld [vmem:[%s3 + $0x30] sm:$0xff]
    %v489 = vld [vmem:[%s3 + $0x38] sm:$0xff]
    %v490 = vld [vmem:[%s4] sm:$0x1]
    %v492 = vlaneseq
    %v493 = vshrl.u32 %v492, 7
    %v494 = vsub.s32 0, %v493
    %v495 = vrot.slane %v490, %v494
    %vm497 = vcmask 523264
    %v499 = vsel %vm497, %v479, 0
    %501 = vmatprep.subr.mxu0 0.0
    %502 = vmatpush1.msra.mxu0 %v482
    %503 = vmatprep.subr.mxu0 0.0
    %504 = vmatpush1.msra.mxu0 %v483
    %505 = vmatprep.subr.mxu0 0.0
    %506 = vmatpush1.msra.mxu0 %v484
    %507 = vmatprep.subr.mxu0 0.0
    %508 = vmatpush1.msra.mxu0 %v485
    %509 = vmatprep.subr.mxu0 0.0
    %510 = vmatpush1.msra.mxu0 %v486
    %511 = vmatprep.subr.mxu0 0.0
    %512 = vmatpush1.msra.mxu0 %v487
    %513 = vmatprep.subr.mxu0 0.0
    %514 = vmatpush1.msra.mxu0 %v488
    %515 = vmatprep.subr.mxu0 0.0
    %516 = vmatpush1.msra.mxu0 %v489
    %517 = vmatprep.subr.mxu0 0.0
    %518 = vmatpush1.msra.mxu0 0.0
    %519 = vmatprep.subr.mxu0 0.0
    %520 = vmatpush1.msra.mxu0 0.0
    %521 = vmatprep.subr.mxu0 0.0
    %522 = vmatpush1.msra.mxu0 0.0
    %523 = vmatprep.subr.mxu0 0.0
    %524 = vmatpush1.msra.mxu0 0.0
    %525 = vmatprep.subr.mxu0 0.0
    %526 = vmatpush1.msra.mxu0 0.0
    %527 = vmatprep.subr.mxu0 0.0
    %528 = vmatpush1.msra.mxu0 0.0
    %529 = vmatprep.subr.mxu0 0.0
    %530 = vmatpush1.msra.mxu0 0.0
    %531 = vmatprep.subr.mxu0 0.0
    %532 = vmatpush1.msra.mxu0 0.0
    %533 = vmatprep.subr.mxu0 0.0
    %534 = vmatpush1.msra.mxu0 0.0
    %535 = vmatprep.subr.mxu0 0.0
    %536 = vmatpush1.msra.mxu0 0.0
    %537 = vmatprep.subr.mxu0 0.0
    %538 = vmatpush1.msra.mxu0 0.0
    %539 = vmatprep.subr.mxu0 0.0
    %540 = vmatpush1.msra.mxu0 0.0
    %541 = vmatprep.subr.mxu0 0.0
    %542 = vmatpush1.msra.mxu0 0.0
    %543 = vmatprep.subr.mxu0 0.0
    %544 = vmatpush1.msra.mxu0 0.0
    %545 = vmatprep.subr.mxu0 0.0
    %546 = vmatpush1.msra.mxu0 0.0
    %547 = vmatprep.subr.mxu0 0.0
    %548 = vmatpush1.msra.mxu0 0.0
    %549 = vmatprep.subr.mxu0 0.0
    %550 = vmatpush1.msra.mxu0 0.0
    %551 = vmatprep.subr.mxu0 0.0
    %552 = vmatpush1.msra.mxu0 0.0
    %553 = vmatprep.subr.mxu0 0.0
    %554 = vmatpush1.msra.mxu0 0.0
    %555 = vmatprep.subr.mxu0 0.0
    %556 = vmatpush1.msra.mxu0 0.0
    %557 = vmatprep.subr.mxu0 0.0
    %558 = vmatpush1.msra.mxu0 0.0
    %559 = vmatprep.subr.mxu0 0.0
    %560 = vmatpush1.msra.mxu0 0.0
    %561 = vmatprep.subr.mxu0 0.0
    %562 = vmatpush1.msra.mxu0 0.0
    %563 = vmatprep.subr.mxu0 0.0
    %564 = vmatpush1.msra.mxu0 0.0
    %565 = vmatprep.mubr.f32.mxu0 0.0
    %566 = vmatmul.mubr.f32.gmra.mrb[0].mxu0 %v499
    %v567 = vpop.f32.mrb[0].mxu0
    %v568 = vadd.f32 %v495, %v567
    %v569 = vpop.f32.mrb[0].mxu0
    %570 = vdwg.mxu0
    %vm571 = vcmask 74752
    %572 = vst.msk [vmem:[#allocation2] sm:$0x3] %vm571, %v568
    // Predicated region
    $region22: #{forward.7} parent=1 // pred_check
      _
    $region23: #{forward.7} parent=1 // pred_check_branch
      %574 = sbr.rel (0) target = $region25
    $region24: #{forward.7} parent=1 // pred_region
      %s576 = ssub.s32 32, 32
      %577 = vsyncadd [#allocation3], %s576
      %s579 = sshll.u32 [#allocation2], 4
      %s580 = int_to_ptr.vmem [resolvable:$true] %s579
      %582 = dma.vmem_to_hbm [thread:$0]  %s580, 32, %s5, [#allocation3]
    $region25: #{forward.7} parent=1 // pred_fallthru
      _
    // Predicated region
    $region26: #{forward.7} parent=1 // pred_check
      _
    $region27: #{forward.7} parent=1 // pred_check_branch
      %584 = sbr.rel (0) target = $region29
    $region28: #{forward.7} parent=1 // pred_region
      %585 = dma.done [#allocation3], 32
    $region29: #{forward.7} parent=1 // pred_fallthru
      _
    %586 = vsyncpa [#allocation3], 1

</llo_original>
